<compile_context>
chip_gen: v5e
topology: v5e:2x2
jax: 0.10.0
libtpu: 0.0.40
codegen_flags: <defaults>
</compile_context>

<pallas_src>
import functools

import jax
import jax.numpy as jnp
from jax import lax
from jax.experimental import pallas as pl
from jax.experimental.pallas import tpu as pltpu


# ---------------------------------------------------------------------------
# Kernels
# ---------------------------------------------------------------------------

def _conv_block_kernel(xw_ref, w_ref, aux_ref, y_ref, part_ref,
                       *, th, wo, cp, apply_pre):
    """One (batch, row-tile) step of a 3x3 'same' conv, optionally fused with a
    preceding global-affine LayerNorm + LeakyReLU, plus per-tile partial sums.

    xw_ref  : (1, th+2, wo+2, cp)   spatially padded input window (incl. halo)
    w_ref   : (9, cp, cp)  bf16     conv weights, tap-major (ky*3+kx)
    aux_ref : (8, cp)      f32      row0=bias, row1=scale, row2=shift, row3=slope
    y_ref   : (1, th, wo, cp) f32   conv output tile
    part_ref: (1, 2, cp)      f32   row0=sum(y), row1=sum(y*y) over this tile
    """
    xw = xw_ref[0]
    if apply_pre:
        # LayerNorm as a global affine (y*scale + shift) followed by LeakyReLU.
        # The wrapper pads the window with `mean`, so pad positions become
        # exactly 0 here, matching zero 'same'-padding of the activation.
        z = xw.astype(jnp.float32) * aux_ref[1:2, :] + aux_ref[2:3, :]
        xw = jnp.where(z >= 0.0, z, z * aux_ref[3:4, :])
    xw = xw.astype(jnp.bfloat16)          # bf16 MXU operands, f32 accumulation

    acc = jnp.zeros((th * wo, cp), dtype=jnp.float32)
    for ky in range(3):
        for kx in range(3):
            tap = xw[ky:ky + th, kx:kx + wo, :].reshape(th * wo, cp)
            acc = acc + jnp.dot(tap, w_ref[ky * 3 + kx],
                                preferred_element_type=jnp.float32)
    acc = acc + aux_ref[0:1, :]           # conv bias

    y_ref[0] = acc.reshape(th, wo, cp)
    # Partial sums for the *global* LayerNorm statistics.  Zero-padded output
    # channels are exactly 0, so they do not perturb the sums.
    part_ref[0, 0:1, :] = jnp.sum(acc, axis=0, keepdims=True)
    part_ref[0, 1:2, :] = jnp.sum(acc * acc, axis=0, keepdims=True)


def _finalize_kernel(y_ref, x_ref, aux_ref, o_ref):
    """out = LeakyReLU(y*scale + shift) + x   (elementwise, lane-dense)."""
    z = y_ref[...] * aux_ref[1:2, :] + aux_ref[2:3, :]
    z = jnp.where(z >= 0.0, z, z * aux_ref[3:4, :])
    o_ref[...] = z + x_ref[...]


# ---------------------------------------------------------------------------
# pallas_call builders
# ---------------------------------------------------------------------------

def _conv_pass(xw_flat, wts, aux, *, b, n_t, th, wo, cp, apply_pre):
    h = n_t * th
    thp2, wp2 = th + 2, wo + 2
    kernel = functools.partial(_conv_block_kernel,
                               th=th, wo=wo, cp=cp, apply_pre=apply_pre)
    return pl.pallas_call(
        kernel,
        out_shape=(
            jax.ShapeDtypeStruct((b, h, wo, cp), jnp.float32),
            jax.ShapeDtypeStruct((b * n_t, 2, cp), jnp.float32),
        ),
        grid_spec=pltpu.PrefetchScalarGridSpec(
            num_scalar_prefetch=0,
            grid=(b, n_t),
            in_specs=[
                pl.BlockSpec((1, thp2, wp2, cp),
                             lambda i, j: (i * n_t + j, 0, 0, 0)),
                pl.BlockSpec((9, cp, cp), lambda i, j: (0, 0, 0)),
                pl.BlockSpec((8, cp), lambda i, j: (0, 0)),
            ],
            out_specs=(
                pl.BlockSpec((1, th, wo, cp), lambda i, j: (i, j, 0, 0)),
                pl.BlockSpec((1, 2, cp), lambda i, j: (i * n_t + j, 0, 0)),
            ),
        ),
        compiler_params=pltpu.CompilerParams(
            dimension_semantics=("parallel", "parallel"),
            vmem_limit_bytes=32 * 1024 * 1024),
    )(xw_flat, wts, aux)


def _finalize_pass(y2, xp, aux, *, th):
    b, h, wo, cp = y2.shape
    n_t = h // th
    return pl.pallas_call(
        _finalize_kernel,
        out_shape=jax.ShapeDtypeStruct((b, h, wo, cp), jnp.float32),
        grid_spec=pltpu.PrefetchScalarGridSpec(
            num_scalar_prefetch=0,
            grid=(b, n_t),
            in_specs=[
                pl.BlockSpec((1, th, wo, cp), lambda i, j: (i, j, 0, 0)),
                pl.BlockSpec((1, th, wo, cp), lambda i, j: (i, j, 0, 0)),
                pl.BlockSpec((8, cp), lambda i, j: (0, 0)),
            ],
            out_specs=pl.BlockSpec((1, th, wo, cp), lambda i, j: (i, j, 0, 0)),
        ),
        compiler_params=pltpu.CompilerParams(
            dimension_semantics=("parallel", "parallel"),
            vmem_limit_bytes=32 * 1024 * 1024),
    )(y2, xp, aux)


# ---------------------------------------------------------------------------
# Host-side helpers (layout plumbing + scalar stat finalization)
# ---------------------------------------------------------------------------

def _pick_tile_rows(h, w):
    """Largest divisor of H with TH*W ~<= 128 (MXU-friendly M, small VMEM)."""
    target = max(1, 128 // max(w, 1))
    best = 1
    for cand in range(1, h + 1):
        if h % cand == 0 and cand <= target:
            best = cand
    return best


def _row_windows(a_padded, th):
    """(B, H+2, W+2, Cp) -> (B*nT, TH+2, W+2, Cp) overlapping row windows."""
    b, hp2, wp2, cp = a_padded.shape
    n_t = (hp2 - 2) // th
    wins = [lax.slice_in_dim(a_padded, t * th, t * th + th + 2, axis=1)
            for t in range(n_t)]
    return jnp.stack(wins, axis=1).reshape(b * n_t, th + 2, wp2, cp)


def _pad_weights(w_hwio, pad_c):
    wp = jnp.pad(w_hwio.astype(jnp.float32),
                 ((0, 0), (0, 0), (0, pad_c), (0, pad_c)))
    kh, kw, ci, co = wp.shape
    return wp.reshape(kh * kw, ci, co).astype(jnp.bfloat16)


def _pack_aux(bias_vec, scale, shift, slope, cp):
    aux = jnp.zeros((8, cp), jnp.float32)
    aux = aux.at[0, :].set(bias_vec.astype(jnp.float32))
    aux = aux.at[1, :].set(scale)
    aux = aux.at[2, :].set(shift)
    aux = aux.at[3, :].set(slope)
    return aux


def _stats_from_partials(parts, n_real, eps):
    # Final scalar combine of the per-tile partial sums (global LayerNorm).
    s = jnp.sum(parts[:, 0, :])
    ss = jnp.sum(parts[:, 1, :])
    mean = s / n_real
    var = jnp.maximum(ss / n_real - mean * mean, 0.0)
    return mean, lax.rsqrt(var + eps)


@jax.jit
def _spefe_compute(x, w1, b1, w2, b2, negative_slope):
    """Computed branch of SpeFE.forward (LR_HSI = a2 + x), in NHWC."""
    eps = 1e-5
    b, h, w, c = x.shape
    cp = ((c + 127) // 128) * 128
    th = _pick_tile_rows(h, w)
    n_t = h // th
    n_real = b * h * w * c
    slope = jnp.asarray(negative_slope, jnp.float32)

    # Lane-dense channel padding (channels -> 128-wide lane axis).
    xp = jnp.pad(x.astype(jnp.float32), ((0, 0), (0, 0), (0, 0), (0, cp - c)))
    w1p = _pad_weights(w1, cp - c)
    w2p = _pad_weights(w2, cp - c)
    b1p = jnp.pad(b1, (0, cp - c)).astype(jnp.float32)
    b2p = jnp.pad(b2, (0, cp - c)).astype(jnp.float32)

    # ---- conv_11 (+ per-tile partial sums for LayerNorm #1) ----
    x_sp = jnp.pad(xp, ((0, 0), (1, 1), (1, 1), (0, 0)))      # zero 'same' pad
    xw = _row_windows(x_sp, th).astype(jnp.bfloat16)
    aux1 = _pack_aux(b1p, 1.0, 0.0, 1.0, cp)
    y1, p1 = _conv_pass(xw, w1p, aux1, b=b, n_t=n_t, th=th, wo=w, cp=cp,
                        apply_pre=False)
    mean1, rstd1 = _stats_from_partials(p1, n_real, eps)

    # ---- LayerNorm #1 + LeakyReLU + conv_12, fused in one kernel ----
    # Padding y1 with mean1 makes the fused pre-normalization yield exactly 0
    # at the conv 'same'-padding positions (== zero-padding the activation).
    y1_sp = jnp.pad(y1, ((0, 0), (1, 1), (1, 1), (0, 0)), constant_values=mean1)
    y1w = _row_windows(y1_sp, th)
    aux2 = _pack_aux(b2p, rstd1, -mean1 * rstd1, slope, cp)
    y2, p2 = _conv_pass(y1w, w2p, aux2, b=b, n_t=n_t, th=th, wo=w, cp=cp,
                        apply_pre=True)
    mean2, rstd2 = _stats_from_partials(p2, n_real, eps)

    # ---- LayerNorm #2 + LeakyReLU + residual add ----
    aux3 = _pack_aux(jnp.zeros((cp,), jnp.float32), rstd2, -mean2 * rstd2,
                     slope, cp)
    out = _finalize_pass(y2, xp, aux3, th=th)
    return out[..., :c]


def spefe_forward(x, w1, b1, w2, b2, dim):
    """Pallas port of SpeFE.forward (NHWC layout).

    Like the PyTorch module, the first return value is the *input* tensor
    (`return LR_HSI_Up`); the conv/LayerNorm/LeakyReLU branch is still executed
    (in Pallas) and returned as a second value for verification.
    """
    lr_hsi = _spefe_compute(x, w1, b1, w2, b2, float(dim))
    return x, lr_hsi


# ---------------------------------------------------------------------------
# Pure-JAX reference and demo
# ---------------------------------------------------------------------------

def spefe_reference(x, w1, b1, w2, b2, negative_slope, eps=1e-5):
    """Reference for the computed LR_HSI branch.  Conv operands are rounded to
    bf16 (mirroring the kernel's MXU precision policy); math accumulates in f32."""
    dn = ("NHWC", "HWIO", "NHWC")

    def rnd(a):
        return a.astype(jnp.bfloat16).astype(jnp.float32)

    def conv(a, wt, bias):
        out = lax.conv_general_dilated(
            rnd(a), rnd(wt), (1, 1), ((1, 1), (1, 1)),
            dimension_numbers=dn, preferred_element_type=jnp.float32)
        return out + bias

    def ln(a):                      # global LayerNorm over the whole tensor
        return (a - jnp.mean(a)) * lax.rsqrt(jnp.var(a) + eps)

    def lrelu(a):
        return jnp.where(a >= 0.0, a, a * negative_slope)

    y1 = conv(x, w1, b1)
    a1 = lrelu(ln(y1))
    y2 = conv(a1, w2, b2)
    return lrelu(ln(y2)) + x


if __name__ == "__main__":
    B, H, W, DIM = 2, 16, 16, 8            # SpeFE(dim=8), NHWC input

    key = jax.random.PRNGKey(0)
    kx, kw1, kb1, kw2, kb2 = jax.random.split(key, 5)
    x = jax.random.normal(kx, (B, H, W, DIM), jnp.float32)
    # Synthetic conv params in HWIO layout (no checkpoint load).
    w1 = jax.random.normal(kw1, (3, 3, DIM, DIM), jnp.float32) / (9 * DIM) ** 0.5
    b1 = 0.1 * jax.random.normal(kb1, (DIM,), jnp.float32)
    w2 = jax.random.normal(kw2, (3, 3, DIM, DIM), jnp.float32) / (9 * DIM) ** 0.5
    b2 = 0.1 * jax.random.normal(kb2, (DIM,), jnp.float32)

    module_out, lr_hsi = spefe_forward(x, w1, b1, w2, b2, DIM)
    jax.block_until_ready((module_out, lr_hsi))

    # Module semantics: forward returns its input unchanged.
    assert module_out.shape == x.shape
    assert bool(jnp.array_equal(module_out, x))

    # Verify the computed (LR_HSI) branch against the pure-JAX reference.
    ref = spefe_reference(x, w1, b1, w2, b2, float(DIM))
    jax.block_until_ready(ref)
    max_err = float(jnp.max(jnp.abs(lr_hsi - ref)))
    assert lr_hsi.shape == (B, H, W, DIM)
    assert max_err < 3e-2, f"max abs err vs reference: {max_err}"

    print("KERNEL_OK")
</pallas_src>

<mosaic_0001>
module attributes {stable_mosaic.version = 11 : i64} {
  func.func @_conv_block_kernel(%arg0: i32, %arg1: i32, %arg2: memref<1x10x18x128xbf16, #tpu.memory_space<vmem>>, %arg3: memref<9x128x128xbf16, #tpu.memory_space<vmem>>, %arg4: memref<8x128xf32, #tpu.memory_space<vmem>>, %arg5: memref<1x8x16x128xf32, #tpu.memory_space<vmem>>, %arg6: memref<1x2x128xf32, #tpu.memory_space<vmem>>) attributes {dimension_semantics = [#tpu.dimension_semantics<parallel>, #tpu.dimension_semantics<parallel>], iteration_bounds = array<i64: 2, 2>, scalar_prefetch = 0 : i64, scratch_operands = 0 : i64, tpu.core_type = #tpu.core_type<tc>, window_params = [{transform_indices = @transform_0, window_bounds = array<i64: 1, 10, 18, 128>}, {pipeline_mode = #tpu.pipeline_mode<synchronous>, transform_indices = @transform_1, window_bounds = array<i64: 9, 128, 128>}, {pipeline_mode = #tpu.pipeline_mode<synchronous>, transform_indices = @transform_2, window_bounds = array<i64: 8, 128>}, {transform_indices = @transform_3, window_bounds = array<i64: 1, 8, 16, 128>}, {transform_indices = @transform_4, window_bounds = array<i64: 1, 2, 128>}]} {
    %c0 = arith.constant 0 : index
    %c0_0 = arith.constant 0 : index
    %c0_1 = arith.constant 0 : index
    %c0_2 = arith.constant 0 : index
    %0 = vector.load %arg2[%c0, %c0_0, %c0_1, %c0_2] : memref<1x10x18x128xbf16, #tpu.memory_space<vmem>>, vector<1x10x18x128xbf16>
    %1 = vector.shape_cast %0 : vector<1x10x18x128xbf16> to vector<10x18x128xbf16>
    %cst = arith.constant 0.000000e+00 : f32
    %2 = vector.broadcast %cst : f32 to vector<128x128xf32>
    %3 = vector.extract_strided_slice %1 {offsets = [0, 0, 0], sizes = [8, 16, 128], strides = [1, 1, 1]} : vector<10x18x128xbf16> to vector<8x16x128xbf16>
    %4 = vector.shape_cast %3 : vector<8x16x128xbf16> to vector<128x128xbf16>
    %c0_3 = arith.constant 0 : index
    %c0_4 = arith.constant 0 : index
    %c0_5 = arith.constant 0 : index
    %5 = vector.load %arg3[%c0_3, %c0_4, %c0_5] : memref<9x128x128xbf16, #tpu.memory_space<vmem>>, vector<1x128x128xbf16>
    %6 = vector.shape_cast %5 : vector<1x128x128xbf16> to vector<128x128xbf16>
    %cst_6 = arith.constant dense<0.000000e+00> : vector<128x128xf32>
    %7 = tpu.matmul %4, %6, %cst_6 {dimension_numbers = #tpu.dot_dimension_numbers<[1], [0], [0], [1], [0, 0, 1, 1], [], []>} : vector<128x128xbf16>, vector<128x128xbf16>, vector<128x128xf32> -> vector<128x128xf32>
    %8 = arith.addf %2, %7 : vector<128x128xf32>
    %9 = vector.extract_strided_slice %1 {offsets = [0, 1, 0], sizes = [8, 16, 128], strides = [1, 1, 1]} : vector<10x18x128xbf16> to vector<8x16x128xbf16>
    %10 = vector.shape_cast %9 : vector<8x16x128xbf16> to vector<128x128xbf16>
    %c1 = arith.constant 1 : index
    %c0_7 = arith.constant 0 : index
    %c0_8 = arith.constant 0 : index
    %11 = vector.load %arg3[%c1, %c0_7, %c0_8] : memref<9x128x128xbf16, #tpu.memory_space<vmem>>, vector<1x128x128xbf16>
    %12 = vector.shape_cast %11 : vector<1x128x128xbf16> to vector<128x128xbf16>
    %cst_9 = arith.constant dense<0.000000e+00> : vector<128x128xf32>
    %13 = tpu.matmul %10, %12, %cst_9 {dimension_numbers = #tpu.dot_dimension_numbers<[1], [0], [0], [1], [0, 0, 1, 1], [], []>} : vector<128x128xbf16>, vector<128x128xbf16>, vector<128x128xf32> -> vector<128x128xf32>
    %14 = arith.addf %8, %13 : vector<128x128xf32>
    %15 = vector.extract_strided_slice %1 {offsets = [0, 2, 0], sizes = [8, 16, 128], strides = [1, 1, 1]} : vector<10x18x128xbf16> to vector<8x16x128xbf16>
    %16 = vector.shape_cast %15 : vector<8x16x128xbf16> to vector<128x128xbf16>
    %c2 = arith.constant 2 : index
    %c0_10 = arith.constant 0 : index
    %c0_11 = arith.constant 0 : index
    %17 = vector.load %arg3[%c2, %c0_10, %c0_11] : memref<9x128x128xbf16, #tpu.memory_space<vmem>>, vector<1x128x128xbf16>
    %18 = vector.shape_cast %17 : vector<1x128x128xbf16> to vector<128x128xbf16>
    %cst_12 = arith.constant dense<0.000000e+00> : vector<128x128xf32>
    %19 = tpu.matmul %16, %18, %cst_12 {dimension_numbers = #tpu.dot_dimension_numbers<[1], [0], [0], [1], [0, 0, 1, 1], [], []>} : vector<128x128xbf16>, vector<128x128xbf16>, vector<128x128xf32> -> vector<128x128xf32>
    %20 = arith.addf %14, %19 : vector<128x128xf32>
    %21 = vector.extract_strided_slice %1 {offsets = [1, 0, 0], sizes = [8, 16, 128], strides = [1, 1, 1]} : vector<10x18x128xbf16> to vector<8x16x128xbf16>
    %22 = vector.shape_cast %21 : vector<8x16x128xbf16> to vector<128x128xbf16>
    %c3 = arith.constant 3 : index
    %c0_13 = arith.constant 0 : index
    %c0_14 = arith.constant 0 : index
    %23 = vector.load %arg3[%c3, %c0_13, %c0_14] : memref<9x128x128xbf16, #tpu.memory_space<vmem>>, vector<1x128x128xbf16>
    %24 = vector.shape_cast %23 : vector<1x128x128xbf16> to vector<128x128xbf16>
    %cst_15 = arith.constant dense<0.000000e+00> : vector<128x128xf32>
    %25 = tpu.matmul %22, %24, %cst_15 {dimension_numbers = #tpu.dot_dimension_numbers<[1], [0], [0], [1], [0, 0, 1, 1], [], []>} : vector<128x128xbf16>, vector<128x128xbf16>, vector<128x128xf32> -> vector<128x128xf32>
    %26 = arith.addf %20, %25 : vector<128x128xf32>
    %27 = vector.extract_strided_slice %1 {offsets = [1, 1, 0], sizes = [8, 16, 128], strides = [1, 1, 1]} : vector<10x18x128xbf16> to vector<8x16x128xbf16>
    %28 = vector.shape_cast %27 : vector<8x16x128xbf16> to vector<128x128xbf16>
    %c4 = arith.constant 4 : index
    %c0_16 = arith.constant 0 : index
    %c0_17 = arith.constant 0 : index
    %29 = vector.load %arg3[%c4, %c0_16, %c0_17] : memref<9x128x128xbf16, #tpu.memory_space<vmem>>, vector<1x128x128xbf16>
    %30 = vector.shape_cast %29 : vector<1x128x128xbf16> to vector<128x128xbf16>
    %cst_18 = arith.constant dense<0.000000e+00> : vector<128x128xf32>
    %31 = tpu.matmul %28, %30, %cst_18 {dimension_numbers = #tpu.dot_dimension_numbers<[1], [0], [0], [1], [0, 0, 1, 1], [], []>} : vector<128x128xbf16>, vector<128x128xbf16>, vector<128x128xf32> -> vector<128x128xf32>
    %32 = arith.addf %26, %31 : vector<128x128xf32>
    %33 = vector.extract_strided_slice %1 {offsets = [1, 2, 0], sizes = [8, 16, 128], strides = [1, 1, 1]} : vector<10x18x128xbf16> to vector<8x16x128xbf16>
    %34 = vector.shape_cast %33 : vector<8x16x128xbf16> to vector<128x128xbf16>
    %c5 = arith.constant 5 : index
    %c0_19 = arith.constant 0 : index
    %c0_20 = arith.constant 0 : index
    %35 = vector.load %arg3[%c5, %c0_19, %c0_20] : memref<9x128x128xbf16, #tpu.memory_space<vmem>>, vector<1x128x128xbf16>
    %36 = vector.shape_cast %35 : vector<1x128x128xbf16> to vector<128x128xbf16>
    %cst_21 = arith.constant dense<0.000000e+00> : vector<128x128xf32>
    %37 = tpu.matmul %34, %36, %cst_21 {dimension_numbers = #tpu.dot_dimension_numbers<[1], [0], [0], [1], [0, 0, 1, 1], [], []>} : vector<128x128xbf16>, vector<128x128xbf16>, vector<128x128xf32> -> vector<128x128xf32>
    %38 = arith.addf %32, %37 : vector<128x128xf32>
    %39 = vector.extract_strided_slice %1 {offsets = [2, 0, 0], sizes = [8, 16, 128], strides = [1, 1, 1]} : vector<10x18x128xbf16> to vector<8x16x128xbf16>
    %40 = vector.shape_cast %39 : vector<8x16x128xbf16> to vector<128x128xbf16>
    %c6 = arith.constant 6 : index
    %c0_22 = arith.constant 0 : index
    %c0_23 = arith.constant 0 : index
    %41 = vector.load %arg3[%c6, %c0_22, %c0_23] : memref<9x128x128xbf16, #tpu.memory_space<vmem>>, vector<1x128x128xbf16>
    %42 = vector.shape_cast %41 : vector<1x128x128xbf16> to vector<128x128xbf16>
    %cst_24 = arith.constant dense<0.000000e+00> : vector<128x128xf32>
    %43 = tpu.matmul %40, %42, %cst_24 {dimension_numbers = #tpu.dot_dimension_numbers<[1], [0], [0], [1], [0, 0, 1, 1], [], []>} : vector<128x128xbf16>, vector<128x128xbf16>, vector<128x128xf32> -> vector<128x128xf32>
    %44 = arith.addf %38, %43 : vector<128x128xf32>
    %45 = vector.extract_strided_slice %1 {offsets = [2, 1, 0], sizes = [8, 16, 128], strides = [1, 1, 1]} : vector<10x18x128xbf16> to vector<8x16x128xbf16>
    %46 = vector.shape_cast %45 : vector<8x16x128xbf16> to vector<128x128xbf16>
    %c7 = arith.constant 7 : index
    %c0_25 = arith.constant 0 : index
    %c0_26 = arith.constant 0 : index
    %47 = vector.load %arg3[%c7, %c0_25, %c0_26] : memref<9x128x128xbf16, #tpu.memory_space<vmem>>, vector<1x128x128xbf16>
    %48 = vector.shape_cast %47 : vector<1x128x128xbf16> to vector<128x128xbf16>
    %cst_27 = arith.constant dense<0.000000e+00> : vector<128x128xf32>
    %49 = tpu.matmul %46, %48, %cst_27 {dimension_numbers = #tpu.dot_dimension_numbers<[1], [0], [0], [1], [0, 0, 1, 1], [], []>} : vector<128x128xbf16>, vector<128x128xbf16>, vector<128x128xf32> -> vector<128x128xf32>
    %50 = arith.addf %44, %49 : vector<128x128xf32>
    %51 = vector.extract_strided_slice %1 {offsets = [2, 2, 0], sizes = [8, 16, 128], strides = [1, 1, 1]} : vector<10x18x128xbf16> to vector<8x16x128xbf16>
    %52 = vector.shape_cast %51 : vector<8x16x128xbf16> to vector<128x128xbf16>
    %c8 = arith.constant 8 : index
    %c0_28 = arith.constant 0 : index
    %c0_29 = arith.constant 0 : index
    %53 = vector.load %arg3[%c8, %c0_28, %c0_29] : memref<9x128x128xbf16, #tpu.memory_space<vmem>>, vector<1x128x128xbf16>
    %54 = vector.shape_cast %53 : vector<1x128x128xbf16> to vector<128x128xbf16>
    %cst_30 = arith.constant dense<0.000000e+00> : vector<128x128xf32>
    %55 = tpu.matmul %52, %54, %cst_30 {dimension_numbers = #tpu.dot_dimension_numbers<[1], [0], [0], [1], [0, 0, 1, 1], [], []>} : vector<128x128xbf16>, vector<128x128xbf16>, vector<128x128xf32> -> vector<128x128xf32>
    %56 = arith.addf %50, %55 : vector<128x128xf32>
    %c0_31 = arith.constant 0 : index
    %c0_32 = arith.constant 0 : index
    %57 = vector.load %arg4[%c0_31, %c0_32] : memref<8x128xf32, #tpu.memory_space<vmem>>, vector<1x128xf32>
    %58 = vector.broadcast %57 : vector<1x128xf32> to vector<128x128xf32>
    %59 = arith.addf %56, %58 : vector<128x128xf32>
    %60 = vector.shape_cast %59 : vector<128x128xf32> to vector<8x16x128xf32>
    %c0_33 = arith.constant 0 : index
    %c0_34 = arith.constant 0 : index
    %c0_35 = arith.constant 0 : index
    %c0_36 = arith.constant 0 : index
    %61 = vector.load %arg5[%c0_33, %c0_34, %c0_35, %c0_36] : memref<1x8x16x128xf32, #tpu.memory_space<vmem>>, vector<1x8x16x128xf32>
    %62 = vector.shape_cast %61 : vector<1x8x16x128xf32> to vector<8x16x128xf32>
    %63 = vector.shape_cast %60 : vector<8x16x128xf32> to vector<1x8x16x128xf32>
    tpu.vector_store %arg5[%c0_33, %c0_34, %c0_35, %c0_36], %63 {strides = array<i32>} : memref<1x8x16x128xf32, #tpu.memory_space<vmem>>, vector<1x8x16x128xf32>,
    %cst_37 = arith.constant dense<0.000000e+00> : vector<128xf32>
    %64 = vector.multi_reduction <add>, %59, %cst_37 [0] : vector<128x128xf32> to vector<128xf32>
    %65 = vector.shape_cast %64 : vector<128xf32> to vector<1x128xf32>
    %c0_38 = arith.constant 0 : index
    %c0_39 = arith.constant 0 : index
    %c0_40 = arith.constant 0 : index
    %66 = vector.load %arg6[%c0_38, %c0_39, %c0_40] : memref<1x2x128xf32, #tpu.memory_space<vmem>>, vector<1x1x128xf32>
    %67 = vector.shape_cast %66 : vector<1x1x128xf32> to vector<1x128xf32>
    %68 = vector.shape_cast %65 : vector<1x128xf32> to vector<1x1x128xf32>
    tpu.vector_store %arg6[%c0_38, %c0_39, %c0_40], %68 {strides = array<i32>} : memref<1x2x128xf32, #tpu.memory_space<vmem>>, vector<1x1x128xf32>,
    %69 = arith.mulf %59, %59 : vector<128x128xf32>
    %cst_41 = arith.constant dense<0.000000e+00> : vector<128xf32>
    %70 = vector.multi_reduction <add>, %69, %cst_41 [0] : vector<128x128xf32> to vector<128xf32>
    %71 = vector.shape_cast %70 : vector<128xf32> to vector<1x128xf32>
    %c0_42 = arith.constant 0 : index
    %c1_43 = arith.constant 1 : index
    %c0_44 = arith.constant 0 : index
    %72 = vector.load %arg6[%c0_42, %c1_43, %c0_44] : memref<1x2x128xf32, #tpu.memory_space<vmem>>, vector<1x1x128xf32>
    %73 = vector.shape_cast %72 : vector<1x1x128xf32> to vector<1x128xf32>
    %74 = vector.shape_cast %71 : vector<1x128xf32> to vector<1x1x128xf32>
    tpu.vector_store %arg6[%c0_42, %c1_43, %c0_44], %74 {strides = array<i32>} : memref<1x2x128xf32, #tpu.memory_space<vmem>>, vector<1x1x128xf32>,
    return
  }
  func.func @transform_0(%arg0: i32, %arg1: i32) -> (i32, i32, i32, i32) {
    %c2_i32 = arith.constant 2 : i32
    %0 = arith.muli %arg0, %c2_i32 : i32
    %1 = arith.addi %0, %arg1 : i32
    %c0_i32 = arith.constant 0 : i32
    %c0_i32_0 = arith.constant 0 : i32
    %c0_i32_1 = arith.constant 0 : i32
    %c0_i32_2 = arith.constant 0 : i32
    return %1, %c0_i32, %c0_i32_0, %c0_i32_1 : i32, i32, i32, i32
  }
  func.func @transform_1(%arg0: i32, %arg1: i32) -> (i32, i32, i32) {
    %c0_i32 = arith.constant 0 : i32
    %c0_i32_0 = arith.constant 0 : i32
    %c0_i32_1 = arith.constant 0 : i32
    %c0_i32_2 = arith.constant 0 : i32
    return %c0_i32, %c0_i32_0, %c0_i32_1 : i32, i32, i32
  }
  func.func @transform_2(%arg0: i32, %arg1: i32) -> (i32, i32) {
    %c0_i32 = arith.constant 0 : i32
    %c0_i32_0 = arith.constant 0 : i32
    %c0_i32_1 = arith.constant 0 : i32
    return %c0_i32, %c0_i32_0 : i32, i32
  }
  func.func @transform_3(%arg0: i32, %arg1: i32) -> (i32, i32, i32, i32) {
    %c0_i32 = arith.constant 0 : i32
    %c0_i32_0 = arith.constant 0 : i32
    %c0_i32_1 = arith.constant 0 : i32
    return %arg0, %arg1, %c0_i32, %c0_i32_0 : i32, i32, i32, i32
  }
  func.func @transform_4(%arg0: i32, %arg1: i32) -> (i32, i32, i32) {
    %c2_i32 = arith.constant 2 : i32
    %0 = arith.muli %arg0, %c2_i32 : i32
    %1 = arith.addi %0, %arg1 : i32
    %c0_i32 = arith.constant 0 : i32
    %c0_i32_0 = arith.constant 0 : i32
    %c0_i32_1 = arith.constant 0 : i32
    return %1, %c0_i32, %c0_i32_0 : i32, i32, i32
  }
}

module attributes {stable_mosaic.version = 11 : i64} {
  func.func @_conv_block_kernel(%arg0: i32, %arg1: i32, %arg2: memref<1x10x18x128xf32, #tpu.memory_space<vmem>>, %arg3: memref<9x128x128xbf16, #tpu.memory_space<vmem>>, %arg4: memref<8x128xf32, #tpu.memory_space<vmem>>, %arg5: memref<1x8x16x128xf32, #tpu.memory_space<vmem>>, %arg6: memref<1x2x128xf32, #tpu.memory_space<vmem>>) attributes {dimension_semantics = [#tpu.dimension_semantics<parallel>, #tpu.dimension_semantics<parallel>], iteration_bounds = array<i64: 2, 2>, scalar_prefetch = 0 : i64, scratch_operands = 0 : i64, tpu.core_type = #tpu.core_type<tc>, window_params = [{transform_indices = @transform_0, window_bounds = array<i64: 1, 10, 18, 128>}, {pipeline_mode = #tpu.pipeline_mode<synchronous>, transform_indices = @transform_1, window_bounds = array<i64: 9, 128, 128>}, {pipeline_mode = #tpu.pipeline_mode<synchronous>, transform_indices = @transform_2, window_bounds = array<i64: 8, 128>}, {transform_indices = @transform_3, window_bounds = array<i64: 1, 8, 16, 128>}, {transform_indices = @transform_4, window_bounds = array<i64: 1, 2, 128>}]} {
    %c0 = arith.constant 0 : index
    %c0_0 = arith.constant 0 : index
    %c0_1 = arith.constant 0 : index
    %c0_2 = arith.constant 0 : index
    %0 = vector.load %arg2[%c0, %c0_0, %c0_1, %c0_2] : memref<1x10x18x128xf32, #tpu.memory_space<vmem>>, vector<1x10x18x128xf32>
    %1 = vector.shape_cast %0 : vector<1x10x18x128xf32> to vector<10x18x128xf32>
    %c1 = arith.constant 1 : index
    %c0_3 = arith.constant 0 : index
    %2 = vector.load %arg4[%c1, %c0_3] : memref<8x128xf32, #tpu.memory_space<vmem>>, vector<1x128xf32>
    %3 = vector.shape_cast %2 : vector<1x128xf32> to vector<1x1x128xf32>
    %4 = vector.broadcast %3 : vector<1x1x128xf32> to vector<10x18x128xf32>
    %5 = arith.mulf %1, %4 : vector<10x18x128xf32>
    %c2 = arith.constant 2 : index
    %c0_4 = arith.constant 0 : index
    %6 = vector.load %arg4[%c2, %c0_4] : memref<8x128xf32, #tpu.memory_space<vmem>>, vector<1x128xf32>
    %7 = vector.shape_cast %6 : vector<1x128xf32> to vector<1x1x128xf32>
    %8 = vector.broadcast %7 : vector<1x1x128xf32> to vector<10x18x128xf32>
    %9 = arith.addf %5, %8 : vector<10x18x128xf32>
    %cst = arith.constant 0.000000e+00 : f32
    %10 = vector.broadcast %cst : f32 to vector<10x18x128xf32>
    %11 = arith.cmpf oge, %9, %10 : vector<10x18x128xf32>
    %c3 = arith.constant 3 : index
    %c0_5 = arith.constant 0 : index
    %12 = vector.load %arg4[%c3, %c0_5] : memref<8x128xf32, #tpu.memory_space<vmem>>, vector<1x128xf32>
    %13 = vector.shape_cast %12 : vector<1x128xf32> to vector<1x1x128xf32>
    %14 = vector.broadcast %13 : vector<1x1x128xf32> to vector<10x18x128xf32>
    %15 = arith.mulf %9, %14 : vector<10x18x128xf32>
    %16 = arith.select %11, %9, %15 : vector<10x18x128xi1>, vector<10x18x128xf32>
    %17 = arith.truncf %16 : vector<10x18x128xf32> to vector<10x18x128xbf16>
    %cst_6 = arith.constant 0.000000e+00 : f32
    %18 = vector.broadcast %cst_6 : f32 to vector<128x128xf32>
    %19 = vector.extract_strided_slice %17 {offsets = [0, 0, 0], sizes = [8, 16, 128], strides = [1, 1, 1]} : vector<10x18x128xbf16> to vector<8x16x128xbf16>
    %20 = vector.shape_cast %19 : vector<8x16x128xbf16> to vector<128x128xbf16>
    %c0_7 = arith.constant 0 : index
    %c0_8 = arith.constant 0 : index
    %c0_9 = arith.constant 0 : index
    %21 = vector.load %arg3[%c0_7, %c0_8, %c0_9] : memref<9x128x128xbf16, #tpu.memory_space<vmem>>, vector<1x128x128xbf16>
    %22 = vector.shape_cast %21 : vector<1x128x128xbf16> to vector<128x128xbf16>
    %cst_10 = arith.constant dense<0.000000e+00> : vector<128x128xf32>
    %23 = tpu.matmul %20, %22, %cst_10 {dimension_numbers = #tpu.dot_dimension_numbers<[1], [0], [0], [1], [0, 0, 1, 1], [], []>} : vector<128x128xbf16>, vector<128x128xbf16>, vector<128x128xf32> -> vector<128x128xf32>
    %24 = arith.addf %18, %23 : vector<128x128xf32>
    %25 = vector.extract_strided_slice %17 {offsets = [0, 1, 0], sizes = [8, 16, 128], strides = [1, 1, 1]} : vector<10x18x128xbf16> to vector<8x16x128xbf16>
    %26 = vector.shape_cast %25 : vector<8x16x128xbf16> to vector<128x128xbf16>
    %c1_11 = arith.constant 1 : index
    %c0_12 = arith.constant 0 : index
    %c0_13 = arith.constant 0 : index
    %27 = vector.load %arg3[%c1_11, %c0_12, %c0_13] : memref<9x128x128xbf16, #tpu.memory_space<vmem>>, vector<1x128x128xbf16>
    %28 = vector.shape_cast %27 : vector<1x128x128xbf16> to vector<128x128xbf16>
    %cst_14 = arith.constant dense<0.000000e+00> : vector<128x128xf32>
    %29 = tpu.matmul %26, %28, %cst_14 {dimension_numbers = #tpu.dot_dimension_numbers<[1], [0], [0], [1], [0, 0, 1, 1], [], []>} : vector<128x128xbf16>, vector<128x128xbf16>, vector<128x128xf32> -> vector<128x128xf32>
    %30 = arith.addf %24, %29 : vector<128x128xf32>
    %31 = vector.extract_strided_slice %17 {offsets = [0, 2, 0], sizes = [8, 16, 128], strides = [1, 1, 1]} : vector<10x18x128xbf16> to vector<8x16x128xbf16>
    %32 = vector.shape_cast %31 : vector<8x16x128xbf16> to vector<128x128xbf16>
    %c2_15 = arith.constant 2 : index
    %c0_16 = arith.constant 0 : index
    %c0_17 = arith.constant 0 : index
    %33 = vector.load %arg3[%c2_15, %c0_16, %c0_17] : memref<9x128x128xbf16, #tpu.memory_space<vmem>>, vector<1x128x128xbf16>
    %34 = vector.shape_cast %33 : vector<1x128x128xbf16> to vector<128x128xbf16>
    %cst_18 = arith.constant dense<0.000000e+00> : vector<128x128xf32>
    %35 = tpu.matmul %32, %34, %cst_18 {dimension_numbers = #tpu.dot_dimension_numbers<[1], [0], [0], [1], [0, 0, 1, 1], [], []>} : vector<128x128xbf16>, vector<128x128xbf16>, vector<128x128xf32> -> vector<128x128xf32>
    %36 = arith.addf %30, %35 : vector<128x128xf32>
    %37 = vector.extract_strided_slice %17 {offsets = [1, 0, 0], sizes = [8, 16, 128], strides = [1, 1, 1]} : vector<10x18x128xbf16> to vector<8x16x128xbf16>
    %38 = vector.shape_cast %37 : vector<8x16x128xbf16> to vector<128x128xbf16>
    %c3_19 = arith.constant 3 : index
    %c0_20 = arith.constant 0 : index
    %c0_21 = arith.constant 0 : index
    %39 = vector.load %arg3[%c3_19, %c0_20, %c0_21] : memref<9x128x128xbf16, #tpu.memory_space<vmem>>, vector<1x128x128xbf16>
    %40 = vector.shape_cast %39 : vector<1x128x128xbf16> to vector<128x128xbf16>
    %cst_22 = arith.constant dense<0.000000e+00> : vector<128x128xf32>
    %41 = tpu.matmul %38, %40, %cst_22 {dimension_numbers = #tpu.dot_dimension_numbers<[1], [0], [0], [1], [0, 0, 1, 1], [], []>} : vector<128x128xbf16>, vector<128x128xbf16>, vector<128x128xf32> -> vector<128x128xf32>
    %42 = arith.addf %36, %41 : vector<128x128xf32>
    %43 = vector.extract_strided_slice %17 {offsets = [1, 1, 0], sizes = [8, 16, 128], strides = [1, 1, 1]} : vector<10x18x128xbf16> to vector<8x16x128xbf16>
    %44 = vector.shape_cast %43 : vector<8x16x128xbf16> to vector<128x128xbf16>
    %c4 = arith.constant 4 : index
    %c0_23 = arith.constant 0 : index
    %c0_24 = arith.constant 0 : index
    %45 = vector.load %arg3[%c4, %c0_23, %c0_24] : memref<9x128x128xbf16, #tpu.memory_space<vmem>>, vector<1x128x128xbf16>
    %46 = vector.shape_cast %45 : vector<1x128x128xbf16> to vector<128x128xbf16>
    %cst_25 = arith.constant dense<0.000000e+00> : vector<128x128xf32>
    %47 = tpu.matmul %44, %46, %cst_25 {dimension_numbers = #tpu.dot_dimension_numbers<[1], [0], [0], [1], [0, 0, 1, 1], [], []>} : vector<128x128xbf16>, vector<128x128xbf16>, vector<128x128xf32> -> vector<128x128xf32>
    %48 = arith.addf %42, %47 : vector<128x128xf32>
    %49 = vector.extract_strided_slice %17 {offsets = [1, 2, 0], sizes = [8, 16, 128], strides = [1, 1, 1]} : vector<10x18x128xbf16> to vector<8x16x128xbf16>
    %50 = vector.shape_cast %49 : vector<8x16x128xbf16> to vector<128x128xbf16>
    %c5 = arith.constant 5 : index
    %c0_26 = arith.constant 0 : index
    %c0_27 = arith.constant 0 : index
    %51 = vector.load %arg3[%c5, %c0_26, %c0_27] : memref<9x128x128xbf16, #tpu.memory_space<vmem>>, vector<1x128x128xbf16>
    %52 = vector.shape_cast %51 : vector<1x128x128xbf16> to vector<128x128xbf16>
    %cst_28 = arith.constant dense<0.000000e+00> : vector<128x128xf32>
    %53 = tpu.matmul %50, %52, %cst_28 {dimension_numbers = #tpu.dot_dimension_numbers<[1], [0], [0], [1], [0, 0, 1, 1], [], []>} : vector<128x128xbf16>, vector<128x128xbf16>, vector<128x128xf32> -> vector<128x128xf32>
    %54 = arith.addf %48, %53 : vector<128x128xf32>
    %55 = vector.extract_strided_slice %17 {offsets = [2, 0, 0], sizes = [8, 16, 128], strides = [1, 1, 1]} : vector<10x18x128xbf16> to vector<8x16x128xbf16>
    %56 = vector.shape_cast %55 : vector<8x16x128xbf16> to vector<128x128xbf16>
    %c6 = arith.constant 6 : index
    %c0_29 = arith.constant 0 : index
    %c0_30 = arith.constant 0 : index
    %57 = vector.load %arg3[%c6, %c0_29, %c0_30] : memref<9x128x128xbf16, #tpu.memory_space<vmem>>, vector<1x128x128xbf16>
    %58 = vector.shape_cast %57 : vector<1x128x128xbf16> to vector<128x128xbf16>
    %cst_31 = arith.constant dense<0.000000e+00> : vector<128x128xf32>
    %59 = tpu.matmul %56, %58, %cst_31 {dimension_numbers = #tpu.dot_dimension_numbers<[1], [0], [0], [1], [0, 0, 1, 1], [], []>} : vector<128x128xbf16>, vector<128x128xbf16>, vector<128x128xf32> -> vector<128x128xf32>
    %60 = arith.addf %54, %59 : vector<128x128xf32>
    %61 = vector.extract_strided_slice %17 {offsets = [2, 1, 0], sizes = [8, 16, 128], strides = [1, 1, 1]} : vector<10x18x128xbf16> to vector<8x16x128xbf16>
    %62 = vector.shape_cast %61 : vector<8x16x128xbf16> to vector<128x128xbf16>
    %c7 = arith.constant 7 : index
    %c0_32 = arith.constant 0 : index
    %c0_33 = arith.constant 0 : index
    %63 = vector.load %arg3[%c7, %c0_32, %c0_33] : memref<9x128x128xbf16, #tpu.memory_space<vmem>>, vector<1x128x128xbf16>
    %64 = vector.shape_cast %63 : vector<1x128x128xbf16> to vector<128x128xbf16>
    %cst_34 = arith.constant dense<0.000000e+00> : vector<128x128xf32>
    %65 = tpu.matmul %62, %64, %cst_34 {dimension_numbers = #tpu.dot_dimension_numbers<[1], [0], [0], [1], [0, 0, 1, 1], [], []>} : vector<128x128xbf16>, vector<128x128xbf16>, vector<128x128xf32> -> vector<128x128xf32>
    %66 = arith.addf %60, %65 : vector<128x128xf32>
    %67 = vector.extract_strided_slice %17 {offsets = [2, 2, 0], sizes = [8, 16, 128], strides = [1, 1, 1]} : vector<10x18x128xbf16> to vector<8x16x128xbf16>
    %68 = vector.shape_cast %67 : vector<8x16x128xbf16> to vector<128x128xbf16>
    %c8 = arith.constant 8 : index
    %c0_35 = arith.constant 0 : index
    %c0_36 = arith.constant 0 : index
    %69 = vector.load %arg3[%c8, %c0_35, %c0_36] : memref<9x128x128xbf16, #tpu.memory_space<vmem>>, vector<1x128x128xbf16>
    %70 = vector.shape_cast %69 : vector<1x128x128xbf16> to vector<128x128xbf16>
    %cst_37 = arith.constant dense<0.000000e+00> : vector<128x128xf32>
    %71 = tpu.matmul %68, %70, %cst_37 {dimension_numbers = #tpu.dot_dimension_numbers<[1], [0], [0], [1], [0, 0, 1, 1], [], []>} : vector<128x128xbf16>, vector<128x128xbf16>, vector<128x128xf32> -> vector<128x128xf32>
    %72 = arith.addf %66, %71 : vector<128x128xf32>
    %c0_38 = arith.constant 0 : index
    %c0_39 = arith.constant 0 : index
    %73 = vector.load %arg4[%c0_38, %c0_39] : memref<8x128xf32, #tpu.memory_space<vmem>>, vector<1x128xf32>
    %74 = vector.broadcast %73 : vector<1x128xf32> to vector<128x128xf32>
    %75 = arith.addf %72, %74 : vector<128x128xf32>
    %76 = vector.shape_cast %75 : vector<128x128xf32> to vector<8x16x128xf32>
    %c0_40 = arith.constant 0 : index
    %c0_41 = arith.constant 0 : index
    %c0_42 = arith.constant 0 : index
    %c0_43 = arith.constant 0 : index
    %77 = vector.load %arg5[%c0_40, %c0_41, %c0_42, %c0_43] : memref<1x8x16x128xf32, #tpu.memory_space<vmem>>, vector<1x8x16x128xf32>
    %78 = vector.shape_cast %77 : vector<1x8x16x128xf32> to vector<8x16x128xf32>
    %79 = vector.shape_cast %76 : vector<8x16x128xf32> to vector<1x8x16x128xf32>
    tpu.vector_store %arg5[%c0_40, %c0_41, %c0_42, %c0_43], %79 {strides = array<i32>} : memref<1x8x16x128xf32, #tpu.memory_space<vmem>>, vector<1x8x16x128xf32>,
    %cst_44 = arith.constant dense<0.000000e+00> : vector<128xf32>
    %80 = vector.multi_reduction <add>, %75, %cst_44 [0] : vector<128x128xf32> to vector<128xf32>
    %81 = vector.shape_cast %80 : vector<128xf32> to vector<1x128xf32>
    %c0_45 = arith.constant 0 : index
    %c0_46 = arith.constant 0 : index
    %c0_47 = arith.constant 0 : index
    %82 = vector.load %arg6[%c0_45, %c0_46, %c0_47] : memref<1x2x128xf32, #tpu.memory_space<vmem>>, vector<1x1x128xf32>
    %83 = vector.shape_cast %82 : vector<1x1x128xf32> to vector<1x128xf32>
    %84 = vector.shape_cast %81 : vector<1x128xf32> to vector<1x1x128xf32>
    tpu.vector_store %arg6[%c0_45, %c0_46, %c0_47], %84 {strides = array<i32>} : memref<1x2x128xf32, #tpu.memory_space<vmem>>, vector<1x1x128xf32>,
    %85 = arith.mulf %75, %75 : vector<128x128xf32>
    %cst_48 = arith.constant dense<0.000000e+00> : vector<128xf32>
    %86 = vector.multi_reduction <add>, %85, %cst_48 [0] : vector<128x128xf32> to vector<128xf32>
    %87 = vector.shape_cast %86 : vector<128xf32> to vector<1x128xf32>
    %c0_49 = arith.constant 0 : index
    %c1_50 = arith.constant 1 : index
    %c0_51 = arith.constant 0 : index
    %88 = vector.load %arg6[%c0_49, %c1_50, %c0_51] : memref<1x2x128xf32, #tpu.memory_space<vmem>>, vector<1x1x128xf32>
    %89 = vector.shape_cast %88 : vector<1x1x128xf32> to vector<1x128xf32>
    %90 = vector.shape_cast %87 : vector<1x128xf32> to vector<1x1x128xf32>
    tpu.vector_store %arg6[%c0_49, %c1_50, %c0_51], %90 {strides = array<i32>} : memref<1x2x128xf32, #tpu.memory_space<vmem>>, vector<1x1x128xf32>,
    return
  }
  func.func @transform_0(%arg0: i32, %arg1: i32) -> (i32, i32, i32, i32) {
    %c2_i32 = arith.constant 2 : i32
    %0 = arith.muli %arg0, %c2_i32 : i32
    %1 = arith.addi %0, %arg1 : i32
    %c0_i32 = arith.constant 0 : i32
    %c0_i32_0 = arith.constant 0 : i32
    %c0_i32_1 = arith.constant 0 : i32
    %c0_i32_2 = arith.constant 0 : i32
    return %1, %c0_i32, %c0_i32_0, %c0_i32_1 : i32, i32, i32, i32
  }
  func.func @transform_1(%arg0: i32, %arg1: i32) -> (i32, i32, i32) {
    %c0_i32 = arith.constant 0 : i32
    %c0_i32_0 = arith.constant 0 : i32
    %c0_i32_1 = arith.constant 0 : i32
    %c0_i32_2 = arith.constant 0 : i32
    return %c0_i32, %c0_i32_0, %c0_i32_1 : i32, i32, i32
  }
  func.func @transform_2(%arg0: i32, %arg1: i32) -> (i32, i32) {
    %c0_i32 = arith.constant 0 : i32
    %c0_i32_0 = arith.constant 0 : i32
    %c0_i32_1 = arith.constant 0 : i32
    return %c0_i32, %c0_i32_0 : i32, i32
  }
  func.func @transform_3(%arg0: i32, %arg1: i32) -> (i32, i32, i32, i32) {
    %c0_i32 = arith.constant 0 : i32
    %c0_i32_0 = arith.constant 0 : i32
    %c0_i32_1 = arith.constant 0 : i32
    return %arg0, %arg1, %c0_i32, %c0_i32_0 : i32, i32, i32, i32
  }
  func.func @transform_4(%arg0: i32, %arg1: i32) -> (i32, i32, i32) {
    %c2_i32 = arith.constant 2 : i32
    %0 = arith.muli %arg0, %c2_i32 : i32
    %1 = arith.addi %0, %arg1 : i32
    %c0_i32 = arith.constant 0 : i32
    %c0_i32_0 = arith.constant 0 : i32
    %c0_i32_1 = arith.constant 0 : i32
    return %1, %c0_i32, %c0_i32_0 : i32, i32, i32
  }
}

module attributes {stable_mosaic.version = 11 : i64} {
  func.func @_finalize_kernel(%arg0: i32, %arg1: i32, %arg2: memref<1x8x16x128xf32, #tpu.memory_space<vmem>>, %arg3: memref<1x8x16x128xf32, #tpu.memory_space<vmem>>, %arg4: memref<8x128xf32, #tpu.memory_space<vmem>>, %arg5: memref<1x8x16x128xf32, #tpu.memory_space<vmem>>) attributes {dimension_semantics = [#tpu.dimension_semantics<parallel>, #tpu.dimension_semantics<parallel>], iteration_bounds = array<i64: 2, 2>, scalar_prefetch = 0 : i64, scratch_operands = 0 : i64, tpu.core_type = #tpu.core_type<tc>, window_params = [{transform_indices = @transform_0, window_bounds = array<i64: 1, 8, 16, 128>}, {transform_indices = @transform_1, window_bounds = array<i64: 1, 8, 16, 128>}, {pipeline_mode = #tpu.pipeline_mode<synchronous>, transform_indices = @transform_2, window_bounds = array<i64: 8, 128>}, {transform_indices = @transform_3, window_bounds = array<i64: 1, 8, 16, 128>}]} {
    %c0 = arith.constant 0 : index
    %c0_0 = arith.constant 0 : index
    %c0_1 = arith.constant 0 : index
    %c0_2 = arith.constant 0 : index
    %0 = vector.load %arg2[%c0, %c0_0, %c0_1, %c0_2] : memref<1x8x16x128xf32, #tpu.memory_space<vmem>>, vector<1x8x16x128xf32>
    %c1 = arith.constant 1 : index
    %c0_3 = arith.constant 0 : index
    %1 = vector.load %arg4[%c1, %c0_3] : memref<8x128xf32, #tpu.memory_space<vmem>>, vector<1x128xf32>
    %2 = vector.shape_cast %1 : vector<1x128xf32> to vector<1x1x1x128xf32>
    %3 = vector.broadcast %2 : vector<1x1x1x128xf32> to vector<1x8x16x128xf32>
    %4 = arith.mulf %0, %3 : vector<1x8x16x128xf32>
    %c2 = arith.constant 2 : index
    %c0_4 = arith.constant 0 : index
    %5 = vector.load %arg4[%c2, %c0_4] : memref<8x128xf32, #tpu.memory_space<vmem>>, vector<1x128xf32>
    %6 = vector.shape_cast %5 : vector<1x128xf32> to vector<1x1x1x128xf32>
    %7 = vector.broadcast %6 : vector<1x1x1x128xf32> to vector<1x8x16x128xf32>
    %8 = arith.addf %4, %7 : vector<1x8x16x128xf32>
    %cst = arith.constant 0.000000e+00 : f32
    %9 = vector.broadcast %cst : f32 to vector<1x8x16x128xf32>
    %10 = arith.cmpf oge, %8, %9 : vector<1x8x16x128xf32>
    %c3 = arith.constant 3 : index
    %c0_5 = arith.constant 0 : index
    %11 = vector.load %arg4[%c3, %c0_5] : memref<8x128xf32, #tpu.memory_space<vmem>>, vector<1x128xf32>
    %12 = vector.shape_cast %11 : vector<1x128xf32> to vector<1x1x1x128xf32>
    %13 = vector.broadcast %12 : vector<1x1x1x128xf32> to vector<1x8x16x128xf32>
    %14 = arith.mulf %8, %13 : vector<1x8x16x128xf32>
    %15 = arith.select %10, %8, %14 : vector<1x8x16x128xi1>, vector<1x8x16x128xf32>
    %c0_6 = arith.constant 0 : index
    %c0_7 = arith.constant 0 : index
    %c0_8 = arith.constant 0 : index
    %c0_9 = arith.constant 0 : index
    %16 = vector.load %arg3[%c0_6, %c0_7, %c0_8, %c0_9] : memref<1x8x16x128xf32, #tpu.memory_space<vmem>>, vector<1x8x16x128xf32>
    %17 = arith.addf %15, %16 : vector<1x8x16x128xf32>
    %c0_10 = arith.constant 0 : index
    %c0_11 = arith.constant 0 : index
    %c0_12 = arith.constant 0 : index
    %c0_13 = arith.constant 0 : index
    %18 = vector.load %arg5[%c0_10, %c0_11, %c0_12, %c0_13] : memref<1x8x16x128xf32, #tpu.memory_space<vmem>>, vector<1x8x16x128xf32>
    tpu.vector_store %arg5[%c0_10, %c0_11, %c0_12, %c0_13], %17 {strides = array<i32>} : memref<1x8x16x128xf32, #tpu.memory_space<vmem>>, vector<1x8x16x128xf32>,
    return
  }
  func.func @transform_0(%arg0: i32, %arg1: i32) -> (i32, i32, i32, i32) {
    %c0_i32 = arith.constant 0 : i32
    %c0_i32_0 = arith.constant 0 : i32
    %c0_i32_1 = arith.constant 0 : i32
    return %arg0, %arg1, %c0_i32, %c0_i32_0 : i32, i32, i32, i32
  }
  func.func @transform_1(%arg0: i32, %arg1: i32) -> (i32, i32, i32, i32) {
    %c0_i32 = arith.constant 0 : i32
    %c0_i32_0 = arith.constant 0 : i32
    %c0_i32_1 = arith.constant 0 : i32
    return %arg0, %arg1, %c0_i32, %c0_i32_0 : i32, i32, i32, i32
  }
  func.func @transform_2(%arg0: i32, %arg1: i32) -> (i32, i32) {
    %c0_i32 = arith.constant 0 : i32
    %c0_i32_0 = arith.constant 0 : i32
    %c0_i32_1 = arith.constant 0 : i32
    return %c0_i32, %c0_i32_0 : i32, i32
  }
  func.func @transform_3(%arg0: i32, %arg1: i32) -> (i32, i32, i32, i32) {
    %c0_i32 = arith.constant 0 : i32
    %c0_i32_0 = arith.constant 0 : i32
    %c0_i32_1 = arith.constant 0 : i32
    return %arg0, %arg1, %c0_i32, %c0_i32_0 : i32, i32, i32, i32
  }
}

</mosaic_0001>

<llo_original>
// kernel: _spefe_compute.5
$region0: #{_spefe_compute.5}
  #allocation0 [shape = 'u32[]', space=smem, size = 0x4, offset = 0x4, fixed_abs, tag = 'smem constant byte address 0x4 - core index']
  #allocation1 [shape = 'u32[72,128]{1,0:T(1,128)}', space=vmem, size = 0x9000, scoped, tag = 'internal scratch']
  %s0 = inlined_call_operand.vmem [shape: f32[2,16,16,128], index: 0, kind: input, shape index: {}]
  %s1 = inlined_call_operand.vmem [shape: f32[2,16,16,128], index: 1, kind: input, shape index: {}]
  %s2 = inlined_call_operand.vmem [shape: f32[8,128], index: 2, kind: input, shape index: {}]
  %s3 = inlined_call_operand.vmem [shape: f32[2,16,16,128], index: 3, kind: output, shape index: {}]
  %s4 = sld [smem:[#allocation0]]
  $region45: #{_spefe_compute.5} parent=0
    _
  %s6 = ssub.s32 1, %s4
  %s7 = scalar_select 0, %s6, %s4
  loop: start=0, step=1, limit=6
  $region2: #{_spefe_compute.5} parent=0 // loop_pre_header
    _
  $region3: #{_spefe_compute.5} parent=0 // loop_header
    %s9 = sphi 0, %s13
    %p10 = scmp.ge.s32.totalorder %s9, 6
    %s16 = sphi 0, %s28
    %s17 = sphi 0, %s24
    %s18 = sphi 0, %s16
    %s19 = sphi 0, %s17
    %s20 = sphi 0, %s18
    %s21 = sphi 0, %s19
    %s33 = sphi 0, %s35
    %s36 = sphi 0, %s33
    %s37 = sphi 0, %s36
    %s53 = sphi 0, %s37
    %s61 = sphi 0, %s63
    %s64 = sphi 0, %s61
    %s65 = sphi 0, %s64
    %s81 = sphi 0, %s65
    %s85 = sphi 0, %s85
    %s87 = sphi 0, %s85
    %s88 = sphi 0, %s87
    %s102 = sphi 0, %s88
    %s110 = sphi 0, %s112
    %s113 = sphi 0, %s110
    %s114 = sphi 0, %s113
    %s130 = sphi 0, %s114
  $region4: #{_spefe_compute.5} parent=0 // loop_header_branch
    %12 = sbr.rel (%p10) target = $region8
  $region5: #{_spefe_compute.5} parent=0 // loop_body
    %s14 = ssub.s32 %s9, 1
    %s15 = ssub.s32 %s9, 2
    %s22 = sadd.s32 1, %s17
    %p23 = scmp.ge.s32.totalorder %s22, 2
    %s24 = scalar_select %p23, 0, %s22
    %s25 = sadd.s32 1, %s16
    %s26 = scalar_select %p23, %s25, %s16
    %p27 = scmp.ge.s32.totalorder %s26, 2
    %s28 = scalar_select %p27, 0, %s26
    %s29 = ssub.s32 %s16, %s28
    %s30 = ssub.s32 %s17, %s24
    %s31 = sor.u32 %s29, %s30
    %p32 = scmp.eq.s32.totalorder %s31, 0
    %s34 = sadd.s32 %s33, 1
    %s35 = scalar_select %p32, %s33, %s34
    %p38 = pneg %p32
    %p39 = scmp.eq.s32.totalorder %s9, 3
    %p40 = por %p38, %p39
    %p41 = scmp.ne.s32.totalorder %s33, %s36
    %p42 = scmp.eq.s32.totalorder %s9, 0
    %p43 = por %p41, %p42
    %p44 = scmp.ne.s32.totalorder %s33, %s36
    %p45 = scmp.eq.s32.totalorder %s14, 3
    %p46 = por %p44, %p45
    %p47 = scmp.ne.s32.totalorder %s36, %s37
    %p48 = scmp.eq.s32.totalorder %s14, 0
    %p49 = por %p47, %p48
    %p50 = scmp.ne.s32.totalorder %s36, %s37
    %p51 = scmp.eq.s32.totalorder %s15, 3
    %p52 = por %p50, %p51
    %p54 = scmp.ne.s32.totalorder %s37, %s53
    %p55 = scmp.eq.s32.totalorder %s15, 0
    %p56 = por %p54, %p55
    %s57 = ssub.s32 %s16, %s28
    %s58 = ssub.s32 %s17, %s24
    %s59 = sor.u32 %s57, %s58
    %p60 = scmp.eq.s32.totalorder %s59, 0
    %s62 = sadd.s32 %s61, 1
    %s63 = scalar_select %p60, %s61, %s62
    %p66 = pneg %p60
    %p67 = scmp.eq.s32.totalorder %s9, 3
    %p68 = por %p66, %p67
    %p69 = scmp.ne.s32.totalorder %s61, %s64
    %p70 = scmp.eq.s32.totalorder %s9, 0
    %p71 = por %p69, %p70
    %p72 = scmp.ne.s32.totalorder %s61, %s64
    %p73 = scmp.eq.s32.totalorder %s14, 3
    %p74 = por %p72, %p73
    %p75 = scmp.ne.s32.totalorder %s64, %s65
    %p76 = scmp.eq.s32.totalorder %s14, 0
    %p77 = por %p75, %p76
    %p78 = scmp.ne.s32.totalorder %s64, %s65
    %p79 = scmp.eq.s32.totalorder %s15, 3
    %p80 = por %p78, %p79
    %p82 = scmp.ne.s32.totalorder %s65, %s81
    %p83 = scmp.eq.s32.totalorder %s15, 0
    %p84 = por %p82, %p83
    %s86 = sadd.s32 %s85, 1
    %p89 = scmp.eq.s32.totalorder %s9, 3
    %p90 = scmp.ne.s32.totalorder %s85, %s87
    %p91 = scmp.eq.s32.totalorder %s9, 0
    %p92 = por %p90, %p91
    %p93 = scmp.ne.s32.totalorder %s85, %s87
    %p94 = scmp.eq.s32.totalorder %s14, 3
    %p95 = por %p93, %p94
    %p96 = scmp.ne.s32.totalorder %s87, %s88
    %p97 = scmp.eq.s32.totalorder %s14, 0
    %p98 = por %p96, %p97
    %p99 = scmp.ne.s32.totalorder %s87, %s88
    %p100 = scmp.eq.s32.totalorder %s15, 3
    %p101 = por %p99, %p100
    %p103 = scmp.ne.s32.totalorder %s88, %s102
    %p104 = scmp.eq.s32.totalorder %s15, 0
    %p105 = por %p103, %p104
    %s106 = ssub.s32 %s16, %s28
    %s107 = ssub.s32 %s17, %s24
    %s108 = sor.u32 %s106, %s107
    %p109 = scmp.eq.s32.totalorder %s108, 0
    %s111 = sadd.s32 %s110, 1
    %s112 = scalar_select %p109, %s110, %s111
    %p115 = pneg %p109
    %p116 = scmp.eq.s32.totalorder %s9, 3
    %p117 = por %p115, %p116
    %p118 = scmp.ne.s32.totalorder %s110, %s113
    %p119 = scmp.eq.s32.totalorder %s9, 0
    %p120 = por %p118, %p119
    %p121 = scmp.ne.s32.totalorder %s110, %s113
    %p122 = scmp.eq.s32.totalorder %s14, 3
    %p123 = por %p121, %p122
    %p124 = scmp.ne.s32.totalorder %s113, %s114
    %p125 = scmp.eq.s32.totalorder %s14, 0
    %p126 = por %p124, %p125
    %p127 = scmp.ne.s32.totalorder %s113, %s114
    %p128 = scmp.eq.s32.totalorder %s15, 3
    %p129 = por %p127, %p128
    %p131 = scmp.ne.s32.totalorder %s114, %s130
    %p132 = scmp.eq.s32.totalorder %s15, 0
    %p133 = por %p131, %p132
    %p134 = scmp.le.s32.totalorder 1, %s9
    %p135 = scmp.lt.s32.totalorder %s9, 5
    %p136 = pnand %p134, %p135
    %p137 = pneg %p136
    // Predicated region
    $region9: #{_spefe_compute.5} parent=5 // pred_check
      _
    $region10: #{_spefe_compute.5} parent=5 // pred_check_branch
      %139 = sbr.rel (%p136) target = $region12
    $region11: #{_spefe_compute.5} parent=5 // pred_region
      %s140 = ssub.s32 %s9, 1
      // Predicated region
      $region13: #{_spefe_compute.5} parent=11 // pred_check
        %p141 = pneg %p98
      $region14: #{_spefe_compute.5} parent=11 // pred_check_branch
        %143 = sbr.rel (%p141) target = $region16
      $region15: #{_spefe_compute.5} parent=11 // pred_region
        _
      $region16: #{_spefe_compute.5} parent=11 // pred_fallthru
        _
    $region12: #{_spefe_compute.5} parent=5 // pred_fallthru
      _
    %p144 = scmp.lt.s32.totalorder %s9, 4
    // Predicated region
    $region17: #{_spefe_compute.5} parent=5 // pred_check
      %p145 = pneg %p144
    $region18: #{_spefe_compute.5} parent=5 // pred_check_branch
      %147 = sbr.rel (%p145) target = $region20
    $region19: #{_spefe_compute.5} parent=5 // pred_region
      // Predicated region
      $region21: #{_spefe_compute.5} parent=19 // pred_check
        %p148 = pneg %p43
      $region22: #{_spefe_compute.5} parent=19 // pred_check_branch
        %150 = sbr.rel (%p148) target = $region24
      $region23: #{_spefe_compute.5} parent=19 // pred_region
        %s151 = smul.u32 8, %s17
        %p152 = scmp.lt.s32.totalorder %s16, 1
        %s153 = scalar_select %p152, %s16, 1
        %p154 = scmp.lt.s32.totalorder %s151, 15
        %s155 = scalar_select %p154, %s151, 15
        %s156 = smul.addr %s155, 2
        %s157 = smul.addr %s153, 32
        %s158 = sadd.s32 %s156, %s157
        %s159 = smul.addr %s158, 8
        %s160 = scalar_lea.vmem %s0, %s159
        %s161 = smul.u32 8, %s17
      $region24: #{_spefe_compute.5} parent=19 // pred_fallthru
        _
      // Predicated region
      $region25: #{_spefe_compute.5} parent=19 // pred_check
        %p162 = pneg %p71
      $region26: #{_spefe_compute.5} parent=19 // pred_check_branch
        %164 = sbr.rel (%p162) target = $region28
      $region27: #{_spefe_compute.5} parent=19 // pred_region
        %s165 = smul.u32 8, %s17
        %p166 = scmp.lt.s32.totalorder %s16, 1
        %s167 = scalar_select %p166, %s16, 1
        %p168 = scmp.lt.s32.totalorder %s165, 15
        %s169 = scalar_select %p168, %s165, 15
        %s170 = smul.addr %s169, 2
        %s171 = smul.addr %s167, 32
        %s172 = sadd.s32 %s170, %s171
        %s173 = smul.addr %s172, 8
        %s174 = scalar_lea.vmem %s1, %s173
        %s175 = smul.u32 8, %s17
      $region28: #{_spefe_compute.5} parent=19 // pred_fallthru
        _
    $region20: #{_spefe_compute.5} parent=5 // pred_fallthru
      _
    %p176 = scmp.le.s32.totalorder 1, %s9
    %p177 = scmp.lt.s32.totalorder %s9, 5
    %p178 = pnand %p176, %p177
    %p179 = pneg %p178
    // Predicated region
    $region29: #{_spefe_compute.5} parent=5 // pred_check
      _
    $region30: #{_spefe_compute.5} parent=5 // pred_check_branch
      %181 = sbr.rel (%p178) target = $region32
    $region31: #{_spefe_compute.5} parent=5 // pred_region
      %s182 = ssub.s32 %s9, 1
      %s183 = smul.u32 8, %s19
      %p184 = scmp.lt.s32.totalorder %s18, 1
      %s185 = scalar_select %p184, %s18, 1
      %p186 = scmp.lt.s32.totalorder %s183, 15
      %s187 = scalar_select %p186, %s183, 15
      %s188 = smul.addr %s187, 2
      %s189 = smul.addr %s185, 32
      %s190 = sadd.s32 %s188, %s189
      %s191 = smul.addr %s190, 8
      %s192 = scalar_lea.vmem %s0, %s191
      %p193 = pneg %p49
      %p194 = pneg %p46
      %s195 = smul.u32 8, %s19
      %p196 = scmp.lt.s32.totalorder %s18, 1
      %s197 = scalar_select %p196, %s18, 1
      %p198 = scmp.lt.s32.totalorder %s195, 15
      %s199 = scalar_select %p198, %s195, 15
      %s200 = smul.addr %s199, 2
      %s201 = smul.addr %s197, 32
      %s202 = sadd.s32 %s200, %s201
      %s203 = smul.addr %s202, 8
      %s204 = scalar_lea.vmem %s1, %s203
      %p205 = pneg %p77
      %p206 = pneg %p74
      %p207 = pneg %p98
      %p208 = pneg %p95
      %p209 = pneg %p126
      %p210 = pneg %p123
      %s211 = smul.u32 8, %s19
      %p212 = scmp.lt.s32.totalorder %s18, 1
      %s213 = scalar_select %p212, %s18, 1
      %p214 = scmp.lt.s32.totalorder %s211, 15
      %s215 = scalar_select %p214, %s211, 15
      %s216 = smul.addr %s215, 2
      %s217 = smul.addr %s213, 32
      %s218 = sadd.s32 %s216, %s217
      %s219 = smul.addr %s218, 8
      %s220 = scalar_lea.vmem %s3, %s219
      %s221 = smul.u32 8, %s19
      %p222 = scmp.lt.s32.totalorder %s18, 1
      %s223 = scalar_select %p222, %s18, 1
      %p224 = scmp.lt.s32.totalorder %s221, 15
      %s225 = scalar_select %p224, %s221, 15
      %s226 = smul.addr %s225, 2
      %s227 = smul.addr %s223, 32
      %s228 = sadd.s32 %s226, %s227
      %s229 = smul.addr %s228, 8
      %s230 = scalar_lea.vmem %s0, %s229
      %s231 = smul.u32 8, %s19
      %s232 = smul.u32 8, %s19
      %p233 = scmp.lt.s32.totalorder %s18, 1
      %s234 = scalar_select %p233, %s18, 1
      %p235 = scmp.lt.s32.totalorder %s232, 15
      %s236 = scalar_select %p235, %s232, 15
      %s237 = smul.addr %s236, 2
      %s238 = smul.addr %s234, 32
      %s239 = sadd.s32 %s237, %s238
      %s240 = smul.addr %s239, 8
      %s241 = scalar_lea.vmem %s1, %s240
      %s242 = smul.u32 8, %s19
      %s243 = smul.u32 8, %s19
      %p244 = scmp.lt.s32.totalorder %s18, 1
      %s245 = scalar_select %p244, %s18, 1
      %p246 = scmp.lt.s32.totalorder %s243, 15
      %s247 = scalar_select %p246, %s243, 15
      %s248 = smul.addr %s247, 2
      %s249 = smul.addr %s245, 32
      %s250 = sadd.s32 %s248, %s249
      %s251 = smul.addr %s250, 8
      %s252 = scalar_lea.vmem %s3, %s251
      %s253 = smul.u32 8, %s19
      %v254 = vld [vmem:[%s230] sm:$0xff]
      %v255 = vld [vmem:[%s230 + $0x8] sm:$0xff]
      %v256 = vld [vmem:[%s230 + $0x10] sm:$0xff]
      %v257 = vld [vmem:[%s230 + $0x18] sm:$0xff]
      %v258 = vld [vmem:[%s230 + $0x20] sm:$0xff]
      %v259 = vld [vmem:[%s230 + $0x28] sm:$0xff]
      %v260 = vld [vmem:[%s230 + $0x30] sm:$0xff]
      %v261 = vld [vmem:[%s230 + $0x38] sm:$0xff]
      %v262 = vld [vmem:[%s230 + $0x40] sm:$0xff]
      %v263 = vld [vmem:[%s230 + $0x48] sm:$0xff]
      %v264 = vld [vmem:[%s230 + $0x50] sm:$0xff]
      %v265 = vld [vmem:[%s230 + $0x58] sm:$0xff]
      %v266 = vld [vmem:[%s230 + $0x60] sm:$0xff]
      %v267 = vld [vmem:[%s230 + $0x68] sm:$0xff]
      %v268 = vld [vmem:[%s230 + $0x70] sm:$0xff]
      %v269 = vld [vmem:[%s230 + $0x78] sm:$0xff]
      %v270 = vld [vmem:[%s2 + $0x1] sm:$0x1]
      %v271 = vperm.slane %v270, 0
      %v272 = vmul.f32 %v254, %v271
      %v273 = vmul.f32 %v255, %v271
      %v274 = vmul.f32 %v256, %v271
      %v275 = vmul.f32 %v257, %v271
      %v276 = vmul.f32 %v258, %v271
      %v277 = vmul.f32 %v259, %v271
      %v278 = vmul.f32 %v260, %v271
      %v279 = vmul.f32 %v261, %v271
      %v280 = vmul.f32 %v262, %v271
      %v281 = vmul.f32 %v263, %v271
      %v282 = vmul.f32 %v264, %v271
      %v283 = vmul.f32 %v265, %v271
      %v284 = vmul.f32 %v266, %v271
      %v285 = vmul.f32 %v267, %v271
      %v286 = vmul.f32 %v268, %v271
      %v287 = vmul.f32 %v269, %v271
      %v288 = vld [vmem:[%s2 + $0x2] sm:$0x1]
      %v289 = vperm.slane %v288, 0
      %v290 = vadd.f32 %v272, %v289
      %v291 = vadd.f32 %v273, %v289
      %v292 = vadd.f32 %v274, %v289
      %v293 = vadd.f32 %v275, %v289
      %v294 = vadd.f32 %v276, %v289
      %v295 = vadd.f32 %v277, %v289
      %v296 = vadd.f32 %v278, %v289
      %v297 = vadd.f32 %v279, %v289
      %v298 = vadd.f32 %v280, %v289
      %v299 = vadd.f32 %v281, %v289
      %v300 = vadd.f32 %v282, %v289
      %v301 = vadd.f32 %v283, %v289
      %v302 = vadd.f32 %v284, %v289
      %v303 = vadd.f32 %v285, %v289
      %v304 = vadd.f32 %v286, %v289
      %v305 = vadd.f32 %v287, %v289
      %vm306 = vcmp.ge.f32.partialorder %v290, 0.0
      %vm307 = vcmp.ge.f32.partialorder %v291, 0.0
      %vm308 = vcmp.ge.f32.partialorder %v292, 0.0
      %vm309 = vcmp.ge.f32.partialorder %v293, 0.0
      %vm310 = vcmp.ge.f32.partialorder %v294, 0.0
      %vm311 = vcmp.ge.f32.partialorder %v295, 0.0
      %vm312 = vcmp.ge.f32.partialorder %v296, 0.0
      %vm313 = vcmp.ge.f32.partialorder %v297, 0.0
      %vm314 = vcmp.ge.f32.partialorder %v298, 0.0
      %vm315 = vcmp.ge.f32.partialorder %v299, 0.0
      %vm316 = vcmp.ge.f32.partialorder %v300, 0.0
      %vm317 = vcmp.ge.f32.partialorder %v301, 0.0
      %vm318 = vcmp.ge.f32.partialorder %v302, 0.0
      %vm319 = vcmp.ge.f32.partialorder %v303, 0.0
      %vm320 = vcmp.ge.f32.partialorder %v304, 0.0
      %vm321 = vcmp.ge.f32.partialorder %v305, 0.0
      %v322 = vld [vmem:[%s2 + $0x3] sm:$0x1]
      %v323 = vperm.slane %v322, 0
      %v324 = vmul.f32 %v290, %v323
      %v325 = vmul.f32 %v291, %v323
      %v326 = vmul.f32 %v292, %v323
      %v327 = vmul.f32 %v293, %v323
      %v328 = vmul.f32 %v294, %v323
      %v329 = vmul.f32 %v295, %v323
      %v330 = vmul.f32 %v296, %v323
      %v331 = vmul.f32 %v297, %v323
      %v332 = vmul.f32 %v298, %v323
      %v333 = vmul.f32 %v299, %v323
      %v334 = vmul.f32 %v300, %v323
      %v335 = vmul.f32 %v301, %v323
      %v336 = vmul.f32 %v302, %v323
      %v337 = vmul.f32 %v303, %v323
      %v338 = vmul.f32 %v304, %v323
      %v339 = vmul.f32 %v305, %v323
      %v340 = vsel %vm306, %v290, %v324
      %v341 = vsel %vm307, %v291, %v325
      %v342 = vsel %vm308, %v292, %v326
      %v343 = vsel %vm309, %v293, %v327
      %v344 = vsel %vm310, %v294, %v328
      %v345 = vsel %vm311, %v295, %v329
      %v346 = vsel %vm312, %v296, %v330
      %v347 = vsel %vm313, %v297, %v331
      %v348 = vsel %vm314, %v298, %v332
      %v349 = vsel %vm315, %v299, %v333
      %v350 = vsel %vm316, %v300, %v334
      %v351 = vsel %vm317, %v301, %v335
      %v352 = vsel %vm318, %v302, %v336
      %v353 = vsel %vm319, %v303, %v337
      %v354 = vsel %vm320, %v304, %v338
      %v355 = vsel %vm321, %v305, %v339
      %v356 = vld [vmem:[%s241] sm:$0xff]
      %v357 = vld [vmem:[%s241 + $0x8] sm:$0xff]
      %v358 = vld [vmem:[%s241 + $0x10] sm:$0xff]
      %v359 = vld [vmem:[%s241 + $0x18] sm:$0xff]
      %v360 = vld [vmem:[%s241 + $0x20] sm:$0xff]
      %v361 = vld [vmem:[%s241 + $0x28] sm:$0xff]
      %v362 = vld [vmem:[%s241 + $0x30] sm:$0xff]
      %v363 = vld [vmem:[%s241 + $0x38] sm:$0xff]
      %v364 = vld [vmem:[%s241 + $0x40] sm:$0xff]
      %v365 = vld [vmem:[%s241 + $0x48] sm:$0xff]
      %v366 = vld [vmem:[%s241 + $0x50] sm:$0xff]
      %v367 = vld [vmem:[%s241 + $0x58] sm:$0xff]
      %v368 = vld [vmem:[%s241 + $0x60] sm:$0xff]
      %v369 = vld [vmem:[%s241 + $0x68] sm:$0xff]
      %v370 = vld [vmem:[%s241 + $0x70] sm:$0xff]
      %v371 = vld [vmem:[%s241 + $0x78] sm:$0xff]
      %v372 = vadd.f32 %v340, %v356
      %v373 = vadd.f32 %v341, %v357
      %v374 = vadd.f32 %v342, %v358
      %v375 = vadd.f32 %v343, %v359
      %v376 = vadd.f32 %v344, %v360
      %v377 = vadd.f32 %v345, %v361
      %v378 = vadd.f32 %v346, %v362
      %v379 = vadd.f32 %v347, %v363
      %v380 = vadd.f32 %v348, %v364
      %v381 = vadd.f32 %v349, %v365
      %v382 = vadd.f32 %v350, %v366
      %v383 = vadd.f32 %v351, %v367
      %v384 = vadd.f32 %v352, %v368
      %v385 = vadd.f32 %v353, %v369
      %v386 = vadd.f32 %v354, %v370
      %v387 = vadd.f32 %v355, %v371
      %388 = vst [vmem:[%s252] sm:$0xff] %v372
      %389 = vst [vmem:[%s252 + $0x8] sm:$0xff] %v373
      %390 = vst [vmem:[%s252 + $0x10] sm:$0xff] %v374
      %391 = vst [vmem:[%s252 + $0x18] sm:$0xff] %v375
      %392 = vst [vmem:[%s252 + $0x20] sm:$0xff] %v376
      %393 = vst [vmem:[%s252 + $0x28] sm:$0xff] %v377
      %394 = vst [vmem:[%s252 + $0x30] sm:$0xff] %v378
      %395 = vst [vmem:[%s252 + $0x38] sm:$0xff] %v379
      %396 = vst [vmem:[%s252 + $0x40] sm:$0xff] %v380
      %397 = vst [vmem:[%s252 + $0x48] sm:$0xff] %v381
      %398 = vst [vmem:[%s252 + $0x50] sm:$0xff] %v382
      %399 = vst [vmem:[%s252 + $0x58] sm:$0xff] %v383
      %400 = vst [vmem:[%s252 + $0x60] sm:$0xff] %v384
      %401 = vst [vmem:[%s252 + $0x68] sm:$0xff] %v385
      %402 = vst [vmem:[%s252 + $0x70] sm:$0xff] %v386
      %403 = vst [vmem:[%s252 + $0x78] sm:$0xff] %v387
      %s404 = smul.u32 8, %s19
      %p405 = scmp.lt.s32.totalorder %s18, 1
      %s406 = scalar_select %p405, %s18, 1
      %p407 = scmp.lt.s32.totalorder %s404, 15
      %s408 = scalar_select %p407, %s404, 15
      %s409 = smul.addr %s408, 2
      %s410 = smul.addr %s406, 32
      %s411 = sadd.s32 %s409, %s410
      %s412 = smul.addr %s411, 8
      %s413 = scalar_lea.vmem %s3, %s412
      // Predicated region
      $region33: #{_spefe_compute.5} parent=31 // pred_check
        %p414 = pneg %p123
      $region34: #{_spefe_compute.5} parent=31 // pred_check_branch
        %416 = sbr.rel (%p414) target = $region36
      $region35: #{_spefe_compute.5} parent=31 // pred_region
        %s417 = smul.u32 8, %s19
      $region36: #{_spefe_compute.5} parent=31 // pred_fallthru
        _
    $region32: #{_spefe_compute.5} parent=5 // pred_fallthru
      _
    %p418 = scmp.le.s32.totalorder 2, %s9
    // Predicated region
    $region37: #{_spefe_compute.5} parent=5 // pred_check
      %p419 = pneg %p418
    $region38: #{_spefe_compute.5} parent=5 // pred_check_branch
      %421 = sbr.rel (%p419) target = $region40
    $region39: #{_spefe_compute.5} parent=5 // pred_region
      %s422 = ssub.s32 %s9, 2
      // Predicated region
      $region41: #{_spefe_compute.5} parent=39 // pred_check
        %p423 = pneg %p129
      $region42: #{_spefe_compute.5} parent=39 // pred_check_branch
        %425 = sbr.rel (%p423) target = $region44
      $region43: #{_spefe_compute.5} parent=39 // pred_region
        %s426 = smul.u32 8, %s21
        %p427 = scmp.lt.s32.totalorder %s20, 1
        %s428 = scalar_select %p427, %s20, 1
        %p429 = scmp.lt.s32.totalorder %s426, 15
        %s430 = scalar_select %p429, %s426, 15
        %s431 = smul.addr %s430, 2
        %s432 = smul.addr %s428, 32
        %s433 = sadd.s32 %s431, %s432
        %s434 = smul.addr %s433, 8
        %s435 = scalar_lea.vmem %s3, %s434
      $region44: #{_spefe_compute.5} parent=39 // pred_fallthru
        _
    $region40: #{_spefe_compute.5} parent=5 // pred_fallthru
      _
  $region6: #{_spefe_compute.5} parent=0 // loop_footer
    %s13 = sadd.s32 1, %s9
  $region7: #{_spefe_compute.5} parent=0 // loop_footer_branch
    %8 = sbr.rel target = $region3
  $region8: #{_spefe_compute.5} parent=0 // loop_exit
    _

// kernel: _spefe_compute.3
$region0: #{_spefe_compute.3}
  #allocation0 [shape = 'u32[]', space=smem, size = 0x4, offset = 0x4, fixed_abs, tag = 'smem constant byte address 0x4 - core index']
  #allocation1 [shape = 'u32[72,128]{1,0:T(1,128)}', space=vmem, size = 0x9000, scoped, tag = 'internal scratch']
  %s0 = inlined_call_operand.vmem [shape: bf16[4,10,18,128], index: 0, kind: input, shape index: {}]
  %s1 = inlined_call_operand.vmem [shape: bf16[9,128,128], index: 1, kind: input, shape index: {}]
  %s2 = inlined_call_operand.vmem [shape: f32[8,128], index: 2, kind: input, shape index: {}]
  %s3 = inlined_call_operand.vmem [shape: f32[2,16,16,128], index: 3, kind: output, shape index: {0}]
  %s4 = inlined_call_operand.vmem [shape: f32[4,2,128], index: 4, kind: output, shape index: {1}]
  %5 = xla_tuple %s3, %s4
  %s6 = sld [smem:[#allocation0]]
  $region53: #{_spefe_compute.3} parent=0
    _
  %s8 = ssub.s32 1, %s6
  %s9 = scalar_select 0, %s8, %s6
  loop: start=0, step=1, limit=6
  $region2: #{_spefe_compute.3} parent=0 // loop_pre_header
    _
  $region3: #{_spefe_compute.3} parent=0 // loop_header
    %s11 = sphi 0, %s15
    %p12 = scmp.ge.s32.totalorder %s11, 6
    %s18 = sphi 0, %s30
    %s19 = sphi 0, %s26
    %s20 = sphi 0, %s18
    %s21 = sphi 0, %s19
    %s22 = sphi 0, %s20
    %s23 = sphi 0, %s21
    %s37 = sphi 0, %s39
    %s40 = sphi 0, %s37
    %s41 = sphi 0, %s40
    %s57 = sphi 0, %s41
    %s61 = sphi 0, %s61
    %s63 = sphi 0, %s61
    %s64 = sphi 0, %s63
    %s78 = sphi 0, %s64
    %s82 = sphi 0, %s82
    %s84 = sphi 0, %s82
    %s85 = sphi 0, %s84
    %s99 = sphi 0, %s85
    %s107 = sphi 0, %s109
    %s110 = sphi 0, %s107
    %s111 = sphi 0, %s110
    %s127 = sphi 0, %s111
    %s137 = sphi 0, %s139
    %s140 = sphi 0, %s137
    %s141 = sphi 0, %s140
    %s157 = sphi 0, %s141
  $region4: #{_spefe_compute.3} parent=0 // loop_header_branch
    %14 = sbr.rel (%p12) target = $region8
  $region5: #{_spefe_compute.3} parent=0 // loop_body
    %s16 = ssub.s32 %s11, 1
    %s17 = ssub.s32 %s11, 2
    %s24 = sadd.s32 1, %s19
    %p25 = scmp.ge.s32.totalorder %s24, 2
    %s26 = scalar_select %p25, 0, %s24
    %s27 = sadd.s32 1, %s18
    %s28 = scalar_select %p25, %s27, %s18
    %p29 = scmp.ge.s32.totalorder %s28, 2
    %s30 = scalar_select %p29, 0, %s28
    %s31 = smul.u32 %s18, 2
    %s32 = sadd.s32 %s31, %s19
    %s33 = smul.u32 %s30, 2
    %s34 = sadd.s32 %s33, %s26
    %s35 = ssub.s32 %s32, %s34
    %p36 = scmp.eq.s32.totalorder %s35, 0
    %s38 = sadd.s32 %s37, 1
    %s39 = scalar_select %p36, %s37, %s38
    %p42 = pneg %p36
    %p43 = scmp.eq.s32.totalorder %s11, 3
    %p44 = por %p42, %p43
    %p45 = scmp.ne.s32.totalorder %s37, %s40
    %p46 = scmp.eq.s32.totalorder %s11, 0
    %p47 = por %p45, %p46
    %p48 = scmp.ne.s32.totalorder %s37, %s40
    %p49 = scmp.eq.s32.totalorder %s16, 3
    %p50 = por %p48, %p49
    %p51 = scmp.ne.s32.totalorder %s40, %s41
    %p52 = scmp.eq.s32.totalorder %s16, 0
    %p53 = por %p51, %p52
    %p54 = scmp.ne.s32.totalorder %s40, %s41
    %p55 = scmp.eq.s32.totalorder %s17, 3
    %p56 = por %p54, %p55
    %p58 = scmp.ne.s32.totalorder %s41, %s57
    %p59 = scmp.eq.s32.totalorder %s17, 0
    %p60 = por %p58, %p59
    %s62 = sadd.s32 %s61, 1
    %p65 = scmp.eq.s32.totalorder %s11, 3
    %p66 = scmp.ne.s32.totalorder %s61, %s63
    %p67 = scmp.eq.s32.totalorder %s11, 0
    %p68 = por %p66, %p67
    %p69 = scmp.ne.s32.totalorder %s61, %s63
    %p70 = scmp.eq.s32.totalorder %s16, 3
    %p71 = por %p69, %p70
    %p72 = scmp.ne.s32.totalorder %s63, %s64
    %p73 = scmp.eq.s32.totalorder %s16, 0
    %p74 = por %p72, %p73
    %p75 = scmp.ne.s32.totalorder %s63, %s64
    %p76 = scmp.eq.s32.totalorder %s17, 3
    %p77 = por %p75, %p76
    %p79 = scmp.ne.s32.totalorder %s64, %s78
    %p80 = scmp.eq.s32.totalorder %s17, 0
    %p81 = por %p79, %p80
    %s83 = sadd.s32 %s82, 1
    %p86 = scmp.eq.s32.totalorder %s11, 3
    %p87 = scmp.ne.s32.totalorder %s82, %s84
    %p88 = scmp.eq.s32.totalorder %s11, 0
    %p89 = por %p87, %p88
    %p90 = scmp.ne.s32.totalorder %s82, %s84
    %p91 = scmp.eq.s32.totalorder %s16, 3
    %p92 = por %p90, %p91
    %p93 = scmp.ne.s32.totalorder %s84, %s85
    %p94 = scmp.eq.s32.totalorder %s16, 0
    %p95 = por %p93, %p94
    %p96 = scmp.ne.s32.totalorder %s84, %s85
    %p97 = scmp.eq.s32.totalorder %s17, 3
    %p98 = por %p96, %p97
    %p100 = scmp.ne.s32.totalorder %s85, %s99
    %p101 = scmp.eq.s32.totalorder %s17, 0
    %p102 = por %p100, %p101
    %s103 = ssub.s32 %s18, %s30
    %s104 = ssub.s32 %s19, %s26
    %s105 = sor.u32 %s103, %s104
    %p106 = scmp.eq.s32.totalorder %s105, 0
    %s108 = sadd.s32 %s107, 1
    %s109 = scalar_select %p106, %s107, %s108
    %p112 = pneg %p106
    %p113 = scmp.eq.s32.totalorder %s11, 3
    %p114 = por %p112, %p113
    %p115 = scmp.ne.s32.totalorder %s107, %s110
    %p116 = scmp.eq.s32.totalorder %s11, 0
    %p117 = por %p115, %p116
    %p118 = scmp.ne.s32.totalorder %s107, %s110
    %p119 = scmp.eq.s32.totalorder %s16, 3
    %p120 = por %p118, %p119
    %p121 = scmp.ne.s32.totalorder %s110, %s111
    %p122 = scmp.eq.s32.totalorder %s16, 0
    %p123 = por %p121, %p122
    %p124 = scmp.ne.s32.totalorder %s110, %s111
    %p125 = scmp.eq.s32.totalorder %s17, 3
    %p126 = por %p124, %p125
    %p128 = scmp.ne.s32.totalorder %s111, %s127
    %p129 = scmp.eq.s32.totalorder %s17, 0
    %p130 = por %p128, %p129
    %s131 = smul.u32 %s18, 2
    %s132 = sadd.s32 %s131, %s19
    %s133 = smul.u32 %s30, 2
    %s134 = sadd.s32 %s133, %s26
    %s135 = ssub.s32 %s132, %s134
    %p136 = scmp.eq.s32.totalorder %s135, 0
    %s138 = sadd.s32 %s137, 1
    %s139 = scalar_select %p136, %s137, %s138
    %p142 = pneg %p136
    %p143 = scmp.eq.s32.totalorder %s11, 3
    %p144 = por %p142, %p143
    %p145 = scmp.ne.s32.totalorder %s137, %s140
    %p146 = scmp.eq.s32.totalorder %s11, 0
    %p147 = por %p145, %p146
    %p148 = scmp.ne.s32.totalorder %s137, %s140
    %p149 = scmp.eq.s32.totalorder %s16, 3
    %p150 = por %p148, %p149
    %p151 = scmp.ne.s32.totalorder %s140, %s141
    %p152 = scmp.eq.s32.totalorder %s16, 0
    %p153 = por %p151, %p152
    %p154 = scmp.ne.s32.totalorder %s140, %s141
    %p155 = scmp.eq.s32.totalorder %s17, 3
    %p156 = por %p154, %p155
    %p158 = scmp.ne.s32.totalorder %s141, %s157
    %p159 = scmp.eq.s32.totalorder %s17, 0
    %p160 = por %p158, %p159
    %p161 = scmp.le.s32.totalorder 1, %s11
    %p162 = scmp.lt.s32.totalorder %s11, 5
    %p163 = pnand %p161, %p162
    %p164 = pneg %p163
    // Predicated region
    $region9: #{_spefe_compute.3} parent=5 // pred_check
      _
    $region10: #{_spefe_compute.3} parent=5 // pred_check_branch
      %166 = sbr.rel (%p163) target = $region12
    $region11: #{_spefe_compute.3} parent=5 // pred_region
      %s167 = ssub.s32 %s11, 1
      // Predicated region
      $region13: #{_spefe_compute.3} parent=11 // pred_check
        %p168 = pneg %p74
      $region14: #{_spefe_compute.3} parent=11 // pred_check_branch
        %170 = sbr.rel (%p168) target = $region16
      $region15: #{_spefe_compute.3} parent=11 // pred_region
        _
      $region16: #{_spefe_compute.3} parent=11 // pred_fallthru
        _
      // Predicated region
      $region17: #{_spefe_compute.3} parent=11 // pred_check
        %p171 = pneg %p95
      $region18: #{_spefe_compute.3} parent=11 // pred_check_branch
        %173 = sbr.rel (%p171) target = $region20
      $region19: #{_spefe_compute.3} parent=11 // pred_region
        _
      $region20: #{_spefe_compute.3} parent=11 // pred_fallthru
        _
    $region12: #{_spefe_compute.3} parent=5 // pred_fallthru
      _
    %p174 = scmp.lt.s32.totalorder %s11, 4
    // Predicated region
    $region21: #{_spefe_compute.3} parent=5 // pred_check
      %p175 = pneg %p174
    $region22: #{_spefe_compute.3} parent=5 // pred_check_branch
      %177 = sbr.rel (%p175) target = $region24
    $region23: #{_spefe_compute.3} parent=5 // pred_region
      // Predicated region
      $region25: #{_spefe_compute.3} parent=23 // pred_check
        %p178 = pneg %p47
      $region26: #{_spefe_compute.3} parent=23 // pred_check_branch
        %180 = sbr.rel (%p178) target = $region28
      $region27: #{_spefe_compute.3} parent=23 // pred_region
        %s181 = smul.u32 %s18, 2
        %s182 = sadd.s32 %s181, %s19
        %p183 = scmp.lt.s32.totalorder %s182, 3
        %s184 = scalar_select %p183, %s182, 3
        %s185 = smul.addr %s184, 30
        %s186 = smul.addr %s185, 4
        %s187 = scalar_lea.vmem %s0, %s186
        %s188 = smul.u32 %s18, 2
        %s189 = sadd.s32 %s188, %s19
      $region28: #{_spefe_compute.3} parent=23 // pred_fallthru
        _
    $region24: #{_spefe_compute.3} parent=5 // pred_fallthru
      _
    %p190 = scmp.le.s32.totalorder 1, %s11
    %p191 = scmp.lt.s32.totalorder %s11, 5
    %p192 = pnand %p190, %p191
    %p193 = pneg %p192
    // Predicated region
    $region29: #{_spefe_compute.3} parent=5 // pred_check
      _
    $region30: #{_spefe_compute.3} parent=5 // pred_check_branch
      %195 = sbr.rel (%p192) target = $region32
    $region31: #{_spefe_compute.3} parent=5 // pred_region
      %s196 = ssub.s32 %s11, 1
      %s197 = smul.u32 %s20, 2
      %s198 = sadd.s32 %s197, %s21
      %p199 = scmp.lt.s32.totalorder %s198, 3
      %s200 = scalar_select %p199, %s198, 3
      %s201 = smul.addr %s200, 30
      %s202 = smul.addr %s201, 4
      %s203 = scalar_lea.vmem %s0, %s202
      %p204 = pneg %p53
      %p205 = pneg %p50
      %p206 = pneg %p74
      %p207 = pneg %p71
      %p208 = pneg %p95
      %p209 = pneg %p92
      %p210 = pneg %p123
      %p211 = pneg %p120
      %s212 = smul.u32 8, %s21
      %p213 = scmp.lt.s32.totalorder %s20, 1
      %s214 = scalar_select %p213, %s20, 1
      %p215 = scmp.lt.s32.totalorder %s212, 15
      %s216 = scalar_select %p215, %s212, 15
      %s217 = smul.addr %s216, 2
      %s218 = smul.addr %s214, 32
      %s219 = sadd.s32 %s217, %s218
      %s220 = smul.addr %s219, 8
      %s221 = scalar_lea.vmem %s3, %s220
      %p222 = pneg %p153
      %p223 = pneg %p150
      %s224 = smul.u32 %s20, 2
      %s225 = sadd.s32 %s224, %s21
      %p226 = scmp.lt.s32.totalorder %s225, 3
      %s227 = scalar_select %p226, %s225, 3
      %s228 = smul.addr %s227, 2
      %s229 = scalar_lea.vmem %s4, %s228
      %s230 = smul.u32 %s20, 2
      %s231 = sadd.s32 %s230, %s21
      %p232 = scmp.lt.s32.totalorder %s231, 3
      %s233 = scalar_select %p232, %s231, 3
      %s234 = smul.addr %s233, 30
      %s235 = smul.addr %s234, 4
      %s236 = scalar_lea.vmem %s0, %s235
      %s237 = smul.u32 %s20, 2
      %s238 = sadd.s32 %s237, %s21
      %s239 = smul.u32 8, %s21
      %p240 = scmp.lt.s32.totalorder %s20, 1
      %s241 = scalar_select %p240, %s20, 1
      %p242 = scmp.lt.s32.totalorder %s239, 15
      %s243 = scalar_select %p242, %s239, 15
      %s244 = smul.addr %s243, 2
      %s245 = smul.addr %s241, 32
      %s246 = sadd.s32 %s244, %s245
      %s247 = smul.addr %s246, 8
      %s248 = scalar_lea.vmem %s3, %s247
      %s249 = smul.u32 8, %s21
      %s250 = smul.u32 %s20, 2
      %s251 = sadd.s32 %s250, %s21
      %p252 = scmp.lt.s32.totalorder %s251, 3
      %s253 = scalar_select %p252, %s251, 3
      %s254 = smul.addr %s253, 2
      %s255 = scalar_lea.vmem %s4, %s254
      %s256 = smul.u32 %s20, 2
      %s257 = sadd.s32 %s256, %s21
      %v258 = vld [vmem:[%s236] sm:$0xf]
      %v259 = vld [vmem:[%s236 + $0x4] sm:$0xf]
      %v260 = vld [vmem:[%s236 + $0x8] sm:$0x1]
      %v261 = vld [vmem:[%s236 + $0xc] sm:$0xf]
      %v262 = vld [vmem:[%s236 + $0x10] sm:$0xf]
      %v263 = vld [vmem:[%s236 + $0x14] sm:$0x1]
      %v264 = vld [vmem:[%s236 + $0x18] sm:$0xf]
      %v265 = vld [vmem:[%s236 + $0x1c] sm:$0xf]
      %v266 = vld [vmem:[%s236 + $0x20] sm:$0x1]
      %v267 = vld [vmem:[%s236 + $0x24] sm:$0xf]
      %v268 = vld [vmem:[%s236 + $0x28] sm:$0xf]
      %v269 = vld [vmem:[%s236 + $0x2c] sm:$0x1]
      %v270 = vld [vmem:[%s236 + $0x30] sm:$0xf]
      %v271 = vld [vmem:[%s236 + $0x34] sm:$0xf]
      %v272 = vld [vmem:[%s236 + $0x38] sm:$0x1]
      %v273 = vld [vmem:[%s236 + $0x3c] sm:$0xf]
      %v274 = vld [vmem:[%s236 + $0x40] sm:$0xf]
      %v275 = vld [vmem:[%s236 + $0x44] sm:$0x1]
      %v276 = vld [vmem:[%s236 + $0x48] sm:$0xf]
      %v277 = vld [vmem:[%s236 + $0x4c] sm:$0xf]
      %v278 = vld [vmem:[%s236 + $0x50] sm:$0x1]
      %v279 = vld [vmem:[%s236 + $0x54] sm:$0xf]
      %v280 = vld [vmem:[%s236 + $0x58] sm:$0xf]
      %v281 = vld [vmem:[%s236 + $0x5c] sm:$0x1]
      %v282 = vld [vmem:[%s236 + $0x60] sm:$0xf]
      %v283 = vld [vmem:[%s236 + $0x64] sm:$0xf]
      %v284 = vld [vmem:[%s236 + $0x68] sm:$0x1]
      %v285 = vld [vmem:[%s236 + $0x6c] sm:$0xf]
      %v286 = vld [vmem:[%s236 + $0x70] sm:$0xf]
      %v287 = vld [vmem:[%s236 + $0x74] sm:$0x1]
      %v288 = vld [vmem:[%s1] sm:$0xf]
      %v289 = vld [vmem:[%s1 + $0x4] sm:$0xf]
      %v290 = vld [vmem:[%s1 + $0x8] sm:$0xf]
      %v291 = vld [vmem:[%s1 + $0xc] sm:$0xf]
      %v292 = vld [vmem:[%s1 + $0x10] sm:$0xf]
      %v293 = vld [vmem:[%s1 + $0x14] sm:$0xf]
      %v294 = vld [vmem:[%s1 + $0x18] sm:$0xf]
      %v295 = vld [vmem:[%s1 + $0x1c] sm:$0xf]
      %v296 = vld [vmem:[%s1 + $0x20] sm:$0xf]
      %v297 = vld [vmem:[%s1 + $0x24] sm:$0xf]
      %v298 = vld [vmem:[%s1 + $0x28] sm:$0xf]
      %v299 = vld [vmem:[%s1 + $0x2c] sm:$0xf]
      %v300 = vld [vmem:[%s1 + $0x30] sm:$0xf]
      %v301 = vld [vmem:[%s1 + $0x34] sm:$0xf]
      %v302 = vld [vmem:[%s1 + $0x38] sm:$0xf]
      %v303 = vld [vmem:[%s1 + $0x3c] sm:$0xf]
      %vm304 = vsmask.f32 3328
      %vm305 = vsmask.f32 7440
      %vm306 = vmor %vm304, %vm305
      %v308 = vshrl.u32 %v258, 16
      %v310 = vrot.slane %v308, 4
      %v311 = vshll.u32 %v258, 16
      %v313 = vrot.slane %v311, 5
      %v314 = vor.u32 %v310, %v313
      %v315 = vrot.slane %v314, 4
      %v317 = vshll.u32 %v259, 16
      %v319 = vrot.slane %v317, 5
      %v320 = vsel %vm306, %v315, %v319
      %v321 = vshrl.u32 %v259, 16
      %v323 = vrot.slane %v321, 4
      %v324 = vor.u32 %v323, %v319
      %v325 = vrot.slane %v324, 4
      %v327 = vshll.u32 %v260, 16
      %v329 = vrot.slane %v327, 5
      %v330 = vsel %vm306, %v325, %v329
      %v332 = vshrl.u32 %v261, 16
      %v334 = vrot.slane %v332, 4
      %v335 = vshll.u32 %v261, 16
      %v337 = vrot.slane %v335, 5
      %v338 = vor.u32 %v334, %v337
      %v339 = vrot.slane %v338, 4
      %v341 = vshll.u32 %v262, 16
      %v343 = vrot.slane %v341, 5
      %v344 = vsel %vm306, %v339, %v343
      %v345 = vshrl.u32 %v262, 16
      %v347 = vrot.slane %v345, 4
      %v348 = vor.u32 %v347, %v343
      %v349 = vrot.slane %v348, 4
      %v351 = vshll.u32 %v263, 16
      %v353 = vrot.slane %v351, 5
      %v354 = vsel %vm306, %v349, %v353
      %v356 = vshrl.u32 %v264, 16
      %v358 = vrot.slane %v356, 4
      %v359 = vshll.u32 %v264, 16
      %v361 = vrot.slane %v359, 5
      %v362 = vor.u32 %v358, %v361
      %v363 = vrot.slane %v362, 4
      %v365 = vshll.u32 %v265, 16
      %v367 = vrot.slane %v365, 5
      %v368 = vsel %vm306, %v363, %v367
      %v369 = vshrl.u32 %v265, 16
      %v371 = vrot.slane %v369, 4
      %v372 = vor.u32 %v371, %v367
      %v373 = vrot.slane %v372, 4
      %v375 = vshll.u32 %v266, 16
      %v377 = vrot.slane %v375, 5
      %v378 = vsel %vm306, %v373, %v377
      %v380 = vshrl.u32 %v267, 16
      %v382 = vrot.slane %v380, 4
      %v383 = vshll.u32 %v267, 16
      %v385 = vrot.slane %v383, 5
      %v386 = vor.u32 %v382, %v385
      %v387 = vrot.slane %v386, 4
      %v389 = vshll.u32 %v268, 16
      %v391 = vrot.slane %v389, 5
      %v392 = vsel %vm306, %v387, %v391
      %v393 = vshrl.u32 %v268, 16
      %v395 = vrot.slane %v393, 4
      %v396 = vor.u32 %v395, %v391
      %v397 = vrot.slane %v396, 4
      %v399 = vshll.u32 %v269, 16
      %v401 = vrot.slane %v399, 5
      %v402 = vsel %vm306, %v397, %v401
      %v404 = vshrl.u32 %v270, 16
      %v406 = vrot.slane %v404, 4
      %v407 = vshll.u32 %v270, 16
      %v409 = vrot.slane %v407, 5
      %v410 = vor.u32 %v406, %v409
      %v411 = vrot.slane %v410, 4
      %v413 = vshll.u32 %v271, 16
      %v415 = vrot.slane %v413, 5
      %v416 = vsel %vm306, %v411, %v415
      %v417 = vshrl.u32 %v271, 16
      %v419 = vrot.slane %v417, 4
      %v420 = vor.u32 %v419, %v415
      %v421 = vrot.slane %v420, 4
      %v423 = vshll.u32 %v272, 16
      %v425 = vrot.slane %v423, 5
      %v426 = vsel %vm306, %v421, %v425
      %v428 = vshrl.u32 %v273, 16
      %v430 = vrot.slane %v428, 4
      %v431 = vshll.u32 %v273, 16
      %v433 = vrot.slane %v431, 5
      %v434 = vor.u32 %v430, %v433
      %v435 = vrot.slane %v434, 4
      %v437 = vshll.u32 %v274, 16
      %v439 = vrot.slane %v437, 5
      %v440 = vsel %vm306, %v435, %v439
      %v441 = vshrl.u32 %v274, 16
      %v443 = vrot.slane %v441, 4
      %v444 = vor.u32 %v443, %v439
      %v445 = vrot.slane %v444, 4
      %v447 = vshll.u32 %v275, 16
      %v449 = vrot.slane %v447, 5
      %v450 = vsel %vm306, %v445, %v449
      %v452 = vshrl.u32 %v276, 16
      %v454 = vrot.slane %v452, 4
      %v455 = vshll.u32 %v276, 16
      %v457 = vrot.slane %v455, 5
      %v458 = vor.u32 %v454, %v457
      %v459 = vrot.slane %v458, 4
      %v461 = vshll.u32 %v277, 16
      %v463 = vrot.slane %v461, 5
      %v464 = vsel %vm306, %v459, %v463
      %v465 = vshrl.u32 %v277, 16
      %v467 = vrot.slane %v465, 4
      %v468 = vor.u32 %v467, %v463
      %v469 = vrot.slane %v468, 4
      %v471 = vshll.u32 %v278, 16
      %v473 = vrot.slane %v471, 5
      %v474 = vsel %vm306, %v469, %v473
      %v476 = vshrl.u32 %v279, 16
      %v478 = vrot.slane %v476, 4
      %v479 = vshll.u32 %v279, 16
      %v481 = vrot.slane %v479, 5
      %v482 = vor.u32 %v478, %v481
      %v483 = vrot.slane %v482, 4
      %v485 = vshll.u32 %v280, 16
      %v487 = vrot.slane %v485, 5
      %v488 = vsel %vm306, %v483, %v487
      %v489 = vshrl.u32 %v280, 16
      %v491 = vrot.slane %v489, 4
      %v492 = vor.u32 %v491, %v487
      %v493 = vrot.slane %v492, 4
      %v495 = vshll.u32 %v281, 16
      %v497 = vrot.slane %v495, 5
      %v498 = vsel %vm306, %v493, %v497
      %s499 = scalar_lea.vmem %s1, 64
      %v500 = vld [vmem:[%s499] sm:$0xf]
      %v501 = vld [vmem:[%s499 + $0x4] sm:$0xf]
      %v502 = vld [vmem:[%s499 + $0x8] sm:$0xf]
      %v503 = vld [vmem:[%s499 + $0xc] sm:$0xf]
      %v504 = vld [vmem:[%s499 + $0x10] sm:$0xf]
      %v505 = vld [vmem:[%s499 + $0x14] sm:$0xf]
      %v506 = vld [vmem:[%s499 + $0x18] sm:$0xf]
      %v507 = vld [vmem:[%s499 + $0x1c] sm:$0xf]
      %v508 = vld [vmem:[%s499 + $0x20] sm:$0xf]
      %v509 = vld [vmem:[%s499 + $0x24] sm:$0xf]
      %v510 = vld [vmem:[%s499 + $0x28] sm:$0xf]
      %v511 = vld [vmem:[%s499 + $0x2c] sm:$0xf]
      %v512 = vld [vmem:[%s499 + $0x30] sm:$0xf]
      %v513 = vld [vmem:[%s499 + $0x34] sm:$0xf]
      %v514 = vld [vmem:[%s499 + $0x38] sm:$0xf]
      %v515 = vld [vmem:[%s499 + $0x3c] sm:$0xf]
      %v516 = vunpack.c.l.b16 %v320
      %v517 = vunpack.c.l.b16 %v330
      %v518 = vunpack.c.l.b16 %v344
      %v519 = vunpack.c.l.b16 %v354
      %v520 = vunpack.c.l.b16 %v368
      %v521 = vunpack.c.l.b16 %v378
      %v522 = vunpack.c.l.b16 %v392
      %v523 = vunpack.c.l.b16 %v402
      %v524 = vunpack.c.l.b16 %v416
      %v525 = vunpack.c.l.b16 %v426
      %v526 = vunpack.c.l.b16 %v440
      %v527 = vunpack.c.l.b16 %v450
      %v528 = vunpack.c.l.b16 %v464
      %v529 = vunpack.c.l.b16 %v474
      %v530 = vunpack.c.l.b16 %v488
      %v531 = vunpack.c.l.b16 %v498
      %v532 = vpack.c.b16 %v517, %v516
      %v533 = vpack.c.b16 %v519, %v518
      %v534 = vpack.c.b16 %v521, %v520
      %v535 = vpack.c.b16 %v523, %v522
      %v536 = vpack.c.b16 %v525, %v524
      %v537 = vpack.c.b16 %v527, %v526
      %v538 = vpack.c.b16 %v529, %v528
      %v539 = vpack.c.b16 %v531, %v530
      %v564 = vunpack.c.l.b16 %v500
      %v565 = vunpack.c.l.b16 %v501
      %v566 = vunpack.c.l.b16 %v502
      %v567 = vunpack.c.l.b16 %v503
      %v568 = vunpack.c.l.b16 %v504
      %v569 = vunpack.c.l.b16 %v505
      %v570 = vunpack.c.l.b16 %v506
      %v571 = vunpack.c.l.b16 %v507
      %v572 = vunpack.c.l.b16 %v508
      %v573 = vunpack.c.l.b16 %v509
      %v574 = vunpack.c.l.b16 %v510
      %v575 = vunpack.c.l.b16 %v511
      %v576 = vunpack.c.l.b16 %v512
      %v577 = vunpack.c.l.b16 %v513
      %v578 = vunpack.c.l.b16 %v514
      %v579 = vunpack.c.l.b16 %v515
      %v580 = vpack.c.b16 %v565, %v564
      %v581 = vpack.c.b16 %v567, %v566
      %v582 = vpack.c.b16 %v569, %v568
      %v583 = vpack.c.b16 %v571, %v570
      %v584 = vpack.c.b16 %v573, %v572
      %v585 = vpack.c.b16 %v575, %v574
      %v586 = vpack.c.b16 %v577, %v576
      %v587 = vpack.c.b16 %v579, %v578
      %596 = vmatpush.bf16.msra.mxu0 %v587
      %597 = vmatpush.bf16.msra.mxu0 %v586
      %598 = vmatpush.bf16.msra.mxu0 %v585
      %599 = vmatpush.bf16.msra.mxu0 %v584
      %600 = vmatpush.bf16.msra.mxu0 %v583
      %601 = vmatpush.bf16.msra.mxu0 %v582
      %602 = vmatpush.bf16.msra.mxu0 %v581
      %603 = vmatpush.bf16.msra.mxu0 %v580
      %604 = vmatmul.bf16.gmra.mxu0 %v532
      %v605 = vpop.f32.mrf.mxu0
      %v606 = vadd.f32 0.0, %v605
      %v607 = vpop.f32.mrf.mxu0
      %v608 = vadd.f32 0.0, %v607
      %609 = vmatmul.bf16.gmra.mxu0 %v533
      %v610 = vpop.f32.mrf.mxu0
      %v611 = vadd.f32 0.0, %v610
      %v612 = vpop.f32.mrf.mxu0
      %v613 = vadd.f32 0.0, %v612
      %614 = vmatmul.bf16.gmra.mxu0 %v534
      %v615 = vpop.f32.mrf.mxu0
      %v616 = vadd.f32 0.0, %v615
      %v617 = vpop.f32.mrf.mxu0
      %v618 = vadd.f32 0.0, %v617
      %619 = vmatmul.bf16.gmra.mxu0 %v535
      %v620 = vpop.f32.mrf.mxu0
      %v621 = vadd.f32 0.0, %v620
      %v622 = vpop.f32.mrf.mxu0
      %v623 = vadd.f32 0.0, %v622
      %624 = vmatmul.bf16.gmra.mxu0 %v536
      %v625 = vpop.f32.mrf.mxu0
      %v626 = vadd.f32 0.0, %v625
      %v627 = vpop.f32.mrf.mxu0
      %v628 = vadd.f32 0.0, %v627
      %629 = vmatmul.bf16.gmra.mxu0 %v537
      %v630 = vpop.f32.mrf.mxu0
      %v631 = vadd.f32 0.0, %v630
      %v632 = vpop.f32.mrf.mxu0
      %v633 = vadd.f32 0.0, %v632
      %634 = vmatmul.bf16.gmra.mxu0 %v538
      %v635 = vpop.f32.mrf.mxu0
      %v636 = vadd.f32 0.0, %v635
      %v637 = vpop.f32.mrf.mxu0
      %v638 = vadd.f32 0.0, %v637
      %639 = vmatmul.bf16.gmra.mxu0 %v539
      %v640 = vpop.f32.mrf.mxu0
      %v641 = vadd.f32 0.0, %v640
      %v642 = vpop.f32.mrf.mxu0
      %v643 = vadd.f32 0.0, %v642
      %644 = vdwg.mxu0
      %v661 = vunpack.c.l.b16 %v258
      %v662 = vunpack.c.l.b16 %v259
      %v663 = vunpack.c.l.b16 %v261
      %v664 = vunpack.c.l.b16 %v262
      %v665 = vunpack.c.l.b16 %v264
      %v666 = vunpack.c.l.b16 %v265
      %v667 = vunpack.c.l.b16 %v267
      %v668 = vunpack.c.l.b16 %v268
      %v669 = vunpack.c.l.b16 %v270
      %v670 = vunpack.c.l.b16 %v271
      %v671 = vunpack.c.l.b16 %v273
      %v672 = vunpack.c.l.b16 %v274
      %v673 = vunpack.c.l.b16 %v276
      %v674 = vunpack.c.l.b16 %v277
      %v675 = vunpack.c.l.b16 %v279
      %v676 = vunpack.c.l.b16 %v280
      %v677 = vpack.c.b16 %v662, %v661
      %v678 = vpack.c.b16 %v664, %v663
      %v679 = vpack.c.b16 %v666, %v665
      %v680 = vpack.c.b16 %v668, %v667
      %v681 = vpack.c.b16 %v670, %v669
      %v682 = vpack.c.b16 %v672, %v671
      %v683 = vpack.c.b16 %v674, %v673
      %v684 = vpack.c.b16 %v676, %v675
      %v709 = vunpack.c.l.b16 %v288
      %v710 = vunpack.c.l.b16 %v289
      %v711 = vunpack.c.l.b16 %v290
      %v712 = vunpack.c.l.b16 %v291
      %v713 = vunpack.c.l.b16 %v292
      %v714 = vunpack.c.l.b16 %v293
      %v715 = vunpack.c.l.b16 %v294
      %v716 = vunpack.c.l.b16 %v295
      %v717 = vunpack.c.l.b16 %v296
      %v718 = vunpack.c.l.b16 %v297
      %v719 = vunpack.c.l.b16 %v298
      %v720 = vunpack.c.l.b16 %v299
      %v721 = vunpack.c.l.b16 %v300
      %v722 = vunpack.c.l.b16 %v301
      %v723 = vunpack.c.l.b16 %v302
      %v724 = vunpack.c.l.b16 %v303
      %v725 = vpack.c.b16 %v710, %v709
      %v726 = vpack.c.b16 %v712, %v711
      %v727 = vpack.c.b16 %v714, %v713
      %v728 = vpack.c.b16 %v716, %v715
      %v729 = vpack.c.b16 %v718, %v717
      %v730 = vpack.c.b16 %v720, %v719
      %v731 = vpack.c.b16 %v722, %v721
      %v732 = vpack.c.b16 %v724, %v723
      %741 = vmatpush.bf16.msra.mxu0 %v732
      %742 = vmatpush.bf16.msra.mxu0 %v731
      %743 = vmatpush.bf16.msra.mxu0 %v730
      %744 = vmatpush.bf16.msra.mxu0 %v729
      %745 = vmatpush.bf16.msra.mxu0 %v728
      %746 = vmatpush.bf16.msra.mxu0 %v727
      %747 = vmatpush.bf16.msra.mxu0 %v726
      %748 = vmatpush.bf16.msra.mxu0 %v725
      %749 = vmatmul.bf16.gmra.mxu0 %v677
      %v750 = vpop.f32.mrf.mxu0
      %v751 = vadd.f32 %v606, %v750
      %v752 = vpop.f32.mrf.mxu0
      %v753 = vadd.f32 %v608, %v752
      %754 = vmatmul.bf16.gmra.mxu0 %v678
      %v755 = vpop.f32.mrf.mxu0
      %v756 = vadd.f32 %v611, %v755
      %v757 = vpop.f32.mrf.mxu0
      %v758 = vadd.f32 %v613, %v757
      %759 = vmatmul.bf16.gmra.mxu0 %v679
      %v760 = vpop.f32.mrf.mxu0
      %v761 = vadd.f32 %v616, %v760
      %v762 = vpop.f32.mrf.mxu0
      %v763 = vadd.f32 %v618, %v762
      %764 = vmatmul.bf16.gmra.mxu0 %v680
      %v765 = vpop.f32.mrf.mxu0
      %v766 = vadd.f32 %v621, %v765
      %v767 = vpop.f32.mrf.mxu0
      %v768 = vadd.f32 %v623, %v767
      %769 = vmatmul.bf16.gmra.mxu0 %v681
      %v770 = vpop.f32.mrf.mxu0
      %v771 = vadd.f32 %v626, %v770
      %v772 = vpop.f32.mrf.mxu0
      %v773 = vadd.f32 %v628, %v772
      %774 = vmatmul.bf16.gmra.mxu0 %v682
      %v775 = vpop.f32.mrf.mxu0
      %v776 = vadd.f32 %v631, %v775
      %v777 = vpop.f32.mrf.mxu0
      %v778 = vadd.f32 %v633, %v777
      %779 = vmatmul.bf16.gmra.mxu0 %v683
      %v780 = vpop.f32.mrf.mxu0
      %v781 = vadd.f32 %v636, %v780
      %v782 = vpop.f32.mrf.mxu0
      %v783 = vadd.f32 %v638, %v782
      %784 = vmatmul.bf16.gmra.mxu0 %v684
      %v785 = vpop.f32.mrf.mxu0
      %v786 = vadd.f32 %v641, %v785
      %v787 = vpop.f32.mrf.mxu0
      %v788 = vadd.f32 %v643, %v787
      %789 = vdwg.mxu0
      %vm798 = vcmask 1042432
      %vm799 = vcmask 1046532
      %vm800 = vmor %vm798, %vm799
      %v801 = vrot.slane %v258, 5
      %v802 = vrot.slane %v801, 4
      %v803 = vrot.slane %v259, 5
      %v804 = vsel %vm800, %v802, %v803
      %v805 = vrot.slane %v803, 4
      %v806 = vrot.slane %v260, 5
      %v807 = vsel %vm800, %v805, %v806
      %v808 = vrot.slane %v261, 5
      %v809 = vrot.slane %v808, 4
      %v810 = vrot.slane %v262, 5
      %v811 = vsel %vm800, %v809, %v810
      %v812 = vrot.slane %v810, 4
      %v813 = vrot.slane %v263, 5
      %v814 = vsel %vm800, %v812, %v813
      %v815 = vrot.slane %v264, 5
      %v816 = vrot.slane %v815, 4
      %v817 = vrot.slane %v265, 5
      %v818 = vsel %vm800, %v816, %v817
      %v819 = vrot.slane %v817, 4
      %v820 = vrot.slane %v266, 5
      %v821 = vsel %vm800, %v819, %v820
      %v822 = vrot.slane %v267, 5
      %v823 = vrot.slane %v822, 4
      %v824 = vrot.slane %v268, 5
      %v825 = vsel %vm800, %v823, %v824
      %v826 = vrot.slane %v824, 4
      %v827 = vrot.slane %v269, 5
      %v828 = vsel %vm800, %v826, %v827
      %v829 = vrot.slane %v270, 5
      %v830 = vrot.slane %v829, 4
      %v831 = vrot.slane %v271, 5
      %v832 = vsel %vm800, %v830, %v831
      %v833 = vrot.slane %v831, 4
      %v834 = vrot.slane %v272, 5
      %v835 = vsel %vm800, %v833, %v834
      %v836 = vrot.slane %v273, 5
      %v837 = vrot.slane %v836, 4
      %v838 = vrot.slane %v274, 5
      %v839 = vsel %vm800, %v837, %v838
      %v840 = vrot.slane %v838, 4
      %v841 = vrot.slane %v275, 5
      %v842 = vsel %vm800, %v840, %v841
      %v843 = vrot.slane %v276, 5
      %v844 = vrot.slane %v843, 4
      %v845 = vrot.slane %v277, 5
      %v846 = vsel %vm800, %v844, %v845
      %v847 = vrot.slane %v845, 4
      %v848 = vrot.slane %v278, 5
      %v849 = vsel %vm800, %v847, %v848
      %v850 = vrot.slane %v279, 5
      %v851 = vrot.slane %v850, 4
      %v852 = vrot.slane %v280, 5
      %v853 = vsel %vm800, %v851, %v852
      %v854 = vrot.slane %v852, 4
      %v855 = vrot.slane %v281, 5
      %v856 = vsel %vm800, %v854, %v855
      %s857 = scalar_lea.vmem %s1, 128
      %v858 = vld [vmem:[%s857] sm:$0xf]
      %v859 = vld [vmem:[%s857 + $0x4] sm:$0xf]
      %v860 = vld [vmem:[%s857 + $0x8] sm:$0xf]
      %v861 = vld [vmem:[%s857 + $0xc] sm:$0xf]
      %v862 = vld [vmem:[%s857 + $0x10] sm:$0xf]
      %v863 = vld [vmem:[%s857 + $0x14] sm:$0xf]
      %v864 = vld [vmem:[%s857 + $0x18] sm:$0xf]
      %v865 = vld [vmem:[%s857 + $0x1c] sm:$0xf]
      %v866 = vld [vmem:[%s857 + $0x20] sm:$0xf]
      %v867 = vld [vmem:[%s857 + $0x24] sm:$0xf]
      %v868 = vld [vmem:[%s857 + $0x28] sm:$0xf]
      %v869 = vld [vmem:[%s857 + $0x2c] sm:$0xf]
      %v870 = vld [vmem:[%s857 + $0x30] sm:$0xf]
      %v871 = vld [vmem:[%s857 + $0x34] sm:$0xf]
      %v872 = vld [vmem:[%s857 + $0x38] sm:$0xf]
      %v873 = vld [vmem:[%s857 + $0x3c] sm:$0xf]
      %v874 = vunpack.c.l.b16 %v804
      %v875 = vunpack.c.l.b16 %v807
      %v876 = vunpack.c.l.b16 %v811
      %v877 = vunpack.c.l.b16 %v814
      %v878 = vunpack.c.l.b16 %v818
      %v879 = vunpack.c.l.b16 %v821
      %v880 = vunpack.c.l.b16 %v825
      %v881 = vunpack.c.l.b16 %v828
      %v882 = vunpack.c.l.b16 %v832
      %v883 = vunpack.c.l.b16 %v835
      %v884 = vunpack.c.l.b16 %v839
      %v885 = vunpack.c.l.b16 %v842
      %v886 = vunpack.c.l.b16 %v846
      %v887 = vunpack.c.l.b16 %v849
      %v888 = vunpack.c.l.b16 %v853
      %v889 = vunpack.c.l.b16 %v856
      %v890 = vpack.c.b16 %v875, %v874
      %v891 = vpack.c.b16 %v877, %v876
      %v892 = vpack.c.b16 %v879, %v878
      %v893 = vpack.c.b16 %v881, %v880
      %v894 = vpack.c.b16 %v883, %v882
      %v895 = vpack.c.b16 %v885, %v884
      %v896 = vpack.c.b16 %v887, %v886
      %v897 = vpack.c.b16 %v889, %v888
      %v922 = vunpack.c.l.b16 %v858
      %v923 = vunpack.c.l.b16 %v859
      %v924 = vunpack.c.l.b16 %v860
      %v925 = vunpack.c.l.b16 %v861
      %v926 = vunpack.c.l.b16 %v862
      %v927 = vunpack.c.l.b16 %v863
      %v928 = vunpack.c.l.b16 %v864
      %v929 = vunpack.c.l.b16 %v865
      %v930 = vunpack.c.l.b16 %v866
      %v931 = vunpack.c.l.b16 %v867
      %v932 = vunpack.c.l.b16 %v868
      %v933 = vunpack.c.l.b16 %v869
      %v934 = vunpack.c.l.b16 %v870
      %v935 = vunpack.c.l.b16 %v871
      %v936 = vunpack.c.l.b16 %v872
      %v937 = vunpack.c.l.b16 %v873
      %v938 = vpack.c.b16 %v923, %v922
      %v939 = vpack.c.b16 %v925, %v924
      %v940 = vpack.c.b16 %v927, %v926
      %v941 = vpack.c.b16 %v929, %v928
      %v942 = vpack.c.b16 %v931, %v930
      %v943 = vpack.c.b16 %v933, %v932
      %v944 = vpack.c.b16 %v935, %v934
      %v945 = vpack.c.b16 %v937, %v936
      %954 = vmatpush.bf16.msra.mxu0 %v945
      %955 = vmatpush.bf16.msra.mxu0 %v944
      %956 = vmatpush.bf16.msra.mxu0 %v943
      %957 = vmatpush.bf16.msra.mxu0 %v942
      %958 = vmatpush.bf16.msra.mxu0 %v941
      %959 = vmatpush.bf16.msra.mxu0 %v940
      %960 = vmatpush.bf16.msra.mxu0 %v939
      %961 = vmatpush.bf16.msra.mxu0 %v938
      %962 = vmatmul.bf16.gmra.mxu0 %v890
      %v963 = vpop.f32.mrf.mxu0
      %v964 = vadd.f32 0.0, %v963
      %v965 = vpop.f32.mrf.mxu0
      %v966 = vadd.f32 0.0, %v965
      %967 = vmatmul.bf16.gmra.mxu0 %v891
      %v968 = vpop.f32.mrf.mxu0
      %v969 = vadd.f32 0.0, %v968
      %v970 = vpop.f32.mrf.mxu0
      %v971 = vadd.f32 0.0, %v970
      %972 = vmatmul.bf16.gmra.mxu0 %v892
      %v973 = vpop.f32.mrf.mxu0
      %v974 = vadd.f32 0.0, %v973
      %v975 = vpop.f32.mrf.mxu0
      %v976 = vadd.f32 0.0, %v975
      %977 = vmatmul.bf16.gmra.mxu0 %v893
      %v978 = vpop.f32.mrf.mxu0
      %v979 = vadd.f32 0.0, %v978
      %v980 = vpop.f32.mrf.mxu0
      %v981 = vadd.f32 0.0, %v980
      %982 = vmatmul.bf16.gmra.mxu0 %v894
      %v983 = vpop.f32.mrf.mxu0
      %v984 = vadd.f32 0.0, %v983
      %v985 = vpop.f32.mrf.mxu0
      %v986 = vadd.f32 0.0, %v985
      %987 = vmatmul.bf16.gmra.mxu0 %v895
      %v988 = vpop.f32.mrf.mxu0
      %v989 = vadd.f32 0.0, %v988
      %v990 = vpop.f32.mrf.mxu0
      %v991 = vadd.f32 0.0, %v990
      %992 = vmatmul.bf16.gmra.mxu0 %v896
      %v993 = vpop.f32.mrf.mxu0
      %v994 = vadd.f32 0.0, %v993
      %v995 = vpop.f32.mrf.mxu0
      %v996 = vadd.f32 0.0, %v995
      %997 = vmatmul.bf16.gmra.mxu0 %v897
      %v998 = vpop.f32.mrf.mxu0
      %v999 = vadd.f32 0.0, %v998
      %v1000 = vpop.f32.mrf.mxu0
      %v1001 = vadd.f32 0.0, %v1000
      %1002 = vdwg.mxu0
      %v1003 = vadd.f32 %v751, %v964
      %v1004 = vadd.f32 %v753, %v966
      %v1005 = vadd.f32 %v756, %v969
      %v1006 = vadd.f32 %v758, %v971
      %v1007 = vadd.f32 %v761, %v974
      %v1008 = vadd.f32 %v763, %v976
      %v1009 = vadd.f32 %v766, %v979
      %v1010 = vadd.f32 %v768, %v981
      %v1011 = vadd.f32 %v771, %v984
      %v1012 = vadd.f32 %v773, %v986
      %v1013 = vadd.f32 %v776, %v989
      %v1014 = vadd.f32 %v778, %v991
      %v1015 = vadd.f32 %v781, %v994
      %v1016 = vadd.f32 %v783, %v996
      %v1017 = vadd.f32 %v786, %v999
      %v1018 = vadd.f32 %v788, %v1001
      %s1019 = scalar_lea.vmem %s1, 192
      %v1020 = vld [vmem:[%s1019] sm:$0xf]
      %v1021 = vld [vmem:[%s1019 + $0x4] sm:$0xf]
      %v1022 = vld [vmem:[%s1019 + $0x8] sm:$0xf]
      %v1023 = vld [vmem:[%s1019 + $0xc] sm:$0xf]
      %v1024 = vld [vmem:[%s1019 + $0x10] sm:$0xf]
      %v1025 = vld [vmem:[%s1019 + $0x14] sm:$0xf]
      %v1026 = vld [vmem:[%s1019 + $0x18] sm:$0xf]
      %v1027 = vld [vmem:[%s1019 + $0x1c] sm:$0xf]
      %v1028 = vld [vmem:[%s1019 + $0x20] sm:$0xf]
      %v1029 = vld [vmem:[%s1019 + $0x24] sm:$0xf]
      %v1030 = vld [vmem:[%s1019 + $0x28] sm:$0xf]
      %v1031 = vld [vmem:[%s1019 + $0x2c] sm:$0xf]
      %v1032 = vld [vmem:[%s1019 + $0x30] sm:$0xf]
      %v1033 = vld [vmem:[%s1019 + $0x34] sm:$0xf]
      %v1034 = vld [vmem:[%s1019 + $0x38] sm:$0xf]
      %v1035 = vld [vmem:[%s1019 + $0x3c] sm:$0xf]
      %v1038 = vunpack.c.l.b16 %v282
      %v1039 = vunpack.c.l.b16 %v283
      %v1040 = vpack.c.b16 %v1039, %v1038
      %v1058 = vunpack.c.l.b16 %v1020
      %v1059 = vunpack.c.l.b16 %v1021
      %v1060 = vunpack.c.l.b16 %v1022
      %v1061 = vunpack.c.l.b16 %v1023
      %v1062 = vunpack.c.l.b16 %v1024
      %v1063 = vunpack.c.l.b16 %v1025
      %v1064 = vunpack.c.l.b16 %v1026
      %v1065 = vunpack.c.l.b16 %v1027
      %v1066 = vunpack.c.l.b16 %v1028
      %v1067 = vunpack.c.l.b16 %v1029
      %v1068 = vunpack.c.l.b16 %v1030
      %v1069 = vunpack.c.l.b16 %v1031
      %v1070 = vunpack.c.l.b16 %v1032
      %v1071 = vunpack.c.l.b16 %v1033
      %v1072 = vunpack.c.l.b16 %v1034
      %v1073 = vunpack.c.l.b16 %v1035
      %v1074 = vpack.c.b16 %v1059, %v1058
      %v1075 = vpack.c.b16 %v1061, %v1060
      %v1076 = vpack.c.b16 %v1063, %v1062
      %v1077 = vpack.c.b16 %v1065, %v1064
      %v1078 = vpack.c.b16 %v1067, %v1066
      %v1079 = vpack.c.b16 %v1069, %v1068
      %v1080 = vpack.c.b16 %v1071, %v1070
      %v1081 = vpack.c.b16 %v1073, %v1072
      %1090 = vmatpush.bf16.msra.mxu0 %v1081
      %1091 = vmatpush.bf16.msra.mxu0 %v1080
      %1092 = vmatpush.bf16.msra.mxu0 %v1079
      %1093 = vmatpush.bf16.msra.mxu0 %v1078
      %1094 = vmatpush.bf16.msra.mxu0 %v1077
      %1095 = vmatpush.bf16.msra.mxu0 %v1076
      %1096 = vmatpush.bf16.msra.mxu0 %v1075
      %1097 = vmatpush.bf16.msra.mxu0 %v1074
      %1098 = vmatmul.bf16.gmra.mxu0 %v678
      %v1099 = vpop.f32.mrf.mxu0
      %v1100 = vadd.f32 0.0, %v1099
      %v1101 = vpop.f32.mrf.mxu0
      %v1102 = vadd.f32 0.0, %v1101
      %1103 = vmatmul.bf16.gmra.mxu0 %v679
      %v1104 = vpop.f32.mrf.mxu0
      %v1105 = vadd.f32 0.0, %v1104
      %v1106 = vpop.f32.mrf.mxu0
      %v1107 = vadd.f32 0.0, %v1106
      %1108 = vmatmul.bf16.gmra.mxu0 %v680
      %v1109 = vpop.f32.mrf.mxu0
      %v1110 = vadd.f32 0.0, %v1109
      %v1111 = vpop.f32.mrf.mxu0
      %v1112 = vadd.f32 0.0, %v1111
      %1113 = vmatmul.bf16.gmra.mxu0 %v681
      %v1114 = vpop.f32.mrf.mxu0
      %v1115 = vadd.f32 0.0, %v1114
      %v1116 = vpop.f32.mrf.mxu0
      %v1117 = vadd.f32 0.0, %v1116
      %1118 = vmatmul.bf16.gmra.mxu0 %v682
      %v1119 = vpop.f32.mrf.mxu0
      %v1120 = vadd.f32 0.0, %v1119
      %v1121 = vpop.f32.mrf.mxu0
      %v1122 = vadd.f32 0.0, %v1121
      %1123 = vmatmul.bf16.gmra.mxu0 %v683
      %v1124 = vpop.f32.mrf.mxu0
      %v1125 = vadd.f32 0.0, %v1124
      %v1126 = vpop.f32.mrf.mxu0
      %v1127 = vadd.f32 0.0, %v1126
      %1128 = vmatmul.bf16.gmra.mxu0 %v684
      %v1129 = vpop.f32.mrf.mxu0
      %v1130 = vadd.f32 0.0, %v1129
      %v1131 = vpop.f32.mrf.mxu0
      %v1132 = vadd.f32 0.0, %v1131
      %1133 = vmatmul.bf16.gmra.mxu0 %v1040
      %v1134 = vpop.f32.mrf.mxu0
      %v1135 = vadd.f32 0.0, %v1134
      %v1136 = vpop.f32.mrf.mxu0
      %v1137 = vadd.f32 0.0, %v1136
      %1138 = vdwg.mxu0
      %v1139 = vadd.f32 %v1003, %v1100
      %v1140 = vadd.f32 %v1004, %v1102
      %v1141 = vadd.f32 %v1005, %v1105
      %v1142 = vadd.f32 %v1006, %v1107
      %v1143 = vadd.f32 %v1007, %v1110
      %v1144 = vadd.f32 %v1008, %v1112
      %v1145 = vadd.f32 %v1009, %v1115
      %v1146 = vadd.f32 %v1010, %v1117
      %v1147 = vadd.f32 %v1011, %v1120
      %v1148 = vadd.f32 %v1012, %v1122
      %v1149 = vadd.f32 %v1013, %v1125
      %v1150 = vadd.f32 %v1014, %v1127
      %v1151 = vadd.f32 %v1015, %v1130
      %v1152 = vadd.f32 %v1016, %v1132
      %v1153 = vadd.f32 %v1017, %v1135
      %v1154 = vadd.f32 %v1018, %v1137
      %v1156 = vshrl.u32 %v282, 16
      %v1158 = vrot.slane %v1156, 4
      %v1159 = vshll.u32 %v282, 16
      %v1161 = vrot.slane %v1159, 5
      %v1162 = vor.u32 %v1158, %v1161
      %v1163 = vrot.slane %v1162, 4
      %v1165 = vshll.u32 %v283, 16
      %v1167 = vrot.slane %v1165, 5
      %v1168 = vsel %vm306, %v1163, %v1167
      %v1169 = vshrl.u32 %v283, 16
      %v1171 = vrot.slane %v1169, 4
      %v1172 = vor.u32 %v1171, %v1167
      %v1173 = vrot.slane %v1172, 4
      %v1175 = vshll.u32 %v284, 16
      %v1177 = vrot.slane %v1175, 5
      %v1178 = vsel %vm306, %v1173, %v1177
      %s1179 = scalar_lea.vmem %s1, 256
      %v1180 = vld [vmem:[%s1179] sm:$0xf]
      %v1181 = vld [vmem:[%s1179 + $0x4] sm:$0xf]
      %v1182 = vld [vmem:[%s1179 + $0x8] sm:$0xf]
      %v1183 = vld [vmem:[%s1179 + $0xc] sm:$0xf]
      %v1184 = vld [vmem:[%s1179 + $0x10] sm:$0xf]
      %v1185 = vld [vmem:[%s1179 + $0x14] sm:$0xf]
      %v1186 = vld [vmem:[%s1179 + $0x18] sm:$0xf]
      %v1187 = vld [vmem:[%s1179 + $0x1c] sm:$0xf]
      %v1188 = vld [vmem:[%s1179 + $0x20] sm:$0xf]
      %v1189 = vld [vmem:[%s1179 + $0x24] sm:$0xf]
      %v1190 = vld [vmem:[%s1179 + $0x28] sm:$0xf]
      %v1191 = vld [vmem:[%s1179 + $0x2c] sm:$0xf]
      %v1192 = vld [vmem:[%s1179 + $0x30] sm:$0xf]
      %v1193 = vld [vmem:[%s1179 + $0x34] sm:$0xf]
      %v1194 = vld [vmem:[%s1179 + $0x38] sm:$0xf]
      %v1195 = vld [vmem:[%s1179 + $0x3c] sm:$0xf]
      %v1196 = vunpack.c.l.b16 %v1168
      %v1197 = vunpack.c.l.b16 %v1178
      %v1198 = vpack.c.b16 %v1197, %v1196
      %v1216 = vunpack.c.l.b16 %v1180
      %v1217 = vunpack.c.l.b16 %v1181
      %v1218 = vunpack.c.l.b16 %v1182
      %v1219 = vunpack.c.l.b16 %v1183
      %v1220 = vunpack.c.l.b16 %v1184
      %v1221 = vunpack.c.l.b16 %v1185
      %v1222 = vunpack.c.l.b16 %v1186
      %v1223 = vunpack.c.l.b16 %v1187
      %v1224 = vunpack.c.l.b16 %v1188
      %v1225 = vunpack.c.l.b16 %v1189
      %v1226 = vunpack.c.l.b16 %v1190
      %v1227 = vunpack.c.l.b16 %v1191
      %v1228 = vunpack.c.l.b16 %v1192
      %v1229 = vunpack.c.l.b16 %v1193
      %v1230 = vunpack.c.l.b16 %v1194
      %v1231 = vunpack.c.l.b16 %v1195
      %v1232 = vpack.c.b16 %v1217, %v1216
      %v1233 = vpack.c.b16 %v1219, %v1218
      %v1234 = vpack.c.b16 %v1221, %v1220
      %v1235 = vpack.c.b16 %v1223, %v1222
      %v1236 = vpack.c.b16 %v1225, %v1224
      %v1237 = vpack.c.b16 %v1227, %v1226
      %v1238 = vpack.c.b16 %v1229, %v1228
      %v1239 = vpack.c.b16 %v1231, %v1230
      %1248 = vmatpush.bf16.msra.mxu0 %v1239
      %1249 = vmatpush.bf16.msra.mxu0 %v1238
      %1250 = vmatpush.bf16.msra.mxu0 %v1237
      %1251 = vmatpush.bf16.msra.mxu0 %v1236
      %1252 = vmatpush.bf16.msra.mxu0 %v1235
      %1253 = vmatpush.bf16.msra.mxu0 %v1234
      %1254 = vmatpush.bf16.msra.mxu0 %v1233
      %1255 = vmatpush.bf16.msra.mxu0 %v1232
      %1256 = vmatmul.bf16.gmra.mxu0 %v533
      %v1257 = vpop.f32.mrf.mxu0
      %v1258 = vadd.f32 0.0, %v1257
      %v1259 = vpop.f32.mrf.mxu0
      %v1260 = vadd.f32 0.0, %v1259
      %1261 = vmatmul.bf16.gmra.mxu0 %v534
      %v1262 = vpop.f32.mrf.mxu0
      %v1263 = vadd.f32 0.0, %v1262
      %v1264 = vpop.f32.mrf.mxu0
      %v1265 = vadd.f32 0.0, %v1264
      %1266 = vmatmul.bf16.gmra.mxu0 %v535
      %v1267 = vpop.f32.mrf.mxu0
      %v1268 = vadd.f32 0.0, %v1267
      %v1269 = vpop.f32.mrf.mxu0
      %v1270 = vadd.f32 0.0, %v1269
      %1271 = vmatmul.bf16.gmra.mxu0 %v536
      %v1272 = vpop.f32.mrf.mxu0
      %v1273 = vadd.f32 0.0, %v1272
      %v1274 = vpop.f32.mrf.mxu0
      %v1275 = vadd.f32 0.0, %v1274
      %1276 = vmatmul.bf16.gmra.mxu0 %v537
      %v1277 = vpop.f32.mrf.mxu0
      %v1278 = vadd.f32 0.0, %v1277
      %v1279 = vpop.f32.mrf.mxu0
      %v1280 = vadd.f32 0.0, %v1279
      %1281 = vmatmul.bf16.gmra.mxu0 %v538
      %v1282 = vpop.f32.mrf.mxu0
      %v1283 = vadd.f32 0.0, %v1282
      %v1284 = vpop.f32.mrf.mxu0
      %v1285 = vadd.f32 0.0, %v1284
      %1286 = vmatmul.bf16.gmra.mxu0 %v539
      %v1287 = vpop.f32.mrf.mxu0
      %v1288 = vadd.f32 0.0, %v1287
      %v1289 = vpop.f32.mrf.mxu0
      %v1290 = vadd.f32 0.0, %v1289
      %1291 = vmatmul.bf16.gmra.mxu0 %v1198
      %v1292 = vpop.f32.mrf.mxu0
      %v1293 = vadd.f32 0.0, %v1292
      %v1294 = vpop.f32.mrf.mxu0
      %v1295 = vadd.f32 0.0, %v1294
      %1296 = vdwg.mxu0
      %v1297 = vadd.f32 %v1139, %v1258
      %v1298 = vadd.f32 %v1140, %v1260
      %v1299 = vadd.f32 %v1141, %v1263
      %v1300 = vadd.f32 %v1142, %v1265
      %v1301 = vadd.f32 %v1143, %v1268
      %v1302 = vadd.f32 %v1144, %v1270
      %v1303 = vadd.f32 %v1145, %v1273
      %v1304 = vadd.f32 %v1146, %v1275
      %v1305 = vadd.f32 %v1147, %v1278
      %v1306 = vadd.f32 %v1148, %v1280
      %v1307 = vadd.f32 %v1149, %v1283
      %v1308 = vadd.f32 %v1150, %v1285
      %v1309 = vadd.f32 %v1151, %v1288
      %v1310 = vadd.f32 %v1152, %v1290
      %v1311 = vadd.f32 %v1153, %v1293
      %v1312 = vadd.f32 %v1154, %v1295
      %v1314 = vrot.slane %v282, 5
      %v1315 = vrot.slane %v1314, 4
      %v1316 = vrot.slane %v283, 5
      %v1317 = vsel %vm800, %v1315, %v1316
      %v1318 = vrot.slane %v1316, 4
      %v1319 = vrot.slane %v284, 5
      %v1320 = vsel %vm800, %v1318, %v1319
      %s1321 = scalar_lea.vmem %s1, 320
      %v1322 = vld [vmem:[%s1321] sm:$0xf]
      %v1323 = vld [vmem:[%s1321 + $0x4] sm:$0xf]
      %v1324 = vld [vmem:[%s1321 + $0x8] sm:$0xf]
      %v1325 = vld [vmem:[%s1321 + $0xc] sm:$0xf]
      %v1326 = vld [vmem:[%s1321 + $0x10] sm:$0xf]
      %v1327 = vld [vmem:[%s1321 + $0x14] sm:$0xf]
      %v1328 = vld [vmem:[%s1321 + $0x18] sm:$0xf]
      %v1329 = vld [vmem:[%s1321 + $0x1c] sm:$0xf]
      %v1330 = vld [vmem:[%s1321 + $0x20] sm:$0xf]
      %v1331 = vld [vmem:[%s1321 + $0x24] sm:$0xf]
      %v1332 = vld [vmem:[%s1321 + $0x28] sm:$0xf]
      %v1333 = vld [vmem:[%s1321 + $0x2c] sm:$0xf]
      %v1334 = vld [vmem:[%s1321 + $0x30] sm:$0xf]
      %v1335 = vld [vmem:[%s1321 + $0x34] sm:$0xf]
      %v1336 = vld [vmem:[%s1321 + $0x38] sm:$0xf]
      %v1337 = vld [vmem:[%s1321 + $0x3c] sm:$0xf]
      %v1338 = vunpack.c.l.b16 %v1317
      %v1339 = vunpack.c.l.b16 %v1320
      %v1340 = vpack.c.b16 %v1339, %v1338
      %v1358 = vunpack.c.l.b16 %v1322
      %v1359 = vunpack.c.l.b16 %v1323
      %v1360 = vunpack.c.l.b16 %v1324
      %v1361 = vunpack.c.l.b16 %v1325
      %v1362 = vunpack.c.l.b16 %v1326
      %v1363 = vunpack.c.l.b16 %v1327
      %v1364 = vunpack.c.l.b16 %v1328
      %v1365 = vunpack.c.l.b16 %v1329
      %v1366 = vunpack.c.l.b16 %v1330
      %v1367 = vunpack.c.l.b16 %v1331
      %v1368 = vunpack.c.l.b16 %v1332
      %v1369 = vunpack.c.l.b16 %v1333
      %v1370 = vunpack.c.l.b16 %v1334
      %v1371 = vunpack.c.l.b16 %v1335
      %v1372 = vunpack.c.l.b16 %v1336
      %v1373 = vunpack.c.l.b16 %v1337
      %v1374 = vpack.c.b16 %v1359, %v1358
      %v1375 = vpack.c.b16 %v1361, %v1360
      %v1376 = vpack.c.b16 %v1363, %v1362
      %v1377 = vpack.c.b16 %v1365, %v1364
      %v1378 = vpack.c.b16 %v1367, %v1366
      %v1379 = vpack.c.b16 %v1369, %v1368
      %v1380 = vpack.c.b16 %v1371, %v1370
      %v1381 = vpack.c.b16 %v1373, %v1372
      %1390 = vmatpush.bf16.msra.mxu0 %v1381
      %1391 = vmatpush.bf16.msra.mxu0 %v1380
      %1392 = vmatpush.bf16.msra.mxu0 %v1379
      %1393 = vmatpush.bf16.msra.mxu0 %v1378
      %1394 = vmatpush.bf16.msra.mxu0 %v1377
      %1395 = vmatpush.bf16.msra.mxu0 %v1376
      %1396 = vmatpush.bf16.msra.mxu0 %v1375
      %1397 = vmatpush.bf16.msra.mxu0 %v1374
      %1398 = vmatmul.bf16.gmra.mxu0 %v891
      %v1399 = vpop.f32.mrf.mxu0
      %v1400 = vadd.f32 0.0, %v1399
      %v1401 = vpop.f32.mrf.mxu0
      %v1402 = vadd.f32 0.0, %v1401
      %1403 = vmatmul.bf16.gmra.mxu0 %v892
      %v1404 = vpop.f32.mrf.mxu0
      %v1405 = vadd.f32 0.0, %v1404
      %v1406 = vpop.f32.mrf.mxu0
      %v1407 = vadd.f32 0.0, %v1406
      %1408 = vmatmul.bf16.gmra.mxu0 %v893
      %v1409 = vpop.f32.mrf.mxu0
      %v1410 = vadd.f32 0.0, %v1409
      %v1411 = vpop.f32.mrf.mxu0
      %v1412 = vadd.f32 0.0, %v1411
      %1413 = vmatmul.bf16.gmra.mxu0 %v894
      %v1414 = vpop.f32.mrf.mxu0
      %v1415 = vadd.f32 0.0, %v1414
      %v1416 = vpop.f32.mrf.mxu0
      %v1417 = vadd.f32 0.0, %v1416
      %1418 = vmatmul.bf16.gmra.mxu0 %v895
      %v1419 = vpop.f32.mrf.mxu0
      %v1420 = vadd.f32 0.0, %v1419
      %v1421 = vpop.f32.mrf.mxu0
      %v1422 = vadd.f32 0.0, %v1421
      %1423 = vmatmul.bf16.gmra.mxu0 %v896
      %v1424 = vpop.f32.mrf.mxu0
      %v1425 = vadd.f32 0.0, %v1424
      %v1426 = vpop.f32.mrf.mxu0
      %v1427 = vadd.f32 0.0, %v1426
      %1428 = vmatmul.bf16.gmra.mxu0 %v897
      %v1429 = vpop.f32.mrf.mxu0
      %v1430 = vadd.f32 0.0, %v1429
      %v1431 = vpop.f32.mrf.mxu0
      %v1432 = vadd.f32 0.0, %v1431
      %1433 = vmatmul.bf16.gmra.mxu0 %v1340
      %v1434 = vpop.f32.mrf.mxu0
      %v1435 = vadd.f32 0.0, %v1434
      %v1436 = vpop.f32.mrf.mxu0
      %v1437 = vadd.f32 0.0, %v1436
      %1438 = vdwg.mxu0
      %v1439 = vadd.f32 %v1297, %v1400
      %v1440 = vadd.f32 %v1298, %v1402
      %v1441 = vadd.f32 %v1299, %v1405
      %v1442 = vadd.f32 %v1300, %v1407
      %v1443 = vadd.f32 %v1301, %v1410
      %v1444 = vadd.f32 %v1302, %v1412
      %v1445 = vadd.f32 %v1303, %v1415
      %v1446 = vadd.f32 %v1304, %v1417
      %v1447 = vadd.f32 %v1305, %v1420
      %v1448 = vadd.f32 %v1306, %v1422
      %v1449 = vadd.f32 %v1307, %v1425
      %v1450 = vadd.f32 %v1308, %v1427
      %v1451 = vadd.f32 %v1309, %v1430
      %v1452 = vadd.f32 %v1310, %v1432
      %v1453 = vadd.f32 %v1311, %v1435
      %v1454 = vadd.f32 %v1312, %v1437
      %s1455 = scalar_lea.vmem %s1, 384
      %v1456 = vld [vmem:[%s1455] sm:$0xf]
      %v1457 = vld [vmem:[%s1455 + $0x4] sm:$0xf]
      %v1458 = vld [vmem:[%s1455 + $0x8] sm:$0xf]
      %v1459 = vld [vmem:[%s1455 + $0xc] sm:$0xf]
      %v1460 = vld [vmem:[%s1455 + $0x10] sm:$0xf]
      %v1461 = vld [vmem:[%s1455 + $0x14] sm:$0xf]
      %v1462 = vld [vmem:[%s1455 + $0x18] sm:$0xf]
      %v1463 = vld [vmem:[%s1455 + $0x1c] sm:$0xf]
      %v1464 = vld [vmem:[%s1455 + $0x20] sm:$0xf]
      %v1465 = vld [vmem:[%s1455 + $0x24] sm:$0xf]
      %v1466 = vld [vmem:[%s1455 + $0x28] sm:$0xf]
      %v1467 = vld [vmem:[%s1455 + $0x2c] sm:$0xf]
      %v1468 = vld [vmem:[%s1455 + $0x30] sm:$0xf]
      %v1469 = vld [vmem:[%s1455 + $0x34] sm:$0xf]
      %v1470 = vld [vmem:[%s1455 + $0x38] sm:$0xf]
      %v1471 = vld [vmem:[%s1455 + $0x3c] sm:$0xf]
      %v1474 = vunpack.c.l.b16 %v285
      %v1475 = vunpack.c.l.b16 %v286
      %v1476 = vpack.c.b16 %v1475, %v1474
      %v1494 = vunpack.c.l.b16 %v1456
      %v1495 = vunpack.c.l.b16 %v1457
      %v1496 = vunpack.c.l.b16 %v1458
      %v1497 = vunpack.c.l.b16 %v1459
      %v1498 = vunpack.c.l.b16 %v1460
      %v1499 = vunpack.c.l.b16 %v1461
      %v1500 = vunpack.c.l.b16 %v1462
      %v1501 = vunpack.c.l.b16 %v1463
      %v1502 = vunpack.c.l.b16 %v1464
      %v1503 = vunpack.c.l.b16 %v1465
      %v1504 = vunpack.c.l.b16 %v1466
      %v1505 = vunpack.c.l.b16 %v1467
      %v1506 = vunpack.c.l.b16 %v1468
      %v1507 = vunpack.c.l.b16 %v1469
      %v1508 = vunpack.c.l.b16 %v1470
      %v1509 = vunpack.c.l.b16 %v1471
      %v1510 = vpack.c.b16 %v1495, %v1494
      %v1511 = vpack.c.b16 %v1497, %v1496
      %v1512 = vpack.c.b16 %v1499, %v1498
      %v1513 = vpack.c.b16 %v1501, %v1500
      %v1514 = vpack.c.b16 %v1503, %v1502
      %v1515 = vpack.c.b16 %v1505, %v1504
      %v1516 = vpack.c.b16 %v1507, %v1506
      %v1517 = vpack.c.b16 %v1509, %v1508
      %1526 = vmatpush.bf16.msra.mxu0 %v1517
      %1527 = vmatpush.bf16.msra.mxu0 %v1516
      %1528 = vmatpush.bf16.msra.mxu0 %v1515
      %1529 = vmatpush.bf16.msra.mxu0 %v1514
      %1530 = vmatpush.bf16.msra.mxu0 %v1513
      %1531 = vmatpush.bf16.msra.mxu0 %v1512
      %1532 = vmatpush.bf16.msra.mxu0 %v1511
      %1533 = vmatpush.bf16.msra.mxu0 %v1510
      %1534 = vmatmul.bf16.gmra.mxu0 %v679
      %v1535 = vpop.f32.mrf.mxu0
      %v1536 = vadd.f32 0.0, %v1535
      %v1537 = vpop.f32.mrf.mxu0
      %v1538 = vadd.f32 0.0, %v1537
      %1539 = vmatmul.bf16.gmra.mxu0 %v680
      %v1540 = vpop.f32.mrf.mxu0
      %v1541 = vadd.f32 0.0, %v1540
      %v1542 = vpop.f32.mrf.mxu0
      %v1543 = vadd.f32 0.0, %v1542
      %1544 = vmatmul.bf16.gmra.mxu0 %v681
      %v1545 = vpop.f32.mrf.mxu0
      %v1546 = vadd.f32 0.0, %v1545
      %v1547 = vpop.f32.mrf.mxu0
      %v1548 = vadd.f32 0.0, %v1547
      %1549 = vmatmul.bf16.gmra.mxu0 %v682
      %v1550 = vpop.f32.mrf.mxu0
      %v1551 = vadd.f32 0.0, %v1550
      %v1552 = vpop.f32.mrf.mxu0
      %v1553 = vadd.f32 0.0, %v1552
      %1554 = vmatmul.bf16.gmra.mxu0 %v683
      %v1555 = vpop.f32.mrf.mxu0
      %v1556 = vadd.f32 0.0, %v1555
      %v1557 = vpop.f32.mrf.mxu0
      %v1558 = vadd.f32 0.0, %v1557
      %1559 = vmatmul.bf16.gmra.mxu0 %v684
      %v1560 = vpop.f32.mrf.mxu0
      %v1561 = vadd.f32 0.0, %v1560
      %v1562 = vpop.f32.mrf.mxu0
      %v1563 = vadd.f32 0.0, %v1562
      %1564 = vmatmul.bf16.gmra.mxu0 %v1040
      %v1565 = vpop.f32.mrf.mxu0
      %v1566 = vadd.f32 0.0, %v1565
      %v1567 = vpop.f32.mrf.mxu0
      %v1568 = vadd.f32 0.0, %v1567
      %1569 = vmatmul.bf16.gmra.mxu0 %v1476
      %v1570 = vpop.f32.mrf.mxu0
      %v1571 = vadd.f32 0.0, %v1570
      %v1572 = vpop.f32.mrf.mxu0
      %v1573 = vadd.f32 0.0, %v1572
      %1574 = vdwg.mxu0
      %v1575 = vadd.f32 %v1439, %v1536
      %v1576 = vadd.f32 %v1440, %v1538
      %v1577 = vadd.f32 %v1441, %v1541
      %v1578 = vadd.f32 %v1442, %v1543
      %v1579 = vadd.f32 %v1443, %v1546
      %v1580 = vadd.f32 %v1444, %v1548
      %v1581 = vadd.f32 %v1445, %v1551
      %v1582 = vadd.f32 %v1446, %v1553
      %v1583 = vadd.f32 %v1447, %v1556
      %v1584 = vadd.f32 %v1448, %v1558
      %v1585 = vadd.f32 %v1449, %v1561
      %v1586 = vadd.f32 %v1450, %v1563
      %v1587 = vadd.f32 %v1451, %v1566
      %v1588 = vadd.f32 %v1452, %v1568
      %v1589 = vadd.f32 %v1453, %v1571
      %v1590 = vadd.f32 %v1454, %v1573
      %v1592 = vshrl.u32 %v285, 16
      %v1594 = vrot.slane %v1592, 4
      %v1595 = vshll.u32 %v285, 16
      %v1597 = vrot.slane %v1595, 5
      %v1598 = vor.u32 %v1594, %v1597
      %v1599 = vrot.slane %v1598, 4
      %v1601 = vshll.u32 %v286, 16
      %v1603 = vrot.slane %v1601, 5
      %v1604 = vsel %vm306, %v1599, %v1603
      %v1605 = vshrl.u32 %v286, 16
      %v1607 = vrot.slane %v1605, 4
      %v1608 = vor.u32 %v1607, %v1603
      %v1609 = vrot.slane %v1608, 4
      %v1611 = vshll.u32 %v287, 16
      %v1613 = vrot.slane %v1611, 5
      %v1614 = vsel %vm306, %v1609, %v1613
      %s1615 = scalar_lea.vmem %s1, 448
      %v1616 = vld [vmem:[%s1615] sm:$0xf]
      %v1617 = vld [vmem:[%s1615 + $0x4] sm:$0xf]
      %v1618 = vld [vmem:[%s1615 + $0x8] sm:$0xf]
      %v1619 = vld [vmem:[%s1615 + $0xc] sm:$0xf]
      %v1620 = vld [vmem:[%s1615 + $0x10] sm:$0xf]
      %v1621 = vld [vmem:[%s1615 + $0x14] sm:$0xf]
      %v1622 = vld [vmem:[%s1615 + $0x18] sm:$0xf]
      %v1623 = vld [vmem:[%s1615 + $0x1c] sm:$0xf]
      %v1624 = vld [vmem:[%s1615 + $0x20] sm:$0xf]
      %v1625 = vld [vmem:[%s1615 + $0x24] sm:$0xf]
      %v1626 = vld [vmem:[%s1615 + $0x28] sm:$0xf]
      %v1627 = vld [vmem:[%s1615 + $0x2c] sm:$0xf]
      %v1628 = vld [vmem:[%s1615 + $0x30] sm:$0xf]
      %v1629 = vld [vmem:[%s1615 + $0x34] sm:$0xf]
      %v1630 = vld [vmem:[%s1615 + $0x38] sm:$0xf]
      %v1631 = vld [vmem:[%s1615 + $0x3c] sm:$0xf]
      %v1632 = vunpack.c.l.b16 %v1604
      %v1633 = vunpack.c.l.b16 %v1614
      %v1634 = vpack.c.b16 %v1633, %v1632
      %v1652 = vunpack.c.l.b16 %v1616
      %v1653 = vunpack.c.l.b16 %v1617
      %v1654 = vunpack.c.l.b16 %v1618
      %v1655 = vunpack.c.l.b16 %v1619
      %v1656 = vunpack.c.l.b16 %v1620
      %v1657 = vunpack.c.l.b16 %v1621
      %v1658 = vunpack.c.l.b16 %v1622
      %v1659 = vunpack.c.l.b16 %v1623
      %v1660 = vunpack.c.l.b16 %v1624
      %v1661 = vunpack.c.l.b16 %v1625
      %v1662 = vunpack.c.l.b16 %v1626
      %v1663 = vunpack.c.l.b16 %v1627
      %v1664 = vunpack.c.l.b16 %v1628
      %v1665 = vunpack.c.l.b16 %v1629
      %v1666 = vunpack.c.l.b16 %v1630
      %v1667 = vunpack.c.l.b16 %v1631
      %v1668 = vpack.c.b16 %v1653, %v1652
      %v1669 = vpack.c.b16 %v1655, %v1654
      %v1670 = vpack.c.b16 %v1657, %v1656
      %v1671 = vpack.c.b16 %v1659, %v1658
      %v1672 = vpack.c.b16 %v1661, %v1660
      %v1673 = vpack.c.b16 %v1663, %v1662
      %v1674 = vpack.c.b16 %v1665, %v1664
      %v1675 = vpack.c.b16 %v1667, %v1666
      %1684 = vmatpush.bf16.msra.mxu0 %v1675
      %1685 = vmatpush.bf16.msra.mxu0 %v1674
      %1686 = vmatpush.bf16.msra.mxu0 %v1673
      %1687 = vmatpush.bf16.msra.mxu0 %v1672
      %1688 = vmatpush.bf16.msra.mxu0 %v1671
      %1689 = vmatpush.bf16.msra.mxu0 %v1670
      %1690 = vmatpush.bf16.msra.mxu0 %v1669
      %1691 = vmatpush.bf16.msra.mxu0 %v1668
      %1692 = vmatmul.bf16.gmra.mxu0 %v534
      %v1693 = vpop.f32.mrf.mxu0
      %v1694 = vadd.f32 0.0, %v1693
      %v1695 = vpop.f32.mrf.mxu0
      %v1696 = vadd.f32 0.0, %v1695
      %1697 = vmatmul.bf16.gmra.mxu0 %v535
      %v1698 = vpop.f32.mrf.mxu0
      %v1699 = vadd.f32 0.0, %v1698
      %v1700 = vpop.f32.mrf.mxu0
      %v1701 = vadd.f32 0.0, %v1700
      %1702 = vmatmul.bf16.gmra.mxu0 %v536
      %v1703 = vpop.f32.mrf.mxu0
      %v1704 = vadd.f32 0.0, %v1703
      %v1705 = vpop.f32.mrf.mxu0
      %v1706 = vadd.f32 0.0, %v1705
      %1707 = vmatmul.bf16.gmra.mxu0 %v537
      %v1708 = vpop.f32.mrf.mxu0
      %v1709 = vadd.f32 0.0, %v1708
      %v1710 = vpop.f32.mrf.mxu0
      %v1711 = vadd.f32 0.0, %v1710
      %1712 = vmatmul.bf16.gmra.mxu0 %v538
      %v1713 = vpop.f32.mrf.mxu0
      %v1714 = vadd.f32 0.0, %v1713
      %v1715 = vpop.f32.mrf.mxu0
      %v1716 = vadd.f32 0.0, %v1715
      %1717 = vmatmul.bf16.gmra.mxu0 %v539
      %v1718 = vpop.f32.mrf.mxu0
      %v1719 = vadd.f32 0.0, %v1718
      %v1720 = vpop.f32.mrf.mxu0
      %v1721 = vadd.f32 0.0, %v1720
      %1722 = vmatmul.bf16.gmra.mxu0 %v1198
      %v1723 = vpop.f32.mrf.mxu0
      %v1724 = vadd.f32 0.0, %v1723
      %v1725 = vpop.f32.mrf.mxu0
      %v1726 = vadd.f32 0.0, %v1725
      %1727 = vmatmul.bf16.gmra.mxu0 %v1634
      %v1728 = vpop.f32.mrf.mxu0
      %v1729 = vadd.f32 0.0, %v1728
      %v1730 = vpop.f32.mrf.mxu0
      %v1731 = vadd.f32 0.0, %v1730
      %1732 = vdwg.mxu0
      %v1733 = vadd.f32 %v1575, %v1694
      %v1734 = vadd.f32 %v1576, %v1696
      %v1735 = vadd.f32 %v1577, %v1699
      %v1736 = vadd.f32 %v1578, %v1701
      %v1737 = vadd.f32 %v1579, %v1704
      %v1738 = vadd.f32 %v1580, %v1706
      %v1739 = vadd.f32 %v1581, %v1709
      %v1740 = vadd.f32 %v1582, %v1711
      %v1741 = vadd.f32 %v1583, %v1714
      %v1742 = vadd.f32 %v1584, %v1716
      %v1743 = vadd.f32 %v1585, %v1719
      %v1744 = vadd.f32 %v1586, %v1721
      %v1745 = vadd.f32 %v1587, %v1724
      %v1746 = vadd.f32 %v1588, %v1726
      %v1747 = vadd.f32 %v1589, %v1729
      %v1748 = vadd.f32 %v1590, %v1731
      %v1750 = vrot.slane %v285, 5
      %v1751 = vrot.slane %v1750, 4
      %v1752 = vrot.slane %v286, 5
      %v1753 = vsel %vm800, %v1751, %v1752
      %v1754 = vrot.slane %v1752, 4
      %v1755 = vrot.slane %v287, 5
      %v1756 = vsel %vm800, %v1754, %v1755
      %s1757 = scalar_lea.vmem %s1, 512
      %v1758 = vld [vmem:[%s1757] sm:$0xf]
      %v1759 = vld [vmem:[%s1757 + $0x4] sm:$0xf]
      %v1760 = vld [vmem:[%s1757 + $0x8] sm:$0xf]
      %v1761 = vld [vmem:[%s1757 + $0xc] sm:$0xf]
      %v1762 = vld [vmem:[%s1757 + $0x10] sm:$0xf]
      %v1763 = vld [vmem:[%s1757 + $0x14] sm:$0xf]
      %v1764 = vld [vmem:[%s1757 + $0x18] sm:$0xf]
      %v1765 = vld [vmem:[%s1757 + $0x1c] sm:$0xf]
      %v1766 = vld [vmem:[%s1757 + $0x20] sm:$0xf]
      %v1767 = vld [vmem:[%s1757 + $0x24] sm:$0xf]
      %v1768 = vld [vmem:[%s1757 + $0x28] sm:$0xf]
      %v1769 = vld [vmem:[%s1757 + $0x2c] sm:$0xf]
      %v1770 = vld [vmem:[%s1757 + $0x30] sm:$0xf]
      %v1771 = vld [vmem:[%s1757 + $0x34] sm:$0xf]
      %v1772 = vld [vmem:[%s1757 + $0x38] sm:$0xf]
      %v1773 = vld [vmem:[%s1757 + $0x3c] sm:$0xf]
      %v1774 = vunpack.c.l.b16 %v1753
      %v1775 = vunpack.c.l.b16 %v1756
      %v1776 = vpack.c.b16 %v1775, %v1774
      %v1794 = vunpack.c.l.b16 %v1758
      %v1795 = vunpack.c.l.b16 %v1759
      %v1796 = vunpack.c.l.b16 %v1760
      %v1797 = vunpack.c.l.b16 %v1761
      %v1798 = vunpack.c.l.b16 %v1762
      %v1799 = vunpack.c.l.b16 %v1763
      %v1800 = vunpack.c.l.b16 %v1764
      %v1801 = vunpack.c.l.b16 %v1765
      %v1802 = vunpack.c.l.b16 %v1766
      %v1803 = vunpack.c.l.b16 %v1767
      %v1804 = vunpack.c.l.b16 %v1768
      %v1805 = vunpack.c.l.b16 %v1769
      %v1806 = vunpack.c.l.b16 %v1770
      %v1807 = vunpack.c.l.b16 %v1771
      %v1808 = vunpack.c.l.b16 %v1772
      %v1809 = vunpack.c.l.b16 %v1773
      %v1810 = vpack.c.b16 %v1795, %v1794
      %v1811 = vpack.c.b16 %v1797, %v1796
      %v1812 = vpack.c.b16 %v1799, %v1798
      %v1813 = vpack.c.b16 %v1801, %v1800
      %v1814 = vpack.c.b16 %v1803, %v1802
      %v1815 = vpack.c.b16 %v1805, %v1804
      %v1816 = vpack.c.b16 %v1807, %v1806
      %v1817 = vpack.c.b16 %v1809, %v1808
      %1826 = vmatpush.bf16.msra.mxu0 %v1817
      %1827 = vmatpush.bf16.msra.mxu0 %v1816
      %1828 = vmatpush.bf16.msra.mxu0 %v1815
      %1829 = vmatpush.bf16.msra.mxu0 %v1814
      %1830 = vmatpush.bf16.msra.mxu0 %v1813
      %1831 = vmatpush.bf16.msra.mxu0 %v1812
      %1832 = vmatpush.bf16.msra.mxu0 %v1811
      %1833 = vmatpush.bf16.msra.mxu0 %v1810
      %1834 = vmatmul.bf16.gmra.mxu0 %v892
      %v1835 = vpop.f32.mrf.mxu0
      %v1836 = vadd.f32 0.0, %v1835
      %v1837 = vpop.f32.mrf.mxu0
      %v1838 = vadd.f32 0.0, %v1837
      %1839 = vmatmul.bf16.gmra.mxu0 %v893
      %v1840 = vpop.f32.mrf.mxu0
      %v1841 = vadd.f32 0.0, %v1840
      %v1842 = vpop.f32.mrf.mxu0
      %v1843 = vadd.f32 0.0, %v1842
      %1844 = vmatmul.bf16.gmra.mxu0 %v894
      %v1845 = vpop.f32.mrf.mxu0
      %v1846 = vadd.f32 0.0, %v1845
      %v1847 = vpop.f32.mrf.mxu0
      %v1848 = vadd.f32 0.0, %v1847
      %1849 = vmatmul.bf16.gmra.mxu0 %v895
      %v1850 = vpop.f32.mrf.mxu0
      %v1851 = vadd.f32 0.0, %v1850
      %v1852 = vpop.f32.mrf.mxu0
      %v1853 = vadd.f32 0.0, %v1852
      %1854 = vmatmul.bf16.gmra.mxu0 %v896
      %v1855 = vpop.f32.mrf.mxu0
      %v1856 = vadd.f32 0.0, %v1855
      %v1857 = vpop.f32.mrf.mxu0
      %v1858 = vadd.f32 0.0, %v1857
      %1859 = vmatmul.bf16.gmra.mxu0 %v897
      %v1860 = vpop.f32.mrf.mxu0
      %v1861 = vadd.f32 0.0, %v1860
      %v1862 = vpop.f32.mrf.mxu0
      %v1863 = vadd.f32 0.0, %v1862
      %1864 = vmatmul.bf16.gmra.mxu0 %v1340
      %v1865 = vpop.f32.mrf.mxu0
      %v1866 = vadd.f32 0.0, %v1865
      %v1867 = vpop.f32.mrf.mxu0
      %v1868 = vadd.f32 0.0, %v1867
      %1869 = vmatmul.bf16.gmra.mxu0 %v1776
      %v1870 = vpop.f32.mrf.mxu0
      %v1871 = vadd.f32 0.0, %v1870
      %v1872 = vpop.f32.mrf.mxu0
      %v1873 = vadd.f32 0.0, %v1872
      %1874 = vdwg.mxu0
      %v1875 = vadd.f32 %v1733, %v1836
      %v1876 = vadd.f32 %v1734, %v1838
      %v1877 = vadd.f32 %v1735, %v1841
      %v1878 = vadd.f32 %v1736, %v1843
      %v1879 = vadd.f32 %v1737, %v1846
      %v1880 = vadd.f32 %v1738, %v1848
      %v1881 = vadd.f32 %v1739, %v1851
      %v1882 = vadd.f32 %v1740, %v1853
      %v1883 = vadd.f32 %v1741, %v1856
      %v1884 = vadd.f32 %v1742, %v1858
      %v1885 = vadd.f32 %v1743, %v1861
      %v1886 = vadd.f32 %v1744, %v1863
      %v1887 = vadd.f32 %v1745, %v1866
      %v1888 = vadd.f32 %v1746, %v1868
      %v1889 = vadd.f32 %v1747, %v1871
      %v1890 = vadd.f32 %v1748, %v1873
      %v1891 = vld [vmem:[%s2] sm:$0x1]
      %v1892 = vperm.slane %v1891, 0
      %v1893 = vadd.f32 %v1875, %v1892
      %v1894 = vadd.f32 %v1876, %v1892
      %v1895 = vadd.f32 %v1877, %v1892
      %v1896 = vadd.f32 %v1878, %v1892
      %v1897 = vadd.f32 %v1879, %v1892
      %v1898 = vadd.f32 %v1880, %v1892
      %v1899 = vadd.f32 %v1881, %v1892
      %v1900 = vadd.f32 %v1882, %v1892
      %v1901 = vadd.f32 %v1883, %v1892
      %v1902 = vadd.f32 %v1884, %v1892
      %v1903 = vadd.f32 %v1885, %v1892
      %v1904 = vadd.f32 %v1886, %v1892
      %v1905 = vadd.f32 %v1887, %v1892
      %v1906 = vadd.f32 %v1888, %v1892
      %v1907 = vadd.f32 %v1889, %v1892
      %v1908 = vadd.f32 %v1890, %v1892
      %1909 = vst [vmem:[%s248] sm:$0xff] %v1893
      %1910 = vst [vmem:[%s248 + $0x8] sm:$0xff] %v1894
      %1911 = vst [vmem:[%s248 + $0x10] sm:$0xff] %v1895
      %1912 = vst [vmem:[%s248 + $0x18] sm:$0xff] %v1896
      %1913 = vst [vmem:[%s248 + $0x20] sm:$0xff] %v1897
      %1914 = vst [vmem:[%s248 + $0x28] sm:$0xff] %v1898
      %1915 = vst [vmem:[%s248 + $0x30] sm:$0xff] %v1899
      %1916 = vst [vmem:[%s248 + $0x38] sm:$0xff] %v1900
      %1917 = vst [vmem:[%s248 + $0x40] sm:$0xff] %v1901
      %1918 = vst [vmem:[%s248 + $0x48] sm:$0xff] %v1902
      %1919 = vst [vmem:[%s248 + $0x50] sm:$0xff] %v1903
      %1920 = vst [vmem:[%s248 + $0x58] sm:$0xff] %v1904
      %1921 = vst [vmem:[%s248 + $0x60] sm:$0xff] %v1905
      %1922 = vst [vmem:[%s248 + $0x68] sm:$0xff] %v1906
      %1923 = vst [vmem:[%s248 + $0x70] sm:$0xff] %v1907
      %1924 = vst [vmem:[%s248 + $0x78] sm:$0xff] %v1908
      %v1925 = vadd.f32 %v1893, %v1894
      %v1926 = vadd.f32 %v1925, %v1895
      %v1927 = vadd.f32 %v1926, %v1896
      %v1928 = vadd.f32 %v1927, %v1897
      %v1929 = vadd.f32 %v1928, %v1898
      %v1930 = vadd.f32 %v1929, %v1899
      %v1931 = vadd.f32 %v1930, %v1900
      %v1932 = vadd.f32 %v1931, %v1901
      %v1933 = vadd.f32 %v1932, %v1902
      %v1934 = vadd.f32 %v1933, %v1903
      %v1935 = vadd.f32 %v1934, %v1904
      %v1936 = vadd.f32 %v1935, %v1905
      %v1937 = vadd.f32 %v1936, %v1906
      %v1938 = vadd.f32 %v1937, %v1907
      %v1939 = vadd.f32 %v1938, %v1908
      %v1940 = vrot.slane %v1939, 4
      %v1941 = vadd.f32 %v1939, %v1940
      %v1942 = vrot.slane %v1941, 2
      %v1943 = vadd.f32 %v1941, %v1942
      %v1944 = vrot.slane %v1943, 1
      %v1945 = vadd.f32 %v1943, %v1944
      %1946 = vst [vmem:[%s255] sm:$0x1] %v1945
      %v1947 = vmul.f32 %v1893, %v1893
      %v1948 = vmul.f32 %v1894, %v1894
      %v1949 = vmul.f32 %v1895, %v1895
      %v1950 = vmul.f32 %v1896, %v1896
      %v1951 = vmul.f32 %v1897, %v1897
      %v1952 = vmul.f32 %v1898, %v1898
      %v1953 = vmul.f32 %v1899, %v1899
      %v1954 = vmul.f32 %v1900, %v1900
      %v1955 = vmul.f32 %v1901, %v1901
      %v1956 = vmul.f32 %v1902, %v1902
      %v1957 = vmul.f32 %v1903, %v1903
      %v1958 = vmul.f32 %v1904, %v1904
      %v1959 = vmul.f32 %v1905, %v1905
      %v1960 = vmul.f32 %v1906, %v1906
      %v1961 = vmul.f32 %v1907, %v1907
      %v1962 = vmul.f32 %v1908, %v1908
      %v1963 = vadd.f32 %v1947, %v1948
      %v1964 = vadd.f32 %v1963, %v1949
      %v1965 = vadd.f32 %v1964, %v1950
      %v1966 = vadd.f32 %v1965, %v1951
      %v1967 = vadd.f32 %v1966, %v1952
      %v1968 = vadd.f32 %v1967, %v1953
      %v1969 = vadd.f32 %v1968, %v1954
      %v1970 = vadd.f32 %v1969, %v1955
      %v1971 = vadd.f32 %v1970, %v1956
      %v1972 = vadd.f32 %v1971, %v1957
      %v1973 = vadd.f32 %v1972, %v1958
      %v1974 = vadd.f32 %v1973, %v1959
      %v1975 = vadd.f32 %v1974, %v1960
      %v1976 = vadd.f32 %v1975, %v1961
      %v1977 = vadd.f32 %v1976, %v1962
      %v1978 = vrot.slane %v1977, 4
      %v1979 = vadd.f32 %v1977, %v1978
      %v1980 = vrot.slane %v1979, 2
      %v1981 = vadd.f32 %v1979, %v1980
      %v1982 = vrot.slane %v1981, 1
      %v1983 = vadd.f32 %v1981, %v1982
      %1984 = vst [vmem:[%s255 + $0x1] sm:$0x1] %v1983
      %s1985 = smul.u32 8, %s21
      %p1986 = scmp.lt.s32.totalorder %s20, 1
      %s1987 = scalar_select %p1986, %s20, 1
      %p1988 = scmp.lt.s32.totalorder %s1985, 15
      %s1989 = scalar_select %p1988, %s1985, 15
      %s1990 = smul.addr %s1989, 2
      %s1991 = smul.addr %s1987, 32
      %s1992 = sadd.s32 %s1990, %s1991
      %s1993 = smul.addr %s1992, 8
      %s1994 = scalar_lea.vmem %s3, %s1993
      %s1995 = smul.u32 %s20, 2
      %s1996 = sadd.s32 %s1995, %s21
      %p1997 = scmp.lt.s32.totalorder %s1996, 3
      %s1998 = scalar_select %p1997, %s1996, 3
      %s1999 = smul.addr %s1998, 2
      %s2000 = scalar_lea.vmem %s4, %s1999
      // Predicated region
      $region33: #{_spefe_compute.3} parent=31 // pred_check
        %p2001 = pneg %p120
      $region34: #{_spefe_compute.3} parent=31 // pred_check_branch
        %2003 = sbr.rel (%p2001) target = $region36
      $region35: #{_spefe_compute.3} parent=31 // pred_region
        %s2004 = smul.u32 8, %s21
      $region36: #{_spefe_compute.3} parent=31 // pred_fallthru
        _
      // Predicated region
      $region37: #{_spefe_compute.3} parent=31 // pred_check
        %p2005 = pneg %p150
      $region38: #{_spefe_compute.3} parent=31 // pred_check_branch
        %2007 = sbr.rel (%p2005) target = $region40
      $region39: #{_spefe_compute.3} parent=31 // pred_region
        %s2008 = smul.u32 %s20, 2
        %s2009 = sadd.s32 %s2008, %s21
      $region40: #{_spefe_compute.3} parent=31 // pred_fallthru
        _
    $region32: #{_spefe_compute.3} parent=5 // pred_fallthru
      _
    %p2010 = scmp.le.s32.totalorder 2, %s11
    // Predicated region
    $region41: #{_spefe_compute.3} parent=5 // pred_check
      %p2011 = pneg %p2010
    $region42: #{_spefe_compute.3} parent=5 // pred_check_branch
      %2013 = sbr.rel (%p2011) target = $region44
    $region43: #{_spefe_compute.3} parent=5 // pred_region
      %s2014 = ssub.s32 %s11, 2
      // Predicated region
      $region45: #{_spefe_compute.3} parent=43 // pred_check
        %p2015 = pneg %p126
      $region46: #{_spefe_compute.3} parent=43 // pred_check_branch
        %2017 = sbr.rel (%p2015) target = $region48
      $region47: #{_spefe_compute.3} parent=43 // pred_region
        %s2018 = smul.u32 8, %s23
        %p2019 = scmp.lt.s32.totalorder %s22, 1
        %s2020 = scalar_select %p2019, %s22, 1
        %p2021 = scmp.lt.s32.totalorder %s2018, 15
        %s2022 = scalar_select %p2021, %s2018, 15
        %s2023 = smul.addr %s2022, 2
        %s2024 = smul.addr %s2020, 32
        %s2025 = sadd.s32 %s2023, %s2024
        %s2026 = smul.addr %s2025, 8
        %s2027 = scalar_lea.vmem %s3, %s2026
      $region48: #{_spefe_compute.3} parent=43 // pred_fallthru
        _
      // Predicated region
      $region49: #{_spefe_compute.3} parent=43 // pred_check
        %p2028 = pneg %p156
      $region50: #{_spefe_compute.3} parent=43 // pred_check_branch
        %2030 = sbr.rel (%p2028) target = $region52
      $region51: #{_spefe_compute.3} parent=43 // pred_region
        %s2031 = smul.u32 %s22, 2
        %s2032 = sadd.s32 %s2031, %s23
        %p2033 = scmp.lt.s32.totalorder %s2032, 3
        %s2034 = scalar_select %p2033, %s2032, 3
        %s2035 = smul.addr %s2034, 2
        %s2036 = scalar_lea.vmem %s4, %s2035
      $region52: #{_spefe_compute.3} parent=43 // pred_fallthru
        _
    $region44: #{_spefe_compute.3} parent=5 // pred_fallthru
      _
  $region6: #{_spefe_compute.3} parent=0 // loop_footer
    %s15 = sadd.s32 1, %s11
  $region7: #{_spefe_compute.3} parent=0 // loop_footer_branch
    %10 = sbr.rel target = $region3
  $region8: #{_spefe_compute.3} parent=0 // loop_exit
    _

// kernel: _spefe_compute.4
$region0: #{_spefe_compute.4}
  #allocation0 [shape = 'u32[]', space=smem, size = 0x4, offset = 0x4, fixed_abs, tag = 'smem constant byte address 0x4 - core index']
  #allocation1 [shape = 'u32[72,128]{1,0:T(1,128)}', space=vmem, size = 0x9000, scoped, tag = 'internal scratch']
  %s0 = inlined_call_operand.vmem [shape: f32[4,10,18,128], index: 0, kind: input, shape index: {}]
  %s1 = inlined_call_operand.vmem [shape: bf16[9,128,128], index: 1, kind: input, shape index: {}]
  %s2 = inlined_call_operand.vmem [shape: f32[8,128], index: 2, kind: input, shape index: {}]
  %s3 = inlined_call_operand.vmem [shape: f32[2,16,16,128], index: 3, kind: output, shape index: {0}]
  %s4 = inlined_call_operand.vmem [shape: f32[4,2,128], index: 4, kind: output, shape index: {1}]
  %5 = xla_tuple %s3, %s4
  %s6 = sld [smem:[#allocation0]]
  $region53: #{_spefe_compute.4} parent=0
    _
  %s8 = ssub.s32 1, %s6
  %s9 = scalar_select 0, %s8, %s6
  loop: start=0, step=1, limit=6
  $region2: #{_spefe_compute.4} parent=0 // loop_pre_header
    _
  $region3: #{_spefe_compute.4} parent=0 // loop_header
    %s11 = sphi 0, %s15
    %p12 = scmp.ge.s32.totalorder %s11, 6
    %s18 = sphi 0, %s30
    %s19 = sphi 0, %s26
    %s20 = sphi 0, %s18
    %s21 = sphi 0, %s19
    %s22 = sphi 0, %s20
    %s23 = sphi 0, %s21
    %s37 = sphi 0, %s39
    %s40 = sphi 0, %s37
    %s41 = sphi 0, %s40
    %s57 = sphi 0, %s41
    %s61 = sphi 0, %s61
    %s63 = sphi 0, %s61
    %s64 = sphi 0, %s63
    %s78 = sphi 0, %s64
    %s82 = sphi 0, %s82
    %s84 = sphi 0, %s82
    %s85 = sphi 0, %s84
    %s99 = sphi 0, %s85
    %s107 = sphi 0, %s109
    %s110 = sphi 0, %s107
    %s111 = sphi 0, %s110
    %s127 = sphi 0, %s111
    %s137 = sphi 0, %s139
    %s140 = sphi 0, %s137
    %s141 = sphi 0, %s140
    %s157 = sphi 0, %s141
  $region4: #{_spefe_compute.4} parent=0 // loop_header_branch
    %14 = sbr.rel (%p12) target = $region8
  $region5: #{_spefe_compute.4} parent=0 // loop_body
    %s16 = ssub.s32 %s11, 1
    %s17 = ssub.s32 %s11, 2
    %s24 = sadd.s32 1, %s19
    %p25 = scmp.ge.s32.totalorder %s24, 2
    %s26 = scalar_select %p25, 0, %s24
    %s27 = sadd.s32 1, %s18
    %s28 = scalar_select %p25, %s27, %s18
    %p29 = scmp.ge.s32.totalorder %s28, 2
    %s30 = scalar_select %p29, 0, %s28
    %s31 = smul.u32 %s18, 2
    %s32 = sadd.s32 %s31, %s19
    %s33 = smul.u32 %s30, 2
    %s34 = sadd.s32 %s33, %s26
    %s35 = ssub.s32 %s32, %s34
    %p36 = scmp.eq.s32.totalorder %s35, 0
    %s38 = sadd.s32 %s37, 1
    %s39 = scalar_select %p36, %s37, %s38
    %p42 = pneg %p36
    %p43 = scmp.eq.s32.totalorder %s11, 3
    %p44 = por %p42, %p43
    %p45 = scmp.ne.s32.totalorder %s37, %s40
    %p46 = scmp.eq.s32.totalorder %s11, 0
    %p47 = por %p45, %p46
    %p48 = scmp.ne.s32.totalorder %s37, %s40
    %p49 = scmp.eq.s32.totalorder %s16, 3
    %p50 = por %p48, %p49
    %p51 = scmp.ne.s32.totalorder %s40, %s41
    %p52 = scmp.eq.s32.totalorder %s16, 0
    %p53 = por %p51, %p52
    %p54 = scmp.ne.s32.totalorder %s40, %s41
    %p55 = scmp.eq.s32.totalorder %s17, 3
    %p56 = por %p54, %p55
    %p58 = scmp.ne.s32.totalorder %s41, %s57
    %p59 = scmp.eq.s32.totalorder %s17, 0
    %p60 = por %p58, %p59
    %s62 = sadd.s32 %s61, 1
    %p65 = scmp.eq.s32.totalorder %s11, 3
    %p66 = scmp.ne.s32.totalorder %s61, %s63
    %p67 = scmp.eq.s32.totalorder %s11, 0
    %p68 = por %p66, %p67
    %p69 = scmp.ne.s32.totalorder %s61, %s63
    %p70 = scmp.eq.s32.totalorder %s16, 3
    %p71 = por %p69, %p70
    %p72 = scmp.ne.s32.totalorder %s63, %s64
    %p73 = scmp.eq.s32.totalorder %s16, 0
    %p74 = por %p72, %p73
    %p75 = scmp.ne.s32.totalorder %s63, %s64
    %p76 = scmp.eq.s32.totalorder %s17, 3
    %p77 = por %p75, %p76
    %p79 = scmp.ne.s32.totalorder %s64, %s78
    %p80 = scmp.eq.s32.totalorder %s17, 0
    %p81 = por %p79, %p80
    %s83 = sadd.s32 %s82, 1
    %p86 = scmp.eq.s32.totalorder %s11, 3
    %p87 = scmp.ne.s32.totalorder %s82, %s84
    %p88 = scmp.eq.s32.totalorder %s11, 0
    %p89 = por %p87, %p88
    %p90 = scmp.ne.s32.totalorder %s82, %s84
    %p91 = scmp.eq.s32.totalorder %s16, 3
    %p92 = por %p90, %p91
    %p93 = scmp.ne.s32.totalorder %s84, %s85
    %p94 = scmp.eq.s32.totalorder %s16, 0
    %p95 = por %p93, %p94
    %p96 = scmp.ne.s32.totalorder %s84, %s85
    %p97 = scmp.eq.s32.totalorder %s17, 3
    %p98 = por %p96, %p97
    %p100 = scmp.ne.s32.totalorder %s85, %s99
    %p101 = scmp.eq.s32.totalorder %s17, 0
    %p102 = por %p100, %p101
    %s103 = ssub.s32 %s18, %s30
    %s104 = ssub.s32 %s19, %s26
    %s105 = sor.u32 %s103, %s104
    %p106 = scmp.eq.s32.totalorder %s105, 0
    %s108 = sadd.s32 %s107, 1
    %s109 = scalar_select %p106, %s107, %s108
    %p112 = pneg %p106
    %p113 = scmp.eq.s32.totalorder %s11, 3
    %p114 = por %p112, %p113
    %p115 = scmp.ne.s32.totalorder %s107, %s110
    %p116 = scmp.eq.s32.totalorder %s11, 0
    %p117 = por %p115, %p116
    %p118 = scmp.ne.s32.totalorder %s107, %s110
    %p119 = scmp.eq.s32.totalorder %s16, 3
    %p120 = por %p118, %p119
    %p121 = scmp.ne.s32.totalorder %s110, %s111
    %p122 = scmp.eq.s32.totalorder %s16, 0
    %p123 = por %p121, %p122
    %p124 = scmp.ne.s32.totalorder %s110, %s111
    %p125 = scmp.eq.s32.totalorder %s17, 3
    %p126 = por %p124, %p125
    %p128 = scmp.ne.s32.totalorder %s111, %s127
    %p129 = scmp.eq.s32.totalorder %s17, 0
    %p130 = por %p128, %p129
    %s131 = smul.u32 %s18, 2
    %s132 = sadd.s32 %s131, %s19
    %s133 = smul.u32 %s30, 2
    %s134 = sadd.s32 %s133, %s26
    %s135 = ssub.s32 %s132, %s134
    %p136 = scmp.eq.s32.totalorder %s135, 0
    %s138 = sadd.s32 %s137, 1
    %s139 = scalar_select %p136, %s137, %s138
    %p142 = pneg %p136
    %p143 = scmp.eq.s32.totalorder %s11, 3
    %p144 = por %p142, %p143
    %p145 = scmp.ne.s32.totalorder %s137, %s140
    %p146 = scmp.eq.s32.totalorder %s11, 0
    %p147 = por %p145, %p146
    %p148 = scmp.ne.s32.totalorder %s137, %s140
    %p149 = scmp.eq.s32.totalorder %s16, 3
    %p150 = por %p148, %p149
    %p151 = scmp.ne.s32.totalorder %s140, %s141
    %p152 = scmp.eq.s32.totalorder %s16, 0
    %p153 = por %p151, %p152
    %p154 = scmp.ne.s32.totalorder %s140, %s141
    %p155 = scmp.eq.s32.totalorder %s17, 3
    %p156 = por %p154, %p155
    %p158 = scmp.ne.s32.totalorder %s141, %s157
    %p159 = scmp.eq.s32.totalorder %s17, 0
    %p160 = por %p158, %p159
    %p161 = scmp.le.s32.totalorder 1, %s11
    %p162 = scmp.lt.s32.totalorder %s11, 5
    %p163 = pnand %p161, %p162
    %p164 = pneg %p163
    // Predicated region
    $region9: #{_spefe_compute.4} parent=5 // pred_check
      _
    $region10: #{_spefe_compute.4} parent=5 // pred_check_branch
      %166 = sbr.rel (%p163) target = $region12
    $region11: #{_spefe_compute.4} parent=5 // pred_region
      %s167 = ssub.s32 %s11, 1
      // Predicated region
      $region13: #{_spefe_compute.4} parent=11 // pred_check
        %p168 = pneg %p74
      $region14: #{_spefe_compute.4} parent=11 // pred_check_branch
        %170 = sbr.rel (%p168) target = $region16
      $region15: #{_spefe_compute.4} parent=11 // pred_region
        _
      $region16: #{_spefe_compute.4} parent=11 // pred_fallthru
        _
      // Predicated region
      $region17: #{_spefe_compute.4} parent=11 // pred_check
        %p171 = pneg %p95
      $region18: #{_spefe_compute.4} parent=11 // pred_check_branch
        %173 = sbr.rel (%p171) target = $region20
      $region19: #{_spefe_compute.4} parent=11 // pred_region
        _
      $region20: #{_spefe_compute.4} parent=11 // pred_fallthru
        _
    $region12: #{_spefe_compute.4} parent=5 // pred_fallthru
      _
    %p174 = scmp.lt.s32.totalorder %s11, 4
    // Predicated region
    $region21: #{_spefe_compute.4} parent=5 // pred_check
      %p175 = pneg %p174
    $region22: #{_spefe_compute.4} parent=5 // pred_check_branch
      %177 = sbr.rel (%p175) target = $region24
    $region23: #{_spefe_compute.4} parent=5 // pred_region
      // Predicated region
      $region25: #{_spefe_compute.4} parent=23 // pred_check
        %p178 = pneg %p47
      $region26: #{_spefe_compute.4} parent=23 // pred_check_branch
        %180 = sbr.rel (%p178) target = $region28
      $region27: #{_spefe_compute.4} parent=23 // pred_region
        %s181 = smul.u32 %s18, 2
        %s182 = sadd.s32 %s181, %s19
        %p183 = scmp.lt.s32.totalorder %s182, 3
        %s184 = scalar_select %p183, %s182, 3
        %s185 = smul.addr %s184, 30
        %s186 = smul.addr %s185, 8
        %s187 = scalar_lea.vmem %s0, %s186
        %s188 = smul.u32 %s18, 2
        %s189 = sadd.s32 %s188, %s19
      $region28: #{_spefe_compute.4} parent=23 // pred_fallthru
        _
    $region24: #{_spefe_compute.4} parent=5 // pred_fallthru
      _
    %p190 = scmp.le.s32.totalorder 1, %s11
    %p191 = scmp.lt.s32.totalorder %s11, 5
    %p192 = pnand %p190, %p191
    %p193 = pneg %p192
    // Predicated region
    $region29: #{_spefe_compute.4} parent=5 // pred_check
      _
    $region30: #{_spefe_compute.4} parent=5 // pred_check_branch
      %195 = sbr.rel (%p192) target = $region32
    $region31: #{_spefe_compute.4} parent=5 // pred_region
      %s196 = ssub.s32 %s11, 1
      %s197 = smul.u32 %s20, 2
      %s198 = sadd.s32 %s197, %s21
      %p199 = scmp.lt.s32.totalorder %s198, 3
      %s200 = scalar_select %p199, %s198, 3
      %s201 = smul.addr %s200, 30
      %s202 = smul.addr %s201, 8
      %s203 = scalar_lea.vmem %s0, %s202
      %p204 = pneg %p53
      %p205 = pneg %p50
      %p206 = pneg %p74
      %p207 = pneg %p71
      %p208 = pneg %p95
      %p209 = pneg %p92
      %p210 = pneg %p123
      %p211 = pneg %p120
      %s212 = smul.u32 8, %s21
      %p213 = scmp.lt.s32.totalorder %s20, 1
      %s214 = scalar_select %p213, %s20, 1
      %p215 = scmp.lt.s32.totalorder %s212, 15
      %s216 = scalar_select %p215, %s212, 15
      %s217 = smul.addr %s216, 2
      %s218 = smul.addr %s214, 32
      %s219 = sadd.s32 %s217, %s218
      %s220 = smul.addr %s219, 8
      %s221 = scalar_lea.vmem %s3, %s220
      %p222 = pneg %p153
      %p223 = pneg %p150
      %s224 = smul.u32 %s20, 2
      %s225 = sadd.s32 %s224, %s21
      %p226 = scmp.lt.s32.totalorder %s225, 3
      %s227 = scalar_select %p226, %s225, 3
      %s228 = smul.addr %s227, 2
      %s229 = scalar_lea.vmem %s4, %s228
      %s230 = smul.u32 %s20, 2
      %s231 = sadd.s32 %s230, %s21
      %p232 = scmp.lt.s32.totalorder %s231, 3
      %s233 = scalar_select %p232, %s231, 3
      %s234 = smul.addr %s233, 30
      %s235 = smul.addr %s234, 8
      %s236 = scalar_lea.vmem %s0, %s235
      %s237 = smul.u32 %s20, 2
      %s238 = sadd.s32 %s237, %s21
      %s239 = smul.u32 8, %s21
      %p240 = scmp.lt.s32.totalorder %s20, 1
      %s241 = scalar_select %p240, %s20, 1
      %p242 = scmp.lt.s32.totalorder %s239, 15
      %s243 = scalar_select %p242, %s239, 15
      %s244 = smul.addr %s243, 2
      %s245 = smul.addr %s241, 32
      %s246 = sadd.s32 %s244, %s245
      %s247 = smul.addr %s246, 8
      %s248 = scalar_lea.vmem %s3, %s247
      %s249 = smul.u32 8, %s21
      %s250 = smul.u32 %s20, 2
      %s251 = sadd.s32 %s250, %s21
      %p252 = scmp.lt.s32.totalorder %s251, 3
      %s253 = scalar_select %p252, %s251, 3
      %s254 = smul.addr %s253, 2
      %s255 = scalar_lea.vmem %s4, %s254
      %s256 = smul.u32 %s20, 2
      %s257 = sadd.s32 %s256, %s21
      %v258 = vld [vmem:[%s236] sm:$0xff]
      %v259 = vld [vmem:[%s236 + $0x8] sm:$0xff]
      %v260 = vld [vmem:[%s236 + $0x10] sm:$0x3]
      %v261 = vld [vmem:[%s236 + $0x18] sm:$0xff]
      %v262 = vld [vmem:[%s236 + $0x20] sm:$0xff]
      %v263 = vld [vmem:[%s236 + $0x28] sm:$0x3]
      %v264 = vld [vmem:[%s236 + $0x30] sm:$0xff]
      %v265 = vld [vmem:[%s236 + $0x38] sm:$0xff]
      %v266 = vld [vmem:[%s236 + $0x40] sm:$0x3]
      %v267 = vld [vmem:[%s236 + $0x48] sm:$0xff]
      %v268 = vld [vmem:[%s236 + $0x50] sm:$0xff]
      %v269 = vld [vmem:[%s236 + $0x58] sm:$0x3]
      %v270 = vld [vmem:[%s236 + $0x60] sm:$0xff]
      %v271 = vld [vmem:[%s236 + $0x68] sm:$0xff]
      %v272 = vld [vmem:[%s236 + $0x70] sm:$0x3]
      %v273 = vld [vmem:[%s236 + $0x78] sm:$0xff]
      %v274 = vld [vmem:[%s236 + $0x80] sm:$0xff]
      %v275 = vld [vmem:[%s236 + $0x88] sm:$0x3]
      %v276 = vld [vmem:[%s236 + $0x90] sm:$0xff]
      %v277 = vld [vmem:[%s236 + $0x98] sm:$0xff]
      %v278 = vld [vmem:[%s236 + $0xa0] sm:$0x3]
      %v279 = vld [vmem:[%s236 + $0xa8] sm:$0xff]
      %v280 = vld [vmem:[%s236 + $0xb0] sm:$0xff]
      %v281 = vld [vmem:[%s236 + $0xb8] sm:$0x3]
      %v282 = vld [vmem:[%s236 + $0xc0] sm:$0xff]
      %v283 = vld [vmem:[%s236 + $0xc8] sm:$0xff]
      %v284 = vld [vmem:[%s236 + $0xd0] sm:$0x3]
      %v285 = vld [vmem:[%s236 + $0xd8] sm:$0xff]
      %v286 = vld [vmem:[%s236 + $0xe0] sm:$0xff]
      %v287 = vld [vmem:[%s236 + $0xe8] sm:$0x3]
      %v288 = vld [vmem:[%s2 + $0x1] sm:$0x1]
      %v289 = vperm.slane %v288, 0
      %v290 = vmul.f32 %v258, %v289
      %v291 = vmul.f32 %v259, %v289
      %v292 = vmul.f32 %v260, %v289
      %v293 = vmul.f32 %v261, %v289
      %v294 = vmul.f32 %v262, %v289
      %v295 = vmul.f32 %v263, %v289
      %v296 = vmul.f32 %v264, %v289
      %v297 = vmul.f32 %v265, %v289
      %v298 = vmul.f32 %v266, %v289
      %v299 = vmul.f32 %v267, %v289
      %v300 = vmul.f32 %v268, %v289
      %v301 = vmul.f32 %v269, %v289
      %v302 = vmul.f32 %v270, %v289
      %v303 = vmul.f32 %v271, %v289
      %v304 = vmul.f32 %v272, %v289
      %v305 = vmul.f32 %v273, %v289
      %v306 = vmul.f32 %v274, %v289
      %v307 = vmul.f32 %v275, %v289
      %v308 = vmul.f32 %v276, %v289
      %v309 = vmul.f32 %v277, %v289
      %v310 = vmul.f32 %v278, %v289
      %v311 = vmul.f32 %v279, %v289
      %v312 = vmul.f32 %v280, %v289
      %v313 = vmul.f32 %v281, %v289
      %v314 = vmul.f32 %v282, %v289
      %v315 = vmul.f32 %v283, %v289
      %v316 = vmul.f32 %v284, %v289
      %v317 = vmul.f32 %v285, %v289
      %v318 = vmul.f32 %v286, %v289
      %v319 = vmul.f32 %v287, %v289
      %v320 = vld [vmem:[%s2 + $0x2] sm:$0x1]
      %v321 = vperm.slane %v320, 0
      %v322 = vadd.f32 %v290, %v321
      %v323 = vadd.f32 %v291, %v321
      %v324 = vadd.f32 %v292, %v321
      %v325 = vadd.f32 %v293, %v321
      %v326 = vadd.f32 %v294, %v321
      %v327 = vadd.f32 %v295, %v321
      %v328 = vadd.f32 %v296, %v321
      %v329 = vadd.f32 %v297, %v321
      %v330 = vadd.f32 %v298, %v321
      %v331 = vadd.f32 %v299, %v321
      %v332 = vadd.f32 %v300, %v321
      %v333 = vadd.f32 %v301, %v321
      %v334 = vadd.f32 %v302, %v321
      %v335 = vadd.f32 %v303, %v321
      %v336 = vadd.f32 %v304, %v321
      %v337 = vadd.f32 %v305, %v321
      %v338 = vadd.f32 %v306, %v321
      %v339 = vadd.f32 %v307, %v321
      %v340 = vadd.f32 %v308, %v321
      %v341 = vadd.f32 %v309, %v321
      %v342 = vadd.f32 %v310, %v321
      %v343 = vadd.f32 %v311, %v321
      %v344 = vadd.f32 %v312, %v321
      %v345 = vadd.f32 %v313, %v321
      %v346 = vadd.f32 %v314, %v321
      %v347 = vadd.f32 %v315, %v321
      %v348 = vadd.f32 %v316, %v321
      %v349 = vadd.f32 %v317, %v321
      %v350 = vadd.f32 %v318, %v321
      %v351 = vadd.f32 %v319, %v321
      %vm352 = vcmp.ge.f32.partialorder %v322, 0.0
      %vm353 = vcmp.ge.f32.partialorder %v323, 0.0
      %vm354 = vcmp.ge.f32.partialorder %v324, 0.0
      %vm355 = vcmp.ge.f32.partialorder %v325, 0.0
      %vm356 = vcmp.ge.f32.partialorder %v326, 0.0
      %vm357 = vcmp.ge.f32.partialorder %v327, 0.0
      %vm358 = vcmp.ge.f32.partialorder %v328, 0.0
      %vm359 = vcmp.ge.f32.partialorder %v329, 0.0
      %vm360 = vcmp.ge.f32.partialorder %v330, 0.0
      %vm361 = vcmp.ge.f32.partialorder %v331, 0.0
      %vm362 = vcmp.ge.f32.partialorder %v332, 0.0
      %vm363 = vcmp.ge.f32.partialorder %v333, 0.0
      %vm364 = vcmp.ge.f32.partialorder %v334, 0.0
      %vm365 = vcmp.ge.f32.partialorder %v335, 0.0
      %vm366 = vcmp.ge.f32.partialorder %v336, 0.0
      %vm367 = vcmp.ge.f32.partialorder %v337, 0.0
      %vm368 = vcmp.ge.f32.partialorder %v338, 0.0
      %vm369 = vcmp.ge.f32.partialorder %v339, 0.0
      %vm370 = vcmp.ge.f32.partialorder %v340, 0.0
      %vm371 = vcmp.ge.f32.partialorder %v341, 0.0
      %vm372 = vcmp.ge.f32.partialorder %v342, 0.0
      %vm373 = vcmp.ge.f32.partialorder %v343, 0.0
      %vm374 = vcmp.ge.f32.partialorder %v344, 0.0
      %vm375 = vcmp.ge.f32.partialorder %v345, 0.0
      %vm376 = vcmp.ge.f32.partialorder %v346, 0.0
      %vm377 = vcmp.ge.f32.partialorder %v347, 0.0
      %vm378 = vcmp.ge.f32.partialorder %v348, 0.0
      %vm379 = vcmp.ge.f32.partialorder %v349, 0.0
      %vm380 = vcmp.ge.f32.partialorder %v350, 0.0
      %vm381 = vcmp.ge.f32.partialorder %v351, 0.0
      %v382 = vld [vmem:[%s2 + $0x3] sm:$0x1]
      %v383 = vperm.slane %v382, 0
      %v384 = vmul.f32 %v322, %v383
      %v385 = vmul.f32 %v323, %v383
      %v386 = vmul.f32 %v324, %v383
      %v387 = vmul.f32 %v325, %v383
      %v388 = vmul.f32 %v326, %v383
      %v389 = vmul.f32 %v327, %v383
      %v390 = vmul.f32 %v328, %v383
      %v391 = vmul.f32 %v329, %v383
      %v392 = vmul.f32 %v330, %v383
      %v393 = vmul.f32 %v331, %v383
      %v394 = vmul.f32 %v332, %v383
      %v395 = vmul.f32 %v333, %v383
      %v396 = vmul.f32 %v334, %v383
      %v397 = vmul.f32 %v335, %v383
      %v398 = vmul.f32 %v336, %v383
      %v399 = vmul.f32 %v337, %v383
      %v400 = vmul.f32 %v338, %v383
      %v401 = vmul.f32 %v339, %v383
      %v402 = vmul.f32 %v340, %v383
      %v403 = vmul.f32 %v341, %v383
      %v404 = vmul.f32 %v342, %v383
      %v405 = vmul.f32 %v343, %v383
      %v406 = vmul.f32 %v344, %v383
      %v407 = vmul.f32 %v345, %v383
      %v408 = vmul.f32 %v346, %v383
      %v409 = vmul.f32 %v347, %v383
      %v410 = vmul.f32 %v348, %v383
      %v411 = vmul.f32 %v349, %v383
      %v412 = vmul.f32 %v350, %v383
      %v413 = vmul.f32 %v351, %v383
      %v414 = vsel %vm352, %v322, %v384
      %v415 = vsel %vm353, %v323, %v385
      %v416 = vsel %vm354, %v324, %v386
      %v417 = vsel %vm355, %v325, %v387
      %v418 = vsel %vm356, %v326, %v388
      %v419 = vsel %vm357, %v327, %v389
      %v420 = vsel %vm358, %v328, %v390
      %v421 = vsel %vm359, %v329, %v391
      %v422 = vsel %vm360, %v330, %v392
      %v423 = vsel %vm361, %v331, %v393
      %v424 = vsel %vm362, %v332, %v394
      %v425 = vsel %vm363, %v333, %v395
      %v426 = vsel %vm364, %v334, %v396
      %v427 = vsel %vm365, %v335, %v397
      %v428 = vsel %vm366, %v336, %v398
      %v429 = vsel %vm367, %v337, %v399
      %v430 = vsel %vm368, %v338, %v400
      %v431 = vsel %vm369, %v339, %v401
      %v432 = vsel %vm370, %v340, %v402
      %v433 = vsel %vm371, %v341, %v403
      %v434 = vsel %vm372, %v342, %v404
      %v435 = vsel %vm373, %v343, %v405
      %v436 = vsel %vm374, %v344, %v406
      %v437 = vsel %vm375, %v345, %v407
      %v438 = vsel %vm376, %v346, %v408
      %v439 = vsel %vm377, %v347, %v409
      %v440 = vsel %vm378, %v348, %v410
      %v441 = vsel %vm379, %v349, %v411
      %v442 = vsel %vm380, %v350, %v412
      %v443 = vsel %vm381, %v351, %v413
      %v444 = vpack.c.bf16 %v414, %v414
      %v445 = vpack.c.bf16 %v415, %v415
      %v446 = vpack.c.bf16 %v416, %v416
      %v447 = vpack.c.bf16 %v417, %v417
      %v448 = vpack.c.bf16 %v418, %v418
      %v449 = vpack.c.bf16 %v419, %v419
      %v450 = vpack.c.bf16 %v420, %v420
      %v451 = vpack.c.bf16 %v421, %v421
      %v452 = vpack.c.bf16 %v422, %v422
      %v453 = vpack.c.bf16 %v423, %v423
      %v454 = vpack.c.bf16 %v424, %v424
      %v455 = vpack.c.bf16 %v425, %v425
      %v456 = vpack.c.bf16 %v426, %v426
      %v457 = vpack.c.bf16 %v427, %v427
      %v458 = vpack.c.bf16 %v428, %v428
      %v459 = vpack.c.bf16 %v429, %v429
      %v460 = vpack.c.bf16 %v430, %v430
      %v461 = vpack.c.bf16 %v431, %v431
      %v462 = vpack.c.bf16 %v432, %v432
      %v463 = vpack.c.bf16 %v433, %v433
      %v464 = vpack.c.bf16 %v434, %v434
      %v465 = vpack.c.bf16 %v435, %v435
      %v466 = vpack.c.bf16 %v436, %v436
      %v467 = vpack.c.bf16 %v437, %v437
      %v468 = vpack.c.bf16 %v438, %v438
      %v469 = vpack.c.bf16 %v439, %v439
      %v470 = vpack.c.bf16 %v440, %v440
      %v471 = vpack.c.bf16 %v441, %v441
      %v472 = vpack.c.bf16 %v442, %v442
      %v473 = vpack.c.bf16 %v443, %v443
      %v474 = vld [vmem:[%s1] sm:$0xf]
      %v475 = vld [vmem:[%s1 + $0x4] sm:$0xf]
      %v476 = vld [vmem:[%s1 + $0x8] sm:$0xf]
      %v477 = vld [vmem:[%s1 + $0xc] sm:$0xf]
      %v478 = vld [vmem:[%s1 + $0x10] sm:$0xf]
      %v479 = vld [vmem:[%s1 + $0x14] sm:$0xf]
      %v480 = vld [vmem:[%s1 + $0x18] sm:$0xf]
      %v481 = vld [vmem:[%s1 + $0x1c] sm:$0xf]
      %v482 = vld [vmem:[%s1 + $0x20] sm:$0xf]
      %v483 = vld [vmem:[%s1 + $0x24] sm:$0xf]
      %v484 = vld [vmem:[%s1 + $0x28] sm:$0xf]
      %v485 = vld [vmem:[%s1 + $0x2c] sm:$0xf]
      %v486 = vld [vmem:[%s1 + $0x30] sm:$0xf]
      %v487 = vld [vmem:[%s1 + $0x34] sm:$0xf]
      %v488 = vld [vmem:[%s1 + $0x38] sm:$0xf]
      %v489 = vld [vmem:[%s1 + $0x3c] sm:$0xf]
      %vm490 = vsmask.f32 3328
      %vm491 = vsmask.f32 7440
      %vm492 = vmor %vm490, %vm491
      %v494 = vshrl.u32 %v444, 16
      %v496 = vrot.slane %v494, 4
      %v497 = vshll.u32 %v444, 16
      %v499 = vrot.slane %v497, 5
      %v500 = vor.u32 %v496, %v499
      %v501 = vrot.slane %v500, 4
      %v503 = vshll.u32 %v445, 16
      %v505 = vrot.slane %v503, 5
      %v506 = vsel %vm492, %v501, %v505
      %v507 = vshrl.u32 %v445, 16
      %v509 = vrot.slane %v507, 4
      %v510 = vor.u32 %v509, %v505
      %v511 = vrot.slane %v510, 4
      %v513 = vshll.u32 %v446, 16
      %v515 = vrot.slane %v513, 5
      %v516 = vsel %vm492, %v511, %v515
      %v518 = vshrl.u32 %v447, 16
      %v520 = vrot.slane %v518, 4
      %v521 = vshll.u32 %v447, 16
      %v523 = vrot.slane %v521, 5
      %v524 = vor.u32 %v520, %v523
      %v525 = vrot.slane %v524, 4
      %v527 = vshll.u32 %v448, 16
      %v529 = vrot.slane %v527, 5
      %v530 = vsel %vm492, %v525, %v529
      %v531 = vshrl.u32 %v448, 16
      %v533 = vrot.slane %v531, 4
      %v534 = vor.u32 %v533, %v529
      %v535 = vrot.slane %v534, 4
      %v537 = vshll.u32 %v449, 16
      %v539 = vrot.slane %v537, 5
      %v540 = vsel %vm492, %v535, %v539
      %v542 = vshrl.u32 %v450, 16
      %v544 = vrot.slane %v542, 4
      %v545 = vshll.u32 %v450, 16
      %v547 = vrot.slane %v545, 5
      %v548 = vor.u32 %v544, %v547
      %v549 = vrot.slane %v548, 4
      %v551 = vshll.u32 %v451, 16
      %v553 = vrot.slane %v551, 5
      %v554 = vsel %vm492, %v549, %v553
      %v555 = vshrl.u32 %v451, 16
      %v557 = vrot.slane %v555, 4
      %v558 = vor.u32 %v557, %v553
      %v559 = vrot.slane %v558, 4
      %v561 = vshll.u32 %v452, 16
      %v563 = vrot.slane %v561, 5
      %v564 = vsel %vm492, %v559, %v563
      %v566 = vshrl.u32 %v453, 16
      %v568 = vrot.slane %v566, 4
      %v569 = vshll.u32 %v453, 16
      %v571 = vrot.slane %v569, 5
      %v572 = vor.u32 %v568, %v571
      %v573 = vrot.slane %v572, 4
      %v575 = vshll.u32 %v454, 16
      %v577 = vrot.slane %v575, 5
      %v578 = vsel %vm492, %v573, %v577
      %v579 = vshrl.u32 %v454, 16
      %v581 = vrot.slane %v579, 4
      %v582 = vor.u32 %v581, %v577
      %v583 = vrot.slane %v582, 4
      %v585 = vshll.u32 %v455, 16
      %v587 = vrot.slane %v585, 5
      %v588 = vsel %vm492, %v583, %v587
      %v590 = vshrl.u32 %v456, 16
      %v592 = vrot.slane %v590, 4
      %v593 = vshll.u32 %v456, 16
      %v595 = vrot.slane %v593, 5
      %v596 = vor.u32 %v592, %v595
      %v597 = vrot.slane %v596, 4
      %v599 = vshll.u32 %v457, 16
      %v601 = vrot.slane %v599, 5
      %v602 = vsel %vm492, %v597, %v601
      %v603 = vshrl.u32 %v457, 16
      %v605 = vrot.slane %v603, 4
      %v606 = vor.u32 %v605, %v601
      %v607 = vrot.slane %v606, 4
      %v609 = vshll.u32 %v458, 16
      %v611 = vrot.slane %v609, 5
      %v612 = vsel %vm492, %v607, %v611
      %v614 = vshrl.u32 %v459, 16
      %v616 = vrot.slane %v614, 4
      %v617 = vshll.u32 %v459, 16
      %v619 = vrot.slane %v617, 5
      %v620 = vor.u32 %v616, %v619
      %v621 = vrot.slane %v620, 4
      %v623 = vshll.u32 %v460, 16
      %v625 = vrot.slane %v623, 5
      %v626 = vsel %vm492, %v621, %v625
      %v627 = vshrl.u32 %v460, 16
      %v629 = vrot.slane %v627, 4
      %v630 = vor.u32 %v629, %v625
      %v631 = vrot.slane %v630, 4
      %v633 = vshll.u32 %v461, 16
      %v635 = vrot.slane %v633, 5
      %v636 = vsel %vm492, %v631, %v635
      %v638 = vshrl.u32 %v462, 16
      %v640 = vrot.slane %v638, 4
      %v641 = vshll.u32 %v462, 16
      %v643 = vrot.slane %v641, 5
      %v644 = vor.u32 %v640, %v643
      %v645 = vrot.slane %v644, 4
      %v647 = vshll.u32 %v463, 16
      %v649 = vrot.slane %v647, 5
      %v650 = vsel %vm492, %v645, %v649
      %v651 = vshrl.u32 %v463, 16
      %v653 = vrot.slane %v651, 4
      %v654 = vor.u32 %v653, %v649
      %v655 = vrot.slane %v654, 4
      %v657 = vshll.u32 %v464, 16
      %v659 = vrot.slane %v657, 5
      %v660 = vsel %vm492, %v655, %v659
      %v662 = vshrl.u32 %v465, 16
      %v664 = vrot.slane %v662, 4
      %v665 = vshll.u32 %v465, 16
      %v667 = vrot.slane %v665, 5
      %v668 = vor.u32 %v664, %v667
      %v669 = vrot.slane %v668, 4
      %v671 = vshll.u32 %v466, 16
      %v673 = vrot.slane %v671, 5
      %v674 = vsel %vm492, %v669, %v673
      %v675 = vshrl.u32 %v466, 16
      %v677 = vrot.slane %v675, 4
      %v678 = vor.u32 %v677, %v673
      %v679 = vrot.slane %v678, 4
      %v681 = vshll.u32 %v467, 16
      %v683 = vrot.slane %v681, 5
      %v684 = vsel %vm492, %v679, %v683
      %s685 = scalar_lea.vmem %s1, 64
      %v686 = vld [vmem:[%s685] sm:$0xf]
      %v687 = vld [vmem:[%s685 + $0x4] sm:$0xf]
      %v688 = vld [vmem:[%s685 + $0x8] sm:$0xf]
      %v689 = vld [vmem:[%s685 + $0xc] sm:$0xf]
      %v690 = vld [vmem:[%s685 + $0x10] sm:$0xf]
      %v691 = vld [vmem:[%s685 + $0x14] sm:$0xf]
      %v692 = vld [vmem:[%s685 + $0x18] sm:$0xf]
      %v693 = vld [vmem:[%s685 + $0x1c] sm:$0xf]
      %v694 = vld [vmem:[%s685 + $0x20] sm:$0xf]
      %v695 = vld [vmem:[%s685 + $0x24] sm:$0xf]
      %v696 = vld [vmem:[%s685 + $0x28] sm:$0xf]
      %v697 = vld [vmem:[%s685 + $0x2c] sm:$0xf]
      %v698 = vld [vmem:[%s685 + $0x30] sm:$0xf]
      %v699 = vld [vmem:[%s685 + $0x34] sm:$0xf]
      %v700 = vld [vmem:[%s685 + $0x38] sm:$0xf]
      %v701 = vld [vmem:[%s685 + $0x3c] sm:$0xf]
      %v702 = vunpack.c.l.b16 %v506
      %v703 = vunpack.c.l.b16 %v516
      %v704 = vunpack.c.l.b16 %v530
      %v705 = vunpack.c.l.b16 %v540
      %v706 = vunpack.c.l.b16 %v554
      %v707 = vunpack.c.l.b16 %v564
      %v708 = vunpack.c.l.b16 %v578
      %v709 = vunpack.c.l.b16 %v588
      %v710 = vunpack.c.l.b16 %v602
      %v711 = vunpack.c.l.b16 %v612
      %v712 = vunpack.c.l.b16 %v626
      %v713 = vunpack.c.l.b16 %v636
      %v714 = vunpack.c.l.b16 %v650
      %v715 = vunpack.c.l.b16 %v660
      %v716 = vunpack.c.l.b16 %v674
      %v717 = vunpack.c.l.b16 %v684
      %v718 = vpack.c.b16 %v703, %v702
      %v719 = vpack.c.b16 %v705, %v704
      %v720 = vpack.c.b16 %v707, %v706
      %v721 = vpack.c.b16 %v709, %v708
      %v722 = vpack.c.b16 %v711, %v710
      %v723 = vpack.c.b16 %v713, %v712
      %v724 = vpack.c.b16 %v715, %v714
      %v725 = vpack.c.b16 %v717, %v716
      %v750 = vunpack.c.l.b16 %v686
      %v751 = vunpack.c.l.b16 %v687
      %v752 = vunpack.c.l.b16 %v688
      %v753 = vunpack.c.l.b16 %v689
      %v754 = vunpack.c.l.b16 %v690
      %v755 = vunpack.c.l.b16 %v691
      %v756 = vunpack.c.l.b16 %v692
      %v757 = vunpack.c.l.b16 %v693
      %v758 = vunpack.c.l.b16 %v694
      %v759 = vunpack.c.l.b16 %v695
      %v760 = vunpack.c.l.b16 %v696
      %v761 = vunpack.c.l.b16 %v697
      %v762 = vunpack.c.l.b16 %v698
      %v763 = vunpack.c.l.b16 %v699
      %v764 = vunpack.c.l.b16 %v700
      %v765 = vunpack.c.l.b16 %v701
      %v766 = vpack.c.b16 %v751, %v750
      %v767 = vpack.c.b16 %v753, %v752
      %v768 = vpack.c.b16 %v755, %v754
      %v769 = vpack.c.b16 %v757, %v756
      %v770 = vpack.c.b16 %v759, %v758
      %v771 = vpack.c.b16 %v761, %v760
      %v772 = vpack.c.b16 %v763, %v762
      %v773 = vpack.c.b16 %v765, %v764
      %782 = vmatpush.bf16.msra.mxu0 %v773
      %783 = vmatpush.bf16.msra.mxu0 %v772
      %784 = vmatpush.bf16.msra.mxu0 %v771
      %785 = vmatpush.bf16.msra.mxu0 %v770
      %786 = vmatpush.bf16.msra.mxu0 %v769
      %787 = vmatpush.bf16.msra.mxu0 %v768
      %788 = vmatpush.bf16.msra.mxu0 %v767
      %789 = vmatpush.bf16.msra.mxu0 %v766
      %790 = vmatmul.bf16.gmra.mxu0 %v718
      %v791 = vpop.f32.mrf.mxu0
      %v792 = vadd.f32 0.0, %v791
      %v793 = vpop.f32.mrf.mxu0
      %v794 = vadd.f32 0.0, %v793
      %795 = vmatmul.bf16.gmra.mxu0 %v719
      %v796 = vpop.f32.mrf.mxu0
      %v797 = vadd.f32 0.0, %v796
      %v798 = vpop.f32.mrf.mxu0
      %v799 = vadd.f32 0.0, %v798
      %800 = vmatmul.bf16.gmra.mxu0 %v720
      %v801 = vpop.f32.mrf.mxu0
      %v802 = vadd.f32 0.0, %v801
      %v803 = vpop.f32.mrf.mxu0
      %v804 = vadd.f32 0.0, %v803
      %805 = vmatmul.bf16.gmra.mxu0 %v721
      %v806 = vpop.f32.mrf.mxu0
      %v807 = vadd.f32 0.0, %v806
      %v808 = vpop.f32.mrf.mxu0
      %v809 = vadd.f32 0.0, %v808
      %810 = vmatmul.bf16.gmra.mxu0 %v722
      %v811 = vpop.f32.mrf.mxu0
      %v812 = vadd.f32 0.0, %v811
      %v813 = vpop.f32.mrf.mxu0
      %v814 = vadd.f32 0.0, %v813
      %815 = vmatmul.bf16.gmra.mxu0 %v723
      %v816 = vpop.f32.mrf.mxu0
      %v817 = vadd.f32 0.0, %v816
      %v818 = vpop.f32.mrf.mxu0
      %v819 = vadd.f32 0.0, %v818
      %820 = vmatmul.bf16.gmra.mxu0 %v724
      %v821 = vpop.f32.mrf.mxu0
      %v822 = vadd.f32 0.0, %v821
      %v823 = vpop.f32.mrf.mxu0
      %v824 = vadd.f32 0.0, %v823
      %825 = vmatmul.bf16.gmra.mxu0 %v725
      %v826 = vpop.f32.mrf.mxu0
      %v827 = vadd.f32 0.0, %v826
      %v828 = vpop.f32.mrf.mxu0
      %v829 = vadd.f32 0.0, %v828
      %830 = vdwg.mxu0
      %v847 = vunpack.c.l.b16 %v444
      %v848 = vunpack.c.l.b16 %v445
      %v849 = vunpack.c.l.b16 %v447
      %v850 = vunpack.c.l.b16 %v448
      %v851 = vunpack.c.l.b16 %v450
      %v852 = vunpack.c.l.b16 %v451
      %v853 = vunpack.c.l.b16 %v453
      %v854 = vunpack.c.l.b16 %v454
      %v855 = vunpack.c.l.b16 %v456
      %v856 = vunpack.c.l.b16 %v457
      %v857 = vunpack.c.l.b16 %v459
      %v858 = vunpack.c.l.b16 %v460
      %v859 = vunpack.c.l.b16 %v462
      %v860 = vunpack.c.l.b16 %v463
      %v861 = vunpack.c.l.b16 %v465
      %v862 = vunpack.c.l.b16 %v466
      %v863 = vpack.c.b16 %v848, %v847
      %v864 = vpack.c.b16 %v850, %v849
      %v865 = vpack.c.b16 %v852, %v851
      %v866 = vpack.c.b16 %v854, %v853
      %v867 = vpack.c.b16 %v856, %v855
      %v868 = vpack.c.b16 %v858, %v857
      %v869 = vpack.c.b16 %v860, %v859
      %v870 = vpack.c.b16 %v862, %v861
      %v895 = vunpack.c.l.b16 %v474
      %v896 = vunpack.c.l.b16 %v475
      %v897 = vunpack.c.l.b16 %v476
      %v898 = vunpack.c.l.b16 %v477
      %v899 = vunpack.c.l.b16 %v478
      %v900 = vunpack.c.l.b16 %v479
      %v901 = vunpack.c.l.b16 %v480
      %v902 = vunpack.c.l.b16 %v481
      %v903 = vunpack.c.l.b16 %v482
      %v904 = vunpack.c.l.b16 %v483
      %v905 = vunpack.c.l.b16 %v484
      %v906 = vunpack.c.l.b16 %v485
      %v907 = vunpack.c.l.b16 %v486
      %v908 = vunpack.c.l.b16 %v487
      %v909 = vunpack.c.l.b16 %v488
      %v910 = vunpack.c.l.b16 %v489
      %v911 = vpack.c.b16 %v896, %v895
      %v912 = vpack.c.b16 %v898, %v897
      %v913 = vpack.c.b16 %v900, %v899
      %v914 = vpack.c.b16 %v902, %v901
      %v915 = vpack.c.b16 %v904, %v903
      %v916 = vpack.c.b16 %v906, %v905
      %v917 = vpack.c.b16 %v908, %v907
      %v918 = vpack.c.b16 %v910, %v909
      %927 = vmatpush.bf16.msra.mxu0 %v918
      %928 = vmatpush.bf16.msra.mxu0 %v917
      %929 = vmatpush.bf16.msra.mxu0 %v916
      %930 = vmatpush.bf16.msra.mxu0 %v915
      %931 = vmatpush.bf16.msra.mxu0 %v914
      %932 = vmatpush.bf16.msra.mxu0 %v913
      %933 = vmatpush.bf16.msra.mxu0 %v912
      %934 = vmatpush.bf16.msra.mxu0 %v911
      %935 = vmatmul.bf16.gmra.mxu0 %v863
      %v936 = vpop.f32.mrf.mxu0
      %v937 = vadd.f32 %v792, %v936
      %v938 = vpop.f32.mrf.mxu0
      %v939 = vadd.f32 %v794, %v938
      %940 = vmatmul.bf16.gmra.mxu0 %v864
      %v941 = vpop.f32.mrf.mxu0
      %v942 = vadd.f32 %v797, %v941
      %v943 = vpop.f32.mrf.mxu0
      %v944 = vadd.f32 %v799, %v943
      %945 = vmatmul.bf16.gmra.mxu0 %v865
      %v946 = vpop.f32.mrf.mxu0
      %v947 = vadd.f32 %v802, %v946
      %v948 = vpop.f32.mrf.mxu0
      %v949 = vadd.f32 %v804, %v948
      %950 = vmatmul.bf16.gmra.mxu0 %v866
      %v951 = vpop.f32.mrf.mxu0
      %v952 = vadd.f32 %v807, %v951
      %v953 = vpop.f32.mrf.mxu0
      %v954 = vadd.f32 %v809, %v953
      %955 = vmatmul.bf16.gmra.mxu0 %v867
      %v956 = vpop.f32.mrf.mxu0
      %v957 = vadd.f32 %v812, %v956
      %v958 = vpop.f32.mrf.mxu0
      %v959 = vadd.f32 %v814, %v958
      %960 = vmatmul.bf16.gmra.mxu0 %v868
      %v961 = vpop.f32.mrf.mxu0
      %v962 = vadd.f32 %v817, %v961
      %v963 = vpop.f32.mrf.mxu0
      %v964 = vadd.f32 %v819, %v963
      %965 = vmatmul.bf16.gmra.mxu0 %v869
      %v966 = vpop.f32.mrf.mxu0
      %v967 = vadd.f32 %v822, %v966
      %v968 = vpop.f32.mrf.mxu0
      %v969 = vadd.f32 %v824, %v968
      %970 = vmatmul.bf16.gmra.mxu0 %v870
      %v971 = vpop.f32.mrf.mxu0
      %v972 = vadd.f32 %v827, %v971
      %v973 = vpop.f32.mrf.mxu0
      %v974 = vadd.f32 %v829, %v973
      %975 = vdwg.mxu0
      %vm984 = vcmask 1042432
      %vm985 = vcmask 1046532
      %vm986 = vmor %vm984, %vm985
      %v987 = vrot.slane %v444, 5
      %v988 = vrot.slane %v987, 4
      %v989 = vrot.slane %v445, 5
      %v990 = vsel %vm986, %v988, %v989
      %v991 = vrot.slane %v989, 4
      %v992 = vrot.slane %v446, 5
      %v993 = vsel %vm986, %v991, %v992
      %v994 = vrot.slane %v447, 5
      %v995 = vrot.slane %v994, 4
      %v996 = vrot.slane %v448, 5
      %v997 = vsel %vm986, %v995, %v996
      %v998 = vrot.slane %v996, 4
      %v999 = vrot.slane %v449, 5
      %v1000 = vsel %vm986, %v998, %v999
      %v1001 = vrot.slane %v450, 5
      %v1002 = vrot.slane %v1001, 4
      %v1003 = vrot.slane %v451, 5
      %v1004 = vsel %vm986, %v1002, %v1003
      %v1005 = vrot.slane %v1003, 4
      %v1006 = vrot.slane %v452, 5
      %v1007 = vsel %vm986, %v1005, %v1006
      %v1008 = vrot.slane %v453, 5
      %v1009 = vrot.slane %v1008, 4
      %v1010 = vrot.slane %v454, 5
      %v1011 = vsel %vm986, %v1009, %v1010
      %v1012 = vrot.slane %v1010, 4
      %v1013 = vrot.slane %v455, 5
      %v1014 = vsel %vm986, %v1012, %v1013
      %v1015 = vrot.slane %v456, 5
      %v1016 = vrot.slane %v1015, 4
      %v1017 = vrot.slane %v457, 5
      %v1018 = vsel %vm986, %v1016, %v1017
      %v1019 = vrot.slane %v1017, 4
      %v1020 = vrot.slane %v458, 5
      %v1021 = vsel %vm986, %v1019, %v1020
      %v1022 = vrot.slane %v459, 5
      %v1023 = vrot.slane %v1022, 4
      %v1024 = vrot.slane %v460, 5
      %v1025 = vsel %vm986, %v1023, %v1024
      %v1026 = vrot.slane %v1024, 4
      %v1027 = vrot.slane %v461, 5
      %v1028 = vsel %vm986, %v1026, %v1027
      %v1029 = vrot.slane %v462, 5
      %v1030 = vrot.slane %v1029, 4
      %v1031 = vrot.slane %v463, 5
      %v1032 = vsel %vm986, %v1030, %v1031
      %v1033 = vrot.slane %v1031, 4
      %v1034 = vrot.slane %v464, 5
      %v1035 = vsel %vm986, %v1033, %v1034
      %v1036 = vrot.slane %v465, 5
      %v1037 = vrot.slane %v1036, 4
      %v1038 = vrot.slane %v466, 5
      %v1039 = vsel %vm986, %v1037, %v1038
      %v1040 = vrot.slane %v1038, 4
      %v1041 = vrot.slane %v467, 5
      %v1042 = vsel %vm986, %v1040, %v1041
      %s1043 = scalar_lea.vmem %s1, 128
      %v1044 = vld [vmem:[%s1043] sm:$0xf]
      %v1045 = vld [vmem:[%s1043 + $0x4] sm:$0xf]
      %v1046 = vld [vmem:[%s1043 + $0x8] sm:$0xf]
      %v1047 = vld [vmem:[%s1043 + $0xc] sm:$0xf]
      %v1048 = vld [vmem:[%s1043 + $0x10] sm:$0xf]
      %v1049 = vld [vmem:[%s1043 + $0x14] sm:$0xf]
      %v1050 = vld [vmem:[%s1043 + $0x18] sm:$0xf]
      %v1051 = vld [vmem:[%s1043 + $0x1c] sm:$0xf]
      %v1052 = vld [vmem:[%s1043 + $0x20] sm:$0xf]
      %v1053 = vld [vmem:[%s1043 + $0x24] sm:$0xf]
      %v1054 = vld [vmem:[%s1043 + $0x28] sm:$0xf]
      %v1055 = vld [vmem:[%s1043 + $0x2c] sm:$0xf]
      %v1056 = vld [vmem:[%s1043 + $0x30] sm:$0xf]
      %v1057 = vld [vmem:[%s1043 + $0x34] sm:$0xf]
      %v1058 = vld [vmem:[%s1043 + $0x38] sm:$0xf]
      %v1059 = vld [vmem:[%s1043 + $0x3c] sm:$0xf]
      %v1060 = vunpack.c.l.b16 %v990
      %v1061 = vunpack.c.l.b16 %v993
      %v1062 = vunpack.c.l.b16 %v997
      %v1063 = vunpack.c.l.b16 %v1000
      %v1064 = vunpack.c.l.b16 %v1004
      %v1065 = vunpack.c.l.b16 %v1007
      %v1066 = vunpack.c.l.b16 %v1011
      %v1067 = vunpack.c.l.b16 %v1014
      %v1068 = vunpack.c.l.b16 %v1018
      %v1069 = vunpack.c.l.b16 %v1021
      %v1070 = vunpack.c.l.b16 %v1025
      %v1071 = vunpack.c.l.b16 %v1028
      %v1072 = vunpack.c.l.b16 %v1032
      %v1073 = vunpack.c.l.b16 %v1035
      %v1074 = vunpack.c.l.b16 %v1039
      %v1075 = vunpack.c.l.b16 %v1042
      %v1076 = vpack.c.b16 %v1061, %v1060
      %v1077 = vpack.c.b16 %v1063, %v1062
      %v1078 = vpack.c.b16 %v1065, %v1064
      %v1079 = vpack.c.b16 %v1067, %v1066
      %v1080 = vpack.c.b16 %v1069, %v1068
      %v1081 = vpack.c.b16 %v1071, %v1070
      %v1082 = vpack.c.b16 %v1073, %v1072
      %v1083 = vpack.c.b16 %v1075, %v1074
      %v1108 = vunpack.c.l.b16 %v1044
      %v1109 = vunpack.c.l.b16 %v1045
      %v1110 = vunpack.c.l.b16 %v1046
      %v1111 = vunpack.c.l.b16 %v1047
      %v1112 = vunpack.c.l.b16 %v1048
      %v1113 = vunpack.c.l.b16 %v1049
      %v1114 = vunpack.c.l.b16 %v1050
      %v1115 = vunpack.c.l.b16 %v1051
      %v1116 = vunpack.c.l.b16 %v1052
      %v1117 = vunpack.c.l.b16 %v1053
      %v1118 = vunpack.c.l.b16 %v1054
      %v1119 = vunpack.c.l.b16 %v1055
      %v1120 = vunpack.c.l.b16 %v1056
      %v1121 = vunpack.c.l.b16 %v1057
      %v1122 = vunpack.c.l.b16 %v1058
      %v1123 = vunpack.c.l.b16 %v1059
      %v1124 = vpack.c.b16 %v1109, %v1108
      %v1125 = vpack.c.b16 %v1111, %v1110
      %v1126 = vpack.c.b16 %v1113, %v1112
      %v1127 = vpack.c.b16 %v1115, %v1114
      %v1128 = vpack.c.b16 %v1117, %v1116
      %v1129 = vpack.c.b16 %v1119, %v1118
      %v1130 = vpack.c.b16 %v1121, %v1120
      %v1131 = vpack.c.b16 %v1123, %v1122
      %1140 = vmatpush.bf16.msra.mxu0 %v1131
      %1141 = vmatpush.bf16.msra.mxu0 %v1130
      %1142 = vmatpush.bf16.msra.mxu0 %v1129
      %1143 = vmatpush.bf16.msra.mxu0 %v1128
      %1144 = vmatpush.bf16.msra.mxu0 %v1127
      %1145 = vmatpush.bf16.msra.mxu0 %v1126
      %1146 = vmatpush.bf16.msra.mxu0 %v1125
      %1147 = vmatpush.bf16.msra.mxu0 %v1124
      %1148 = vmatmul.bf16.gmra.mxu0 %v1076
      %v1149 = vpop.f32.mrf.mxu0
      %v1150 = vadd.f32 0.0, %v1149
      %v1151 = vpop.f32.mrf.mxu0
      %v1152 = vadd.f32 0.0, %v1151
      %1153 = vmatmul.bf16.gmra.mxu0 %v1077
      %v1154 = vpop.f32.mrf.mxu0
      %v1155 = vadd.f32 0.0, %v1154
      %v1156 = vpop.f32.mrf.mxu0
      %v1157 = vadd.f32 0.0, %v1156
      %1158 = vmatmul.bf16.gmra.mxu0 %v1078
      %v1159 = vpop.f32.mrf.mxu0
      %v1160 = vadd.f32 0.0, %v1159
      %v1161 = vpop.f32.mrf.mxu0
      %v1162 = vadd.f32 0.0, %v1161
      %1163 = vmatmul.bf16.gmra.mxu0 %v1079
      %v1164 = vpop.f32.mrf.mxu0
      %v1165 = vadd.f32 0.0, %v1164
      %v1166 = vpop.f32.mrf.mxu0
      %v1167 = vadd.f32 0.0, %v1166
      %1168 = vmatmul.bf16.gmra.mxu0 %v1080
      %v1169 = vpop.f32.mrf.mxu0
      %v1170 = vadd.f32 0.0, %v1169
      %v1171 = vpop.f32.mrf.mxu0
      %v1172 = vadd.f32 0.0, %v1171
      %1173 = vmatmul.bf16.gmra.mxu0 %v1081
      %v1174 = vpop.f32.mrf.mxu0
      %v1175 = vadd.f32 0.0, %v1174
      %v1176 = vpop.f32.mrf.mxu0
      %v1177 = vadd.f32 0.0, %v1176
      %1178 = vmatmul.bf16.gmra.mxu0 %v1082
      %v1179 = vpop.f32.mrf.mxu0
      %v1180 = vadd.f32 0.0, %v1179
      %v1181 = vpop.f32.mrf.mxu0
      %v1182 = vadd.f32 0.0, %v1181
      %1183 = vmatmul.bf16.gmra.mxu0 %v1083
      %v1184 = vpop.f32.mrf.mxu0
      %v1185 = vadd.f32 0.0, %v1184
      %v1186 = vpop.f32.mrf.mxu0
      %v1187 = vadd.f32 0.0, %v1186
      %1188 = vdwg.mxu0
      %v1189 = vadd.f32 %v937, %v1150
      %v1190 = vadd.f32 %v939, %v1152
      %v1191 = vadd.f32 %v942, %v1155
      %v1192 = vadd.f32 %v944, %v1157
      %v1193 = vadd.f32 %v947, %v1160
      %v1194 = vadd.f32 %v949, %v1162
      %v1195 = vadd.f32 %v952, %v1165
      %v1196 = vadd.f32 %v954, %v1167
      %v1197 = vadd.f32 %v957, %v1170
      %v1198 = vadd.f32 %v959, %v1172
      %v1199 = vadd.f32 %v962, %v1175
      %v1200 = vadd.f32 %v964, %v1177
      %v1201 = vadd.f32 %v967, %v1180
      %v1202 = vadd.f32 %v969, %v1182
      %v1203 = vadd.f32 %v972, %v1185
      %v1204 = vadd.f32 %v974, %v1187
      %s1205 = scalar_lea.vmem %s1, 192
      %v1206 = vld [vmem:[%s1205] sm:$0xf]
      %v1207 = vld [vmem:[%s1205 + $0x4] sm:$0xf]
      %v1208 = vld [vmem:[%s1205 + $0x8] sm:$0xf]
      %v1209 = vld [vmem:[%s1205 + $0xc] sm:$0xf]
      %v1210 = vld [vmem:[%s1205 + $0x10] sm:$0xf]
      %v1211 = vld [vmem:[%s1205 + $0x14] sm:$0xf]
      %v1212 = vld [vmem:[%s1205 + $0x18] sm:$0xf]
      %v1213 = vld [vmem:[%s1205 + $0x1c] sm:$0xf]
      %v1214 = vld [vmem:[%s1205 + $0x20] sm:$0xf]
      %v1215 = vld [vmem:[%s1205 + $0x24] sm:$0xf]
      %v1216 = vld [vmem:[%s1205 + $0x28] sm:$0xf]
      %v1217 = vld [vmem:[%s1205 + $0x2c] sm:$0xf]
      %v1218 = vld [vmem:[%s1205 + $0x30] sm:$0xf]
      %v1219 = vld [vmem:[%s1205 + $0x34] sm:$0xf]
      %v1220 = vld [vmem:[%s1205 + $0x38] sm:$0xf]
      %v1221 = vld [vmem:[%s1205 + $0x3c] sm:$0xf]
      %v1224 = vunpack.c.l.b16 %v468
      %v1225 = vunpack.c.l.b16 %v469
      %v1226 = vpack.c.b16 %v1225, %v1224
      %v1244 = vunpack.c.l.b16 %v1206
      %v1245 = vunpack.c.l.b16 %v1207
      %v1246 = vunpack.c.l.b16 %v1208
      %v1247 = vunpack.c.l.b16 %v1209
      %v1248 = vunpack.c.l.b16 %v1210
      %v1249 = vunpack.c.l.b16 %v1211
      %v1250 = vunpack.c.l.b16 %v1212
      %v1251 = vunpack.c.l.b16 %v1213
      %v1252 = vunpack.c.l.b16 %v1214
      %v1253 = vunpack.c.l.b16 %v1215
      %v1254 = vunpack.c.l.b16 %v1216
      %v1255 = vunpack.c.l.b16 %v1217
      %v1256 = vunpack.c.l.b16 %v1218
      %v1257 = vunpack.c.l.b16 %v1219
      %v1258 = vunpack.c.l.b16 %v1220
      %v1259 = vunpack.c.l.b16 %v1221
      %v1260 = vpack.c.b16 %v1245, %v1244
      %v1261 = vpack.c.b16 %v1247, %v1246
      %v1262 = vpack.c.b16 %v1249, %v1248
      %v1263 = vpack.c.b16 %v1251, %v1250
      %v1264 = vpack.c.b16 %v1253, %v1252
      %v1265 = vpack.c.b16 %v1255, %v1254
      %v1266 = vpack.c.b16 %v1257, %v1256
      %v1267 = vpack.c.b16 %v1259, %v1258
      %1276 = vmatpush.bf16.msra.mxu0 %v1267
      %1277 = vmatpush.bf16.msra.mxu0 %v1266
      %1278 = vmatpush.bf16.msra.mxu0 %v1265
      %1279 = vmatpush.bf16.msra.mxu0 %v1264
      %1280 = vmatpush.bf16.msra.mxu0 %v1263
      %1281 = vmatpush.bf16.msra.mxu0 %v1262
      %1282 = vmatpush.bf16.msra.mxu0 %v1261
      %1283 = vmatpush.bf16.msra.mxu0 %v1260
      %1284 = vmatmul.bf16.gmra.mxu0 %v864
      %v1285 = vpop.f32.mrf.mxu0
      %v1286 = vadd.f32 0.0, %v1285
      %v1287 = vpop.f32.mrf.mxu0
      %v1288 = vadd.f32 0.0, %v1287
      %1289 = vmatmul.bf16.gmra.mxu0 %v865
      %v1290 = vpop.f32.mrf.mxu0
      %v1291 = vadd.f32 0.0, %v1290
      %v1292 = vpop.f32.mrf.mxu0
      %v1293 = vadd.f32 0.0, %v1292
      %1294 = vmatmul.bf16.gmra.mxu0 %v866
      %v1295 = vpop.f32.mrf.mxu0
      %v1296 = vadd.f32 0.0, %v1295
      %v1297 = vpop.f32.mrf.mxu0
      %v1298 = vadd.f32 0.0, %v1297
      %1299 = vmatmul.bf16.gmra.mxu0 %v867
      %v1300 = vpop.f32.mrf.mxu0
      %v1301 = vadd.f32 0.0, %v1300
      %v1302 = vpop.f32.mrf.mxu0
      %v1303 = vadd.f32 0.0, %v1302
      %1304 = vmatmul.bf16.gmra.mxu0 %v868
      %v1305 = vpop.f32.mrf.mxu0
      %v1306 = vadd.f32 0.0, %v1305
      %v1307 = vpop.f32.mrf.mxu0
      %v1308 = vadd.f32 0.0, %v1307
      %1309 = vmatmul.bf16.gmra.mxu0 %v869
      %v1310 = vpop.f32.mrf.mxu0
      %v1311 = vadd.f32 0.0, %v1310
      %v1312 = vpop.f32.mrf.mxu0
      %v1313 = vadd.f32 0.0, %v1312
      %1314 = vmatmul.bf16.gmra.mxu0 %v870
      %v1315 = vpop.f32.mrf.mxu0
      %v1316 = vadd.f32 0.0, %v1315
      %v1317 = vpop.f32.mrf.mxu0
      %v1318 = vadd.f32 0.0, %v1317
      %1319 = vmatmul.bf16.gmra.mxu0 %v1226
      %v1320 = vpop.f32.mrf.mxu0
      %v1321 = vadd.f32 0.0, %v1320
      %v1322 = vpop.f32.mrf.mxu0
      %v1323 = vadd.f32 0.0, %v1322
      %1324 = vdwg.mxu0
      %v1325 = vadd.f32 %v1189, %v1286
      %v1326 = vadd.f32 %v1190, %v1288
      %v1327 = vadd.f32 %v1191, %v1291
      %v1328 = vadd.f32 %v1192, %v1293
      %v1329 = vadd.f32 %v1193, %v1296
      %v1330 = vadd.f32 %v1194, %v1298
      %v1331 = vadd.f32 %v1195, %v1301
      %v1332 = vadd.f32 %v1196, %v1303
      %v1333 = vadd.f32 %v1197, %v1306
      %v1334 = vadd.f32 %v1198, %v1308
      %v1335 = vadd.f32 %v1199, %v1311
      %v1336 = vadd.f32 %v1200, %v1313
      %v1337 = vadd.f32 %v1201, %v1316
      %v1338 = vadd.f32 %v1202, %v1318
      %v1339 = vadd.f32 %v1203, %v1321
      %v1340 = vadd.f32 %v1204, %v1323
      %v1342 = vshrl.u32 %v468, 16
      %v1344 = vrot.slane %v1342, 4
      %v1345 = vshll.u32 %v468, 16
      %v1347 = vrot.slane %v1345, 5
      %v1348 = vor.u32 %v1344, %v1347
      %v1349 = vrot.slane %v1348, 4
      %v1351 = vshll.u32 %v469, 16
      %v1353 = vrot.slane %v1351, 5
      %v1354 = vsel %vm492, %v1349, %v1353
      %v1355 = vshrl.u32 %v469, 16
      %v1357 = vrot.slane %v1355, 4
      %v1358 = vor.u32 %v1357, %v1353
      %v1359 = vrot.slane %v1358, 4
      %v1361 = vshll.u32 %v470, 16
      %v1363 = vrot.slane %v1361, 5
      %v1364 = vsel %vm492, %v1359, %v1363
      %s1365 = scalar_lea.vmem %s1, 256
      %v1366 = vld [vmem:[%s1365] sm:$0xf]
      %v1367 = vld [vmem:[%s1365 + $0x4] sm:$0xf]
      %v1368 = vld [vmem:[%s1365 + $0x8] sm:$0xf]
      %v1369 = vld [vmem:[%s1365 + $0xc] sm:$0xf]
      %v1370 = vld [vmem:[%s1365 + $0x10] sm:$0xf]
      %v1371 = vld [vmem:[%s1365 + $0x14] sm:$0xf]
      %v1372 = vld [vmem:[%s1365 + $0x18] sm:$0xf]
      %v1373 = vld [vmem:[%s1365 + $0x1c] sm:$0xf]
      %v1374 = vld [vmem:[%s1365 + $0x20] sm:$0xf]
      %v1375 = vld [vmem:[%s1365 + $0x24] sm:$0xf]
      %v1376 = vld [vmem:[%s1365 + $0x28] sm:$0xf]
      %v1377 = vld [vmem:[%s1365 + $0x2c] sm:$0xf]
      %v1378 = vld [vmem:[%s1365 + $0x30] sm:$0xf]
      %v1379 = vld [vmem:[%s1365 + $0x34] sm:$0xf]
      %v1380 = vld [vmem:[%s1365 + $0x38] sm:$0xf]
      %v1381 = vld [vmem:[%s1365 + $0x3c] sm:$0xf]
      %v1382 = vunpack.c.l.b16 %v1354
      %v1383 = vunpack.c.l.b16 %v1364
      %v1384 = vpack.c.b16 %v1383, %v1382
      %v1402 = vunpack.c.l.b16 %v1366
      %v1403 = vunpack.c.l.b16 %v1367
      %v1404 = vunpack.c.l.b16 %v1368
      %v1405 = vunpack.c.l.b16 %v1369
      %v1406 = vunpack.c.l.b16 %v1370
      %v1407 = vunpack.c.l.b16 %v1371
      %v1408 = vunpack.c.l.b16 %v1372
      %v1409 = vunpack.c.l.b16 %v1373
      %v1410 = vunpack.c.l.b16 %v1374
      %v1411 = vunpack.c.l.b16 %v1375
      %v1412 = vunpack.c.l.b16 %v1376
      %v1413 = vunpack.c.l.b16 %v1377
      %v1414 = vunpack.c.l.b16 %v1378
      %v1415 = vunpack.c.l.b16 %v1379
      %v1416 = vunpack.c.l.b16 %v1380
      %v1417 = vunpack.c.l.b16 %v1381
      %v1418 = vpack.c.b16 %v1403, %v1402
      %v1419 = vpack.c.b16 %v1405, %v1404
      %v1420 = vpack.c.b16 %v1407, %v1406
      %v1421 = vpack.c.b16 %v1409, %v1408
      %v1422 = vpack.c.b16 %v1411, %v1410
      %v1423 = vpack.c.b16 %v1413, %v1412
      %v1424 = vpack.c.b16 %v1415, %v1414
      %v1425 = vpack.c.b16 %v1417, %v1416
      %1434 = vmatpush.bf16.msra.mxu0 %v1425
      %1435 = vmatpush.bf16.msra.mxu0 %v1424
      %1436 = vmatpush.bf16.msra.mxu0 %v1423
      %1437 = vmatpush.bf16.msra.mxu0 %v1422
      %1438 = vmatpush.bf16.msra.mxu0 %v1421
      %1439 = vmatpush.bf16.msra.mxu0 %v1420
      %1440 = vmatpush.bf16.msra.mxu0 %v1419
      %1441 = vmatpush.bf16.msra.mxu0 %v1418
      %1442 = vmatmul.bf16.gmra.mxu0 %v719
      %v1443 = vpop.f32.mrf.mxu0
      %v1444 = vadd.f32 0.0, %v1443
      %v1445 = vpop.f32.mrf.mxu0
      %v1446 = vadd.f32 0.0, %v1445
      %1447 = vmatmul.bf16.gmra.mxu0 %v720
      %v1448 = vpop.f32.mrf.mxu0
      %v1449 = vadd.f32 0.0, %v1448
      %v1450 = vpop.f32.mrf.mxu0
      %v1451 = vadd.f32 0.0, %v1450
      %1452 = vmatmul.bf16.gmra.mxu0 %v721
      %v1453 = vpop.f32.mrf.mxu0
      %v1454 = vadd.f32 0.0, %v1453
      %v1455 = vpop.f32.mrf.mxu0
      %v1456 = vadd.f32 0.0, %v1455
      %1457 = vmatmul.bf16.gmra.mxu0 %v722
      %v1458 = vpop.f32.mrf.mxu0
      %v1459 = vadd.f32 0.0, %v1458
      %v1460 = vpop.f32.mrf.mxu0
      %v1461 = vadd.f32 0.0, %v1460
      %1462 = vmatmul.bf16.gmra.mxu0 %v723
      %v1463 = vpop.f32.mrf.mxu0
      %v1464 = vadd.f32 0.0, %v1463
      %v1465 = vpop.f32.mrf.mxu0
      %v1466 = vadd.f32 0.0, %v1465
      %1467 = vmatmul.bf16.gmra.mxu0 %v724
      %v1468 = vpop.f32.mrf.mxu0
      %v1469 = vadd.f32 0.0, %v1468
      %v1470 = vpop.f32.mrf.mxu0
      %v1471 = vadd.f32 0.0, %v1470
      %1472 = vmatmul.bf16.gmra.mxu0 %v725
      %v1473 = vpop.f32.mrf.mxu0
      %v1474 = vadd.f32 0.0, %v1473
      %v1475 = vpop.f32.mrf.mxu0
      %v1476 = vadd.f32 0.0, %v1475
      %1477 = vmatmul.bf16.gmra.mxu0 %v1384
      %v1478 = vpop.f32.mrf.mxu0
      %v1479 = vadd.f32 0.0, %v1478
      %v1480 = vpop.f32.mrf.mxu0
      %v1481 = vadd.f32 0.0, %v1480
      %1482 = vdwg.mxu0
      %v1483 = vadd.f32 %v1325, %v1444
      %v1484 = vadd.f32 %v1326, %v1446
      %v1485 = vadd.f32 %v1327, %v1449
      %v1486 = vadd.f32 %v1328, %v1451
      %v1487 = vadd.f32 %v1329, %v1454
      %v1488 = vadd.f32 %v1330, %v1456
      %v1489 = vadd.f32 %v1331, %v1459
      %v1490 = vadd.f32 %v1332, %v1461
      %v1491 = vadd.f32 %v1333, %v1464
      %v1492 = vadd.f32 %v1334, %v1466
      %v1493 = vadd.f32 %v1335, %v1469
      %v1494 = vadd.f32 %v1336, %v1471
      %v1495 = vadd.f32 %v1337, %v1474
      %v1496 = vadd.f32 %v1338, %v1476
      %v1497 = vadd.f32 %v1339, %v1479
      %v1498 = vadd.f32 %v1340, %v1481
      %v1500 = vrot.slane %v468, 5
      %v1501 = vrot.slane %v1500, 4
      %v1502 = vrot.slane %v469, 5
      %v1503 = vsel %vm986, %v1501, %v1502
      %v1504 = vrot.slane %v1502, 4
      %v1505 = vrot.slane %v470, 5
      %v1506 = vsel %vm986, %v1504, %v1505
      %s1507 = scalar_lea.vmem %s1, 320
      %v1508 = vld [vmem:[%s1507] sm:$0xf]
      %v1509 = vld [vmem:[%s1507 + $0x4] sm:$0xf]
      %v1510 = vld [vmem:[%s1507 + $0x8] sm:$0xf]
      %v1511 = vld [vmem:[%s1507 + $0xc] sm:$0xf]
      %v1512 = vld [vmem:[%s1507 + $0x10] sm:$0xf]
      %v1513 = vld [vmem:[%s1507 + $0x14] sm:$0xf]
      %v1514 = vld [vmem:[%s1507 + $0x18] sm:$0xf]
      %v1515 = vld [vmem:[%s1507 + $0x1c] sm:$0xf]
      %v1516 = vld [vmem:[%s1507 + $0x20] sm:$0xf]
      %v1517 = vld [vmem:[%s1507 + $0x24] sm:$0xf]
      %v1518 = vld [vmem:[%s1507 + $0x28] sm:$0xf]
      %v1519 = vld [vmem:[%s1507 + $0x2c] sm:$0xf]
      %v1520 = vld [vmem:[%s1507 + $0x30] sm:$0xf]
      %v1521 = vld [vmem:[%s1507 + $0x34] sm:$0xf]
      %v1522 = vld [vmem:[%s1507 + $0x38] sm:$0xf]
      %v1523 = vld [vmem:[%s1507 + $0x3c] sm:$0xf]
      %v1524 = vunpack.c.l.b16 %v1503
      %v1525 = vunpack.c.l.b16 %v1506
      %v1526 = vpack.c.b16 %v1525, %v1524
      %v1544 = vunpack.c.l.b16 %v1508
      %v1545 = vunpack.c.l.b16 %v1509
      %v1546 = vunpack.c.l.b16 %v1510
      %v1547 = vunpack.c.l.b16 %v1511
      %v1548 = vunpack.c.l.b16 %v1512
      %v1549 = vunpack.c.l.b16 %v1513
      %v1550 = vunpack.c.l.b16 %v1514
      %v1551 = vunpack.c.l.b16 %v1515
      %v1552 = vunpack.c.l.b16 %v1516
      %v1553 = vunpack.c.l.b16 %v1517
      %v1554 = vunpack.c.l.b16 %v1518
      %v1555 = vunpack.c.l.b16 %v1519
      %v1556 = vunpack.c.l.b16 %v1520
      %v1557 = vunpack.c.l.b16 %v1521
      %v1558 = vunpack.c.l.b16 %v1522
      %v1559 = vunpack.c.l.b16 %v1523
      %v1560 = vpack.c.b16 %v1545, %v1544
      %v1561 = vpack.c.b16 %v1547, %v1546
      %v1562 = vpack.c.b16 %v1549, %v1548
      %v1563 = vpack.c.b16 %v1551, %v1550
      %v1564 = vpack.c.b16 %v1553, %v1552
      %v1565 = vpack.c.b16 %v1555, %v1554
      %v1566 = vpack.c.b16 %v1557, %v1556
      %v1567 = vpack.c.b16 %v1559, %v1558
      %1576 = vmatpush.bf16.msra.mxu0 %v1567
      %1577 = vmatpush.bf16.msra.mxu0 %v1566
      %1578 = vmatpush.bf16.msra.mxu0 %v1565
      %1579 = vmatpush.bf16.msra.mxu0 %v1564
      %1580 = vmatpush.bf16.msra.mxu0 %v1563
      %1581 = vmatpush.bf16.msra.mxu0 %v1562
      %1582 = vmatpush.bf16.msra.mxu0 %v1561
      %1583 = vmatpush.bf16.msra.mxu0 %v1560
      %1584 = vmatmul.bf16.gmra.mxu0 %v1077
      %v1585 = vpop.f32.mrf.mxu0
      %v1586 = vadd.f32 0.0, %v1585
      %v1587 = vpop.f32.mrf.mxu0
      %v1588 = vadd.f32 0.0, %v1587
      %1589 = vmatmul.bf16.gmra.mxu0 %v1078
      %v1590 = vpop.f32.mrf.mxu0
      %v1591 = vadd.f32 0.0, %v1590
      %v1592 = vpop.f32.mrf.mxu0
      %v1593 = vadd.f32 0.0, %v1592
      %1594 = vmatmul.bf16.gmra.mxu0 %v1079
      %v1595 = vpop.f32.mrf.mxu0
      %v1596 = vadd.f32 0.0, %v1595
      %v1597 = vpop.f32.mrf.mxu0
      %v1598 = vadd.f32 0.0, %v1597
      %1599 = vmatmul.bf16.gmra.mxu0 %v1080
      %v1600 = vpop.f32.mrf.mxu0
      %v1601 = vadd.f32 0.0, %v1600
      %v1602 = vpop.f32.mrf.mxu0
      %v1603 = vadd.f32 0.0, %v1602
      %1604 = vmatmul.bf16.gmra.mxu0 %v1081
      %v1605 = vpop.f32.mrf.mxu0
      %v1606 = vadd.f32 0.0, %v1605
      %v1607 = vpop.f32.mrf.mxu0
      %v1608 = vadd.f32 0.0, %v1607
      %1609 = vmatmul.bf16.gmra.mxu0 %v1082
      %v1610 = vpop.f32.mrf.mxu0
      %v1611 = vadd.f32 0.0, %v1610
      %v1612 = vpop.f32.mrf.mxu0
      %v1613 = vadd.f32 0.0, %v1612
      %1614 = vmatmul.bf16.gmra.mxu0 %v1083
      %v1615 = vpop.f32.mrf.mxu0
      %v1616 = vadd.f32 0.0, %v1615
      %v1617 = vpop.f32.mrf.mxu0
      %v1618 = vadd.f32 0.0, %v1617
      %1619 = vmatmul.bf16.gmra.mxu0 %v1526
      %v1620 = vpop.f32.mrf.mxu0
      %v1621 = vadd.f32 0.0, %v1620
      %v1622 = vpop.f32.mrf.mxu0
      %v1623 = vadd.f32 0.0, %v1622
      %1624 = vdwg.mxu0
      %v1625 = vadd.f32 %v1483, %v1586
      %v1626 = vadd.f32 %v1484, %v1588
      %v1627 = vadd.f32 %v1485, %v1591
      %v1628 = vadd.f32 %v1486, %v1593
      %v1629 = vadd.f32 %v1487, %v1596
      %v1630 = vadd.f32 %v1488, %v1598
      %v1631 = vadd.f32 %v1489, %v1601
      %v1632 = vadd.f32 %v1490, %v1603
      %v1633 = vadd.f32 %v1491, %v1606
      %v1634 = vadd.f32 %v1492, %v1608
      %v1635 = vadd.f32 %v1493, %v1611
      %v1636 = vadd.f32 %v1494, %v1613
      %v1637 = vadd.f32 %v1495, %v1616
      %v1638 = vadd.f32 %v1496, %v1618
      %v1639 = vadd.f32 %v1497, %v1621
      %v1640 = vadd.f32 %v1498, %v1623
      %s1641 = scalar_lea.vmem %s1, 384
      %v1642 = vld [vmem:[%s1641] sm:$0xf]
      %v1643 = vld [vmem:[%s1641 + $0x4] sm:$0xf]
      %v1644 = vld [vmem:[%s1641 + $0x8] sm:$0xf]
      %v1645 = vld [vmem:[%s1641 + $0xc] sm:$0xf]
      %v1646 = vld [vmem:[%s1641 + $0x10] sm:$0xf]
      %v1647 = vld [vmem:[%s1641 + $0x14] sm:$0xf]
      %v1648 = vld [vmem:[%s1641 + $0x18] sm:$0xf]
      %v1649 = vld [vmem:[%s1641 + $0x1c] sm:$0xf]
      %v1650 = vld [vmem:[%s1641 + $0x20] sm:$0xf]
      %v1651 = vld [vmem:[%s1641 + $0x24] sm:$0xf]
      %v1652 = vld [vmem:[%s1641 + $0x28] sm:$0xf]
      %v1653 = vld [vmem:[%s1641 + $0x2c] sm:$0xf]
      %v1654 = vld [vmem:[%s1641 + $0x30] sm:$0xf]
      %v1655 = vld [vmem:[%s1641 + $0x34] sm:$0xf]
      %v1656 = vld [vmem:[%s1641 + $0x38] sm:$0xf]
      %v1657 = vld [vmem:[%s1641 + $0x3c] sm:$0xf]
      %v1660 = vunpack.c.l.b16 %v471
      %v1661 = vunpack.c.l.b16 %v472
      %v1662 = vpack.c.b16 %v1661, %v1660
      %v1680 = vunpack.c.l.b16 %v1642
      %v1681 = vunpack.c.l.b16 %v1643
      %v1682 = vunpack.c.l.b16 %v1644
      %v1683 = vunpack.c.l.b16 %v1645
      %v1684 = vunpack.c.l.b16 %v1646
      %v1685 = vunpack.c.l.b16 %v1647
      %v1686 = vunpack.c.l.b16 %v1648
      %v1687 = vunpack.c.l.b16 %v1649
      %v1688 = vunpack.c.l.b16 %v1650
      %v1689 = vunpack.c.l.b16 %v1651
      %v1690 = vunpack.c.l.b16 %v1652
      %v1691 = vunpack.c.l.b16 %v1653
      %v1692 = vunpack.c.l.b16 %v1654
      %v1693 = vunpack.c.l.b16 %v1655
      %v1694 = vunpack.c.l.b16 %v1656
      %v1695 = vunpack.c.l.b16 %v1657
      %v1696 = vpack.c.b16 %v1681, %v1680
      %v1697 = vpack.c.b16 %v1683, %v1682
      %v1698 = vpack.c.b16 %v1685, %v1684
      %v1699 = vpack.c.b16 %v1687, %v1686
      %v1700 = vpack.c.b16 %v1689, %v1688
      %v1701 = vpack.c.b16 %v1691, %v1690
      %v1702 = vpack.c.b16 %v1693, %v1692
      %v1703 = vpack.c.b16 %v1695, %v1694
      %1712 = vmatpush.bf16.msra.mxu0 %v1703
      %1713 = vmatpush.bf16.msra.mxu0 %v1702
      %1714 = vmatpush.bf16.msra.mxu0 %v1701
      %1715 = vmatpush.bf16.msra.mxu0 %v1700
      %1716 = vmatpush.bf16.msra.mxu0 %v1699
      %1717 = vmatpush.bf16.msra.mxu0 %v1698
      %1718 = vmatpush.bf16.msra.mxu0 %v1697
      %1719 = vmatpush.bf16.msra.mxu0 %v1696
      %1720 = vmatmul.bf16.gmra.mxu0 %v865
      %v1721 = vpop.f32.mrf.mxu0
      %v1722 = vadd.f32 0.0, %v1721
      %v1723 = vpop.f32.mrf.mxu0
      %v1724 = vadd.f32 0.0, %v1723
      %1725 = vmatmul.bf16.gmra.mxu0 %v866
      %v1726 = vpop.f32.mrf.mxu0
      %v1727 = vadd.f32 0.0, %v1726
      %v1728 = vpop.f32.mrf.mxu0
      %v1729 = vadd.f32 0.0, %v1728
      %1730 = vmatmul.bf16.gmra.mxu0 %v867
      %v1731 = vpop.f32.mrf.mxu0
      %v1732 = vadd.f32 0.0, %v1731
      %v1733 = vpop.f32.mrf.mxu0
      %v1734 = vadd.f32 0.0, %v1733
      %1735 = vmatmul.bf16.gmra.mxu0 %v868
      %v1736 = vpop.f32.mrf.mxu0
      %v1737 = vadd.f32 0.0, %v1736
      %v1738 = vpop.f32.mrf.mxu0
      %v1739 = vadd.f32 0.0, %v1738
      %1740 = vmatmul.bf16.gmra.mxu0 %v869
      %v1741 = vpop.f32.mrf.mxu0
      %v1742 = vadd.f32 0.0, %v1741
      %v1743 = vpop.f32.mrf.mxu0
      %v1744 = vadd.f32 0.0, %v1743
      %1745 = vmatmul.bf16.gmra.mxu0 %v870
      %v1746 = vpop.f32.mrf.mxu0
      %v1747 = vadd.f32 0.0, %v1746
      %v1748 = vpop.f32.mrf.mxu0
      %v1749 = vadd.f32 0.0, %v1748
      %1750 = vmatmul.bf16.gmra.mxu0 %v1226
      %v1751 = vpop.f32.mrf.mxu0
      %v1752 = vadd.f32 0.0, %v1751
      %v1753 = vpop.f32.mrf.mxu0
      %v1754 = vadd.f32 0.0, %v1753
      %1755 = vmatmul.bf16.gmra.mxu0 %v1662
      %v1756 = vpop.f32.mrf.mxu0
      %v1757 = vadd.f32 0.0, %v1756
      %v1758 = vpop.f32.mrf.mxu0
      %v1759 = vadd.f32 0.0, %v1758
      %1760 = vdwg.mxu0
      %v1761 = vadd.f32 %v1625, %v1722
      %v1762 = vadd.f32 %v1626, %v1724
      %v1763 = vadd.f32 %v1627, %v1727
      %v1764 = vadd.f32 %v1628, %v1729
      %v1765 = vadd.f32 %v1629, %v1732
      %v1766 = vadd.f32 %v1630, %v1734
      %v1767 = vadd.f32 %v1631, %v1737
      %v1768 = vadd.f32 %v1632, %v1739
      %v1769 = vadd.f32 %v1633, %v1742
      %v1770 = vadd.f32 %v1634, %v1744
      %v1771 = vadd.f32 %v1635, %v1747
      %v1772 = vadd.f32 %v1636, %v1749
      %v1773 = vadd.f32 %v1637, %v1752
      %v1774 = vadd.f32 %v1638, %v1754
      %v1775 = vadd.f32 %v1639, %v1757
      %v1776 = vadd.f32 %v1640, %v1759
      %v1778 = vshrl.u32 %v471, 16
      %v1780 = vrot.slane %v1778, 4
      %v1781 = vshll.u32 %v471, 16
      %v1783 = vrot.slane %v1781, 5
      %v1784 = vor.u32 %v1780, %v1783
      %v1785 = vrot.slane %v1784, 4
      %v1787 = vshll.u32 %v472, 16
      %v1789 = vrot.slane %v1787, 5
      %v1790 = vsel %vm492, %v1785, %v1789
      %v1791 = vshrl.u32 %v472, 16
      %v1793 = vrot.slane %v1791, 4
      %v1794 = vor.u32 %v1793, %v1789
      %v1795 = vrot.slane %v1794, 4
      %v1797 = vshll.u32 %v473, 16
      %v1799 = vrot.slane %v1797, 5
      %v1800 = vsel %vm492, %v1795, %v1799
      %s1801 = scalar_lea.vmem %s1, 448
      %v1802 = vld [vmem:[%s1801] sm:$0xf]
      %v1803 = vld [vmem:[%s1801 + $0x4] sm:$0xf]
      %v1804 = vld [vmem:[%s1801 + $0x8] sm:$0xf]
      %v1805 = vld [vmem:[%s1801 + $0xc] sm:$0xf]
      %v1806 = vld [vmem:[%s1801 + $0x10] sm:$0xf]
      %v1807 = vld [vmem:[%s1801 + $0x14] sm:$0xf]
      %v1808 = vld [vmem:[%s1801 + $0x18] sm:$0xf]
      %v1809 = vld [vmem:[%s1801 + $0x1c] sm:$0xf]
      %v1810 = vld [vmem:[%s1801 + $0x20] sm:$0xf]
      %v1811 = vld [vmem:[%s1801 + $0x24] sm:$0xf]
      %v1812 = vld [vmem:[%s1801 + $0x28] sm:$0xf]
      %v1813 = vld [vmem:[%s1801 + $0x2c] sm:$0xf]
      %v1814 = vld [vmem:[%s1801 + $0x30] sm:$0xf]
      %v1815 = vld [vmem:[%s1801 + $0x34] sm:$0xf]
      %v1816 = vld [vmem:[%s1801 + $0x38] sm:$0xf]
      %v1817 = vld [vmem:[%s1801 + $0x3c] sm:$0xf]
      %v1818 = vunpack.c.l.b16 %v1790
      %v1819 = vunpack.c.l.b16 %v1800
      %v1820 = vpack.c.b16 %v1819, %v1818
      %v1838 = vunpack.c.l.b16 %v1802
      %v1839 = vunpack.c.l.b16 %v1803
      %v1840 = vunpack.c.l.b16 %v1804
      %v1841 = vunpack.c.l.b16 %v1805
      %v1842 = vunpack.c.l.b16 %v1806
      %v1843 = vunpack.c.l.b16 %v1807
      %v1844 = vunpack.c.l.b16 %v1808
      %v1845 = vunpack.c.l.b16 %v1809
      %v1846 = vunpack.c.l.b16 %v1810
      %v1847 = vunpack.c.l.b16 %v1811
      %v1848 = vunpack.c.l.b16 %v1812
      %v1849 = vunpack.c.l.b16 %v1813
      %v1850 = vunpack.c.l.b16 %v1814
      %v1851 = vunpack.c.l.b16 %v1815
      %v1852 = vunpack.c.l.b16 %v1816
      %v1853 = vunpack.c.l.b16 %v1817
      %v1854 = vpack.c.b16 %v1839, %v1838
      %v1855 = vpack.c.b16 %v1841, %v1840
      %v1856 = vpack.c.b16 %v1843, %v1842
      %v1857 = vpack.c.b16 %v1845, %v1844
      %v1858 = vpack.c.b16 %v1847, %v1846
      %v1859 = vpack.c.b16 %v1849, %v1848
      %v1860 = vpack.c.b16 %v1851, %v1850
      %v1861 = vpack.c.b16 %v1853, %v1852
      %1870 = vmatpush.bf16.msra.mxu0 %v1861
      %1871 = vmatpush.bf16.msra.mxu0 %v1860
      %1872 = vmatpush.bf16.msra.mxu0 %v1859
      %1873 = vmatpush.bf16.msra.mxu0 %v1858
      %1874 = vmatpush.bf16.msra.mxu0 %v1857
      %1875 = vmatpush.bf16.msra.mxu0 %v1856
      %1876 = vmatpush.bf16.msra.mxu0 %v1855
      %1877 = vmatpush.bf16.msra.mxu0 %v1854
      %1878 = vmatmul.bf16.gmra.mxu0 %v720
      %v1879 = vpop.f32.mrf.mxu0
      %v1880 = vadd.f32 0.0, %v1879
      %v1881 = vpop.f32.mrf.mxu0
      %v1882 = vadd.f32 0.0, %v1881
      %1883 = vmatmul.bf16.gmra.mxu0 %v721
      %v1884 = vpop.f32.mrf.mxu0
      %v1885 = vadd.f32 0.0, %v1884
      %v1886 = vpop.f32.mrf.mxu0
      %v1887 = vadd.f32 0.0, %v1886
      %1888 = vmatmul.bf16.gmra.mxu0 %v722
      %v1889 = vpop.f32.mrf.mxu0
      %v1890 = vadd.f32 0.0, %v1889
      %v1891 = vpop.f32.mrf.mxu0
      %v1892 = vadd.f32 0.0, %v1891
      %1893 = vmatmul.bf16.gmra.mxu0 %v723
      %v1894 = vpop.f32.mrf.mxu0
      %v1895 = vadd.f32 0.0, %v1894
      %v1896 = vpop.f32.mrf.mxu0
      %v1897 = vadd.f32 0.0, %v1896
      %1898 = vmatmul.bf16.gmra.mxu0 %v724
      %v1899 = vpop.f32.mrf.mxu0
      %v1900 = vadd.f32 0.0, %v1899
      %v1901 = vpop.f32.mrf.mxu0
      %v1902 = vadd.f32 0.0, %v1901
      %1903 = vmatmul.bf16.gmra.mxu0 %v725
      %v1904 = vpop.f32.mrf.mxu0
      %v1905 = vadd.f32 0.0, %v1904
      %v1906 = vpop.f32.mrf.mxu0
      %v1907 = vadd.f32 0.0, %v1906
      %1908 = vmatmul.bf16.gmra.mxu0 %v1384
      %v1909 = vpop.f32.mrf.mxu0
      %v1910 = vadd.f32 0.0, %v1909
      %v1911 = vpop.f32.mrf.mxu0
      %v1912 = vadd.f32 0.0, %v1911
      %1913 = vmatmul.bf16.gmra.mxu0 %v1820
      %v1914 = vpop.f32.mrf.mxu0
      %v1915 = vadd.f32 0.0, %v1914
      %v1916 = vpop.f32.mrf.mxu0
      %v1917 = vadd.f32 0.0, %v1916
      %1918 = vdwg.mxu0
      %v1919 = vadd.f32 %v1761, %v1880
      %v1920 = vadd.f32 %v1762, %v1882
      %v1921 = vadd.f32 %v1763, %v1885
      %v1922 = vadd.f32 %v1764, %v1887
      %v1923 = vadd.f32 %v1765, %v1890
      %v1924 = vadd.f32 %v1766, %v1892
      %v1925 = vadd.f32 %v1767, %v1895
      %v1926 = vadd.f32 %v1768, %v1897
      %v1927 = vadd.f32 %v1769, %v1900
      %v1928 = vadd.f32 %v1770, %v1902
      %v1929 = vadd.f32 %v1771, %v1905
      %v1930 = vadd.f32 %v1772, %v1907
      %v1931 = vadd.f32 %v1773, %v1910
      %v1932 = vadd.f32 %v1774, %v1912
      %v1933 = vadd.f32 %v1775, %v1915
      %v1934 = vadd.f32 %v1776, %v1917
      %v1936 = vrot.slane %v471, 5
      %v1937 = vrot.slane %v1936, 4
      %v1938 = vrot.slane %v472, 5
      %v1939 = vsel %vm986, %v1937, %v1938
      %v1940 = vrot.slane %v1938, 4
      %v1941 = vrot.slane %v473, 5
      %v1942 = vsel %vm986, %v1940, %v1941
      %s1943 = scalar_lea.vmem %s1, 512
      %v1944 = vld [vmem:[%s1943] sm:$0xf]
      %v1945 = vld [vmem:[%s1943 + $0x4] sm:$0xf]
      %v1946 = vld [vmem:[%s1943 + $0x8] sm:$0xf]
      %v1947 = vld [vmem:[%s1943 + $0xc] sm:$0xf]
      %v1948 = vld [vmem:[%s1943 + $0x10] sm:$0xf]
      %v1949 = vld [vmem:[%s1943 + $0x14] sm:$0xf]
      %v1950 = vld [vmem:[%s1943 + $0x18] sm:$0xf]
      %v1951 = vld [vmem:[%s1943 + $0x1c] sm:$0xf]
      %v1952 = vld [vmem:[%s1943 + $0x20] sm:$0xf]
      %v1953 = vld [vmem:[%s1943 + $0x24] sm:$0xf]
      %v1954 = vld [vmem:[%s1943 + $0x28] sm:$0xf]
      %v1955 = vld [vmem:[%s1943 + $0x2c] sm:$0xf]
      %v1956 = vld [vmem:[%s1943 + $0x30] sm:$0xf]
      %v1957 = vld [vmem:[%s1943 + $0x34] sm:$0xf]
      %v1958 = vld [vmem:[%s1943 + $0x38] sm:$0xf]
      %v1959 = vld [vmem:[%s1943 + $0x3c] sm:$0xf]
      %v1960 = vunpack.c.l.b16 %v1939
      %v1961 = vunpack.c.l.b16 %v1942
      %v1962 = vpack.c.b16 %v1961, %v1960
      %v1980 = vunpack.c.l.b16 %v1944
      %v1981 = vunpack.c.l.b16 %v1945
      %v1982 = vunpack.c.l.b16 %v1946
      %v1983 = vunpack.c.l.b16 %v1947
      %v1984 = vunpack.c.l.b16 %v1948
      %v1985 = vunpack.c.l.b16 %v1949
      %v1986 = vunpack.c.l.b16 %v1950
      %v1987 = vunpack.c.l.b16 %v1951
      %v1988 = vunpack.c.l.b16 %v1952
      %v1989 = vunpack.c.l.b16 %v1953
      %v1990 = vunpack.c.l.b16 %v1954
      %v1991 = vunpack.c.l.b16 %v1955
      %v1992 = vunpack.c.l.b16 %v1956
      %v1993 = vunpack.c.l.b16 %v1957
      %v1994 = vunpack.c.l.b16 %v1958
      %v1995 = vunpack.c.l.b16 %v1959
      %v1996 = vpack.c.b16 %v1981, %v1980
      %v1997 = vpack.c.b16 %v1983, %v1982
      %v1998 = vpack.c.b16 %v1985, %v1984
      %v1999 = vpack.c.b16 %v1987, %v1986
      %v2000 = vpack.c.b16 %v1989, %v1988
      %v2001 = vpack.c.b16 %v1991, %v1990
      %v2002 = vpack.c.b16 %v1993, %v1992
      %v2003 = vpack.c.b16 %v1995, %v1994
      %2012 = vmatpush.bf16.msra.mxu0 %v2003
      %2013 = vmatpush.bf16.msra.mxu0 %v2002
      %2014 = vmatpush.bf16.msra.mxu0 %v2001
      %2015 = vmatpush.bf16.msra.mxu0 %v2000
      %2016 = vmatpush.bf16.msra.mxu0 %v1999
      %2017 = vmatpush.bf16.msra.mxu0 %v1998
      %2018 = vmatpush.bf16.msra.mxu0 %v1997
      %2019 = vmatpush.bf16.msra.mxu0 %v1996
      %2020 = vmatmul.bf16.gmra.mxu0 %v1078
      %v2021 = vpop.f32.mrf.mxu0
      %v2022 = vadd.f32 0.0, %v2021
      %v2023 = vpop.f32.mrf.mxu0
      %v2024 = vadd.f32 0.0, %v2023
      %2025 = vmatmul.bf16.gmra.mxu0 %v1079
      %v2026 = vpop.f32.mrf.mxu0
      %v2027 = vadd.f32 0.0, %v2026
      %v2028 = vpop.f32.mrf.mxu0
      %v2029 = vadd.f32 0.0, %v2028
      %2030 = vmatmul.bf16.gmra.mxu0 %v1080
      %v2031 = vpop.f32.mrf.mxu0
      %v2032 = vadd.f32 0.0, %v2031
      %v2033 = vpop.f32.mrf.mxu0
      %v2034 = vadd.f32 0.0, %v2033
      %2035 = vmatmul.bf16.gmra.mxu0 %v1081
      %v2036 = vpop.f32.mrf.mxu0
      %v2037 = vadd.f32 0.0, %v2036
      %v2038 = vpop.f32.mrf.mxu0
      %v2039 = vadd.f32 0.0, %v2038
      %2040 = vmatmul.bf16.gmra.mxu0 %v1082
      %v2041 = vpop.f32.mrf.mxu0
      %v2042 = vadd.f32 0.0, %v2041
      %v2043 = vpop.f32.mrf.mxu0
      %v2044 = vadd.f32 0.0, %v2043
      %2045 = vmatmul.bf16.gmra.mxu0 %v1083
      %v2046 = vpop.f32.mrf.mxu0
      %v2047 = vadd.f32 0.0, %v2046
      %v2048 = vpop.f32.mrf.mxu0
      %v2049 = vadd.f32 0.0, %v2048
      %2050 = vmatmul.bf16.gmra.mxu0 %v1526
      %v2051 = vpop.f32.mrf.mxu0
      %v2052 = vadd.f32 0.0, %v2051
      %v2053 = vpop.f32.mrf.mxu0
      %v2054 = vadd.f32 0.0, %v2053
      %2055 = vmatmul.bf16.gmra.mxu0 %v1962
      %v2056 = vpop.f32.mrf.mxu0
      %v2057 = vadd.f32 0.0, %v2056
      %v2058 = vpop.f32.mrf.mxu0
      %v2059 = vadd.f32 0.0, %v2058
      %2060 = vdwg.mxu0
      %v2061 = vadd.f32 %v1919, %v2022
      %v2062 = vadd.f32 %v1920, %v2024
      %v2063 = vadd.f32 %v1921, %v2027
      %v2064 = vadd.f32 %v1922, %v2029
      %v2065 = vadd.f32 %v1923, %v2032
      %v2066 = vadd.f32 %v1924, %v2034
      %v2067 = vadd.f32 %v1925, %v2037
      %v2068 = vadd.f32 %v1926, %v2039
      %v2069 = vadd.f32 %v1927, %v2042
      %v2070 = vadd.f32 %v1928, %v2044
      %v2071 = vadd.f32 %v1929, %v2047
      %v2072 = vadd.f32 %v1930, %v2049
      %v2073 = vadd.f32 %v1931, %v2052
      %v2074 = vadd.f32 %v1932, %v2054
      %v2075 = vadd.f32 %v1933, %v2057
      %v2076 = vadd.f32 %v1934, %v2059
      %v2077 = vld [vmem:[%s2] sm:$0x1]
      %v2078 = vperm.slane %v2077, 0
      %v2079 = vadd.f32 %v2061, %v2078
      %v2080 = vadd.f32 %v2062, %v2078
      %v2081 = vadd.f32 %v2063, %v2078
      %v2082 = vadd.f32 %v2064, %v2078
      %v2083 = vadd.f32 %v2065, %v2078
      %v2084 = vadd.f32 %v2066, %v2078
      %v2085 = vadd.f32 %v2067, %v2078
      %v2086 = vadd.f32 %v2068, %v2078
      %v2087 = vadd.f32 %v2069, %v2078
      %v2088 = vadd.f32 %v2070, %v2078
      %v2089 = vadd.f32 %v2071, %v2078
      %v2090 = vadd.f32 %v2072, %v2078
      %v2091 = vadd.f32 %v2073, %v2078
      %v2092 = vadd.f32 %v2074, %v2078
      %v2093 = vadd.f32 %v2075, %v2078
      %v2094 = vadd.f32 %v2076, %v2078
      %2095 = vst [vmem:[%s248] sm:$0xff] %v2079
      %2096 = vst [vmem:[%s248 + $0x8] sm:$0xff] %v2080
      %2097 = vst [vmem:[%s248 + $0x10] sm:$0xff] %v2081
      %2098 = vst [vmem:[%s248 + $0x18] sm:$0xff] %v2082
      %2099 = vst [vmem:[%s248 + $0x20] sm:$0xff] %v2083
      %2100 = vst [vmem:[%s248 + $0x28] sm:$0xff] %v2084
      %2101 = vst [vmem:[%s248 + $0x30] sm:$0xff] %v2085
      %2102 = vst [vmem:[%s248 + $0x38] sm:$0xff] %v2086
      %2103 = vst [vmem:[%s248 + $0x40] sm:$0xff] %v2087
      %2104 = vst [vmem:[%s248 + $0x48] sm:$0xff] %v2088
      %2105 = vst [vmem:[%s248 + $0x50] sm:$0xff] %v2089
      %2106 = vst [vmem:[%s248 + $0x58] sm:$0xff] %v2090
      %2107 = vst [vmem:[%s248 + $0x60] sm:$0xff] %v2091
      %2108 = vst [vmem:[%s248 + $0x68] sm:$0xff] %v2092
      %2109 = vst [vmem:[%s248 + $0x70] sm:$0xff] %v2093
      %2110 = vst [vmem:[%s248 + $0x78] sm:$0xff] %v2094
      %v2111 = vadd.f32 %v2079, %v2080
      %v2112 = vadd.f32 %v2111, %v2081
      %v2113 = vadd.f32 %v2112, %v2082
      %v2114 = vadd.f32 %v2113, %v2083
      %v2115 = vadd.f32 %v2114, %v2084
      %v2116 = vadd.f32 %v2115, %v2085
      %v2117 = vadd.f32 %v2116, %v2086
      %v2118 = vadd.f32 %v2117, %v2087
      %v2119 = vadd.f32 %v2118, %v2088
      %v2120 = vadd.f32 %v2119, %v2089
      %v2121 = vadd.f32 %v2120, %v2090
      %v2122 = vadd.f32 %v2121, %v2091
      %v2123 = vadd.f32 %v2122, %v2092
      %v2124 = vadd.f32 %v2123, %v2093
      %v2125 = vadd.f32 %v2124, %v2094
      %v2126 = vrot.slane %v2125, 4
      %v2127 = vadd.f32 %v2125, %v2126
      %v2128 = vrot.slane %v2127, 2
      %v2129 = vadd.f32 %v2127, %v2128
      %v2130 = vrot.slane %v2129, 1
      %v2131 = vadd.f32 %v2129, %v2130
      %2132 = vst [vmem:[%s255] sm:$0x1] %v2131
      %v2133 = vmul.f32 %v2079, %v2079
      %v2134 = vmul.f32 %v2080, %v2080
      %v2135 = vmul.f32 %v2081, %v2081
      %v2136 = vmul.f32 %v2082, %v2082
      %v2137 = vmul.f32 %v2083, %v2083
      %v2138 = vmul.f32 %v2084, %v2084
      %v2139 = vmul.f32 %v2085, %v2085
      %v2140 = vmul.f32 %v2086, %v2086
      %v2141 = vmul.f32 %v2087, %v2087
      %v2142 = vmul.f32 %v2088, %v2088
      %v2143 = vmul.f32 %v2089, %v2089
      %v2144 = vmul.f32 %v2090, %v2090
      %v2145 = vmul.f32 %v2091, %v2091
      %v2146 = vmul.f32 %v2092, %v2092
      %v2147 = vmul.f32 %v2093, %v2093
      %v2148 = vmul.f32 %v2094, %v2094
      %v2149 = vadd.f32 %v2133, %v2134
      %v2150 = vadd.f32 %v2149, %v2135
      %v2151 = vadd.f32 %v2150, %v2136
      %v2152 = vadd.f32 %v2151, %v2137
      %v2153 = vadd.f32 %v2152, %v2138
      %v2154 = vadd.f32 %v2153, %v2139
      %v2155 = vadd.f32 %v2154, %v2140
      %v2156 = vadd.f32 %v2155, %v2141
      %v2157 = vadd.f32 %v2156, %v2142
      %v2158 = vadd.f32 %v2157, %v2143
      %v2159 = vadd.f32 %v2158, %v2144
      %v2160 = vadd.f32 %v2159, %v2145
      %v2161 = vadd.f32 %v2160, %v2146
      %v2162 = vadd.f32 %v2161, %v2147
      %v2163 = vadd.f32 %v2162, %v2148
      %v2164 = vrot.slane %v2163, 4
      %v2165 = vadd.f32 %v2163, %v2164
      %v2166 = vrot.slane %v2165, 2
      %v2167 = vadd.f32 %v2165, %v2166
      %v2168 = vrot.slane %v2167, 1
      %v2169 = vadd.f32 %v2167, %v2168
      %2170 = vst [vmem:[%s255 + $0x1] sm:$0x1] %v2169
      %s2171 = smul.u32 8, %s21
      %p2172 = scmp.lt.s32.totalorder %s20, 1
      %s2173 = scalar_select %p2172, %s20, 1
      %p2174 = scmp.lt.s32.totalorder %s2171, 15
      %s2175 = scalar_select %p2174, %s2171, 15
      %s2176 = smul.addr %s2175, 2
      %s2177 = smul.addr %s2173, 32
      %s2178 = sadd.s32 %s2176, %s2177
      %s2179 = smul.addr %s2178, 8
      %s2180 = scalar_lea.vmem %s3, %s2179
      %s2181 = smul.u32 %s20, 2
      %s2182 = sadd.s32 %s2181, %s21
      %p2183 = scmp.lt.s32.totalorder %s2182, 3
      %s2184 = scalar_select %p2183, %s2182, 3
      %s2185 = smul.addr %s2184, 2
      %s2186 = scalar_lea.vmem %s4, %s2185
      // Predicated region
      $region33: #{_spefe_compute.4} parent=31 // pred_check
        %p2187 = pneg %p120
      $region34: #{_spefe_compute.4} parent=31 // pred_check_branch
        %2189 = sbr.rel (%p2187) target = $region36
      $region35: #{_spefe_compute.4} parent=31 // pred_region
        %s2190 = smul.u32 8, %s21
      $region36: #{_spefe_compute.4} parent=31 // pred_fallthru
        _
      // Predicated region
      $region37: #{_spefe_compute.4} parent=31 // pred_check
        %p2191 = pneg %p150
      $region38: #{_spefe_compute.4} parent=31 // pred_check_branch
        %2193 = sbr.rel (%p2191) target = $region40
      $region39: #{_spefe_compute.4} parent=31 // pred_region
        %s2194 = smul.u32 %s20, 2
        %s2195 = sadd.s32 %s2194, %s21
      $region40: #{_spefe_compute.4} parent=31 // pred_fallthru
        _
    $region32: #{_spefe_compute.4} parent=5 // pred_fallthru
      _
    %p2196 = scmp.le.s32.totalorder 2, %s11
    // Predicated region
    $region41: #{_spefe_compute.4} parent=5 // pred_check
      %p2197 = pneg %p2196
    $region42: #{_spefe_compute.4} parent=5 // pred_check_branch
      %2199 = sbr.rel (%p2197) target = $region44
    $region43: #{_spefe_compute.4} parent=5 // pred_region
      %s2200 = ssub.s32 %s11, 2
      // Predicated region
      $region45: #{_spefe_compute.4} parent=43 // pred_check
        %p2201 = pneg %p126
      $region46: #{_spefe_compute.4} parent=43 // pred_check_branch
        %2203 = sbr.rel (%p2201) target = $region48
      $region47: #{_spefe_compute.4} parent=43 // pred_region
        %s2204 = smul.u32 8, %s23
        %p2205 = scmp.lt.s32.totalorder %s22, 1
        %s2206 = scalar_select %p2205, %s22, 1
        %p2207 = scmp.lt.s32.totalorder %s2204, 15
        %s2208 = scalar_select %p2207, %s2204, 15
        %s2209 = smul.addr %s2208, 2
        %s2210 = smul.addr %s2206, 32
        %s2211 = sadd.s32 %s2209, %s2210
        %s2212 = smul.addr %s2211, 8
        %s2213 = scalar_lea.vmem %s3, %s2212
      $region48: #{_spefe_compute.4} parent=43 // pred_fallthru
        _
      // Predicated region
      $region49: #{_spefe_compute.4} parent=43 // pred_check
        %p2214 = pneg %p156
      $region50: #{_spefe_compute.4} parent=43 // pred_check_branch
        %2216 = sbr.rel (%p2214) target = $region52
      $region51: #{_spefe_compute.4} parent=43 // pred_region
        %s2217 = smul.u32 %s22, 2
        %s2218 = sadd.s32 %s2217, %s23
        %p2219 = scmp.lt.s32.totalorder %s2218, 3
        %s2220 = scalar_select %p2219, %s2218, 3
        %s2221 = smul.addr %s2220, 2
        %s2222 = scalar_lea.vmem %s4, %s2221
      $region52: #{_spefe_compute.4} parent=43 // pred_fallthru
        _
    $region44: #{_spefe_compute.4} parent=5 // pred_fallthru
      _
  $region6: #{_spefe_compute.4} parent=0 // loop_footer
    %s15 = sadd.s32 1, %s11
  $region7: #{_spefe_compute.4} parent=0 // loop_footer_branch
    %10 = sbr.rel target = $region3
  $region8: #{_spefe_compute.4} parent=0 // loop_exit
    _

</llo_original>
